<compile_context>
chip_gen: v5e
topology: v5e:2x2
jax: 0.10.0
libtpu: 0.0.40
codegen_flags: <defaults>
</compile_context>

<pallas_src>
import jax
import jax.numpy as jnp
from jax import lax
from jax.experimental import pallas as pl
from jax.experimental.pallas import tpu as pltpu


def _round_up(x, m):
    return (x + m - 1) // m * m


def _round_down(x, m):
    return x // m * m


def _leaky_relu(x, slope=0.2):
    return jnp.where(x > 0, x, slope * x)


def _vmem_limit_bytes():
    # ~half of physical VMEM per generation (v5e/v6e: 128 MiB -> 64;
    # v7x: 64 MiB -> 32).  Conservative fallback if the query is unavailable.
    try:
        cap = int(pltpu.get_tpu_info().vmem_capacity_bytes)
        return int(min(max(cap // 2, 32 << 20), 96 << 20))
    except Exception:
        return 32 << 20


def discriminator_kernel(x_ref, lbl_ref,
                         w1x_ref, w1l_ref, b1_ref,
                         w2_ref, b2_ref,
                         w3_ref, b3_ref,
                         w4_ref, b4_ref,
                         o_ref):
    # ----- Layer 1: split contraction; x cast to bf16 in-kernel -------------
    x_bf = x_ref[...].astype(jnp.bfloat16)
    h = (jnp.dot(x_bf, w1x_ref[...], preferred_element_type=jnp.float32)
         + jnp.dot(lbl_ref[...], w1l_ref[...], preferred_element_type=jnp.float32)
         + b1_ref[...])
    h = _leaky_relu(h)                       # f32 activation
    # TODO(synk): nn.Dropout(0.3) is identity in eval mode; training-mode mask
    #             (pltpu.prng_random_bits) intentionally omitted.

    # ----- Layer 2 -----
    h = jnp.dot(h.astype(jnp.bfloat16), w2_ref[...],
                preferred_element_type=jnp.float32) + b2_ref[...]
    h = _leaky_relu(h)

    # ----- Layer 3 -----
    h = jnp.dot(h.astype(jnp.bfloat16), w3_ref[...],
                preferred_element_type=jnp.float32) + b3_ref[...]
    h = _leaky_relu(h)

    # ----- Layer 4 (256 -> 1): contract on the 256 axis of both operands so
    # the result is a lane-dense (1, TILE_M) row (unmasked stores, one DMA). --
    z = lax.dot_general(w4_ref[...], h,
                        dimension_numbers=(((1,), (1,)), ((), ())),
                        preferred_element_type=jnp.float32) + b4_ref[...]
    o_ref[...] = jax.nn.sigmoid(z)


def init_params(key, in_dim, num_classes):
    """Deterministic synthetic params (torch Linear default init).
    Torch stores weight as (out, in); we keep the transpose (in, out)."""
    dims = [in_dim + num_classes, 1024, 512, 256, 1]
    params = []
    for i in range(4):
        key, kw, kb = jax.random.split(key, 3)
        bound = 1.0 / (dims[i] ** 0.5)
        w = jax.random.uniform(kw, (dims[i], dims[i + 1]),
                               minval=-bound, maxval=bound, dtype=jnp.float32)
        b = jax.random.uniform(kb, (1, dims[i + 1]),
                               minval=-bound, maxval=bound, dtype=jnp.float32)
        params.append((w, b))
    return params


def discriminator_forward(x_nchw, labels, params, num_classes):
    B = x_nchw.shape[0]
    in_dim = x_nchw.shape[1] * x_nchw.shape[2] * x_nchw.shape[3]
    (w1, b1), (w2, b2), (w3, b3), (w4, b4) = params
    H1, H2, H3 = w1.shape[1], w2.shape[1], w3.shape[1]

    # ---- batch tiling -------------------------------------------------------
    if B < 128:
        # Single grid step; 16-row alignment matches bf16 sublane packing.
        TILE_M = _round_up(B, 16)
    else:
        b128 = _round_up(B, 128)
        # Big tiles amortize the ~0.35us per-grid-step overhead, but keep the
        # grid >= 2 steps so the "parallel" axis feeds both v7x TensorCores.
        TILE_M = min(512, max(128, _round_down(b128 // 2, 128)))
        # Keep the f32 x-tile (double-buffered) under ~12 MiB for large images.
        TILE_M = max(128, min(TILE_M,
                              _round_down((12 << 20) // (8 * in_dim), 128)))
    B_pad = _round_up(B, TILE_M)

    # Pad the label contraction to a multiple of 8 sublanes.
    LBL_K = _round_up(max(num_classes, 8), 8)

    # ---- glue (plain JAX): flatten like torch .view, one-hot, pad batch ----
    # x stays f32 here (flatten is layout-only); the bf16 cast happens inside
    # the kernel so activations are read from HBM once instead of via a
    # separate cast pass.
    x_flat = x_nchw.reshape(B, in_dim)
    lbl_oh = jax.nn.one_hot(labels.astype(jnp.int32), LBL_K, dtype=jnp.bfloat16)
    if B_pad != B:
        x_flat = jnp.pad(x_flat, ((0, B_pad - B), (0, 0)))
        lbl_oh = jnp.pad(lbl_oh, ((0, B_pad - B), (0, 0)))

    # ---- weights: bf16 for MXU / halved DMA; biases + final layer stay f32 --
    # TODO(synk): for image_size >= 64 on v7x, stream W1x over a K grid axis
    #             (or fp8-quantize) instead of keeping it fully VMEM-resident;
    #             int8 weights are a further option on v5e/v6e only.
    w1x = w1[:in_dim].astype(jnp.bfloat16)                        # (in_dim, H1)
    w1l = jnp.zeros((LBL_K, H1), jnp.float32).at[:num_classes].set(w1[in_dim:])
    w1l = w1l.astype(jnp.bfloat16)                                # (LBL_K, H1)
    w2b = w2.astype(jnp.bfloat16)
    w3b = w3.astype(jnp.bfloat16)
    w4r = w4.reshape(1, H3).astype(jnp.float32)                   # (1, H3) row

    grid = (B_pad // TILE_M,)

    def row_spec(feat):                       # streamed per grid step
        return pl.BlockSpec((TILE_M, feat), lambda i: (i, 0))

    def resident(shape):                      # fetched once, single-buffered
        return pl.BlockSpec(shape, lambda i: (0, 0),
                            pipeline_mode=pl.Buffered(1))

    flops = 2 * B_pad * (in_dim * H1 + LBL_K * H1 + H1 * H2 + H2 * H3 + H3)
    bytes_accessed = (
        x_flat.size * 4 + lbl_oh.size * 2                          # activations in
        + (w1x.size + w1l.size + w2b.size + w3b.size) * 2          # bf16 weights
        + (b1.size + b2.size + b3.size + w4r.size + b4.size) * 4   # f32 params
        + B_pad * 4)                                               # f32 output
    cost = pl.CostEstimate(flops=flops, transcendentals=B_pad,
                           bytes_accessed=bytes_accessed)

    out = pl.pallas_call(
        discriminator_kernel,
        out_shape=jax.ShapeDtypeStruct((1, B_pad), jnp.float32),
        grid=grid,
        in_specs=[
            row_spec(in_dim),              # x tile (f32, streamed)
            row_spec(LBL_K),               # one-hot tile (bf16, streamed)
            resident(w1x.shape), resident(w1l.shape), resident(b1.shape),
            resident(w2b.shape), resident(b2.shape),
            resident(w3b.shape), resident(b3.shape),
            resident(w4r.shape), resident(b4.shape),
        ],
        out_specs=pl.BlockSpec((1, TILE_M), lambda i: (0, i)),     # lane-dense
        compiler_params=pltpu.CompilerParams(
            dimension_semantics=("parallel",),     # shards across v7x's 2 TCs
            vmem_limit_bytes=_vmem_limit_bytes()),
        cost_estimate=cost,
    )(x_flat, lbl_oh, w1x, w1l, b1, w2b, b2, w3b, b3, w4r, b4)

    # torch: out.squeeze() -> (B,)
    return out[0, :B]


def _reference_forward(x_nchw, labels, params, num_classes):
    """Pure-JAX f32 reference of the torch module (eval mode)."""
    B = x_nchw.shape[0]
    x = x_nchw.reshape(B, -1).astype(jnp.float32)
    oh = jax.nn.one_hot(labels.astype(jnp.int32), num_classes, dtype=jnp.float32)
    h = jnp.concatenate([x, oh], axis=1)
    (w1, b1), (w2, b2), (w3, b3), (w4, b4) = params
    h = _leaky_relu(h @ w1 + b1)
    h = _leaky_relu(h @ w2 + b2)
    h = _leaky_relu(h @ w3 + b3)
    return jax.nn.sigmoid(h @ w4 + b4)[:, 0]


if __name__ == "__main__":
    # Small config consistent with the module: image_size=16, num_classes=2.
    image_size = 16
    num_classes = 2

    key = jax.random.PRNGKey(0)
    k_params, k_x, k_lbl = jax.random.split(key, 3)
    params = init_params(k_params, image_size * image_size * 3, num_classes)

    fwd = jax.jit(discriminator_forward, static_argnums=(3,))

    # --- small-batch path (single grid step, 16-row tile) -------------------
    batch = 2
    x = jax.random.normal(k_x, (batch, 3, image_size, image_size),
                          dtype=jnp.float32)
    labels = jax.random.randint(k_lbl, (batch,), 0, num_classes)
    out = jax.block_until_ready(fwd(x, labels, params, num_classes))
    assert out.shape == (batch,)
    assert bool(jnp.all((out >= 0.0) & (out <= 1.0)))
    ref = _reference_forward(x, labels, params, num_classes)
    assert bool(jnp.allclose(out, ref, atol=2e-2))

    # --- multi-step path (TILE_M=128, grid=3) to exercise the batch pipeline -
    batch2 = 384
    k_x2, k_l2 = jax.random.split(k_x)
    x2 = jax.random.normal(k_x2, (batch2, 3, image_size, image_size),
                           dtype=jnp.float32)
    labels2 = jax.random.randint(k_l2, (batch2,), 0, num_classes)
    out2 = jax.block_until_ready(fwd(x2, labels2, params, num_classes))
    assert out2.shape == (batch2,)
    ref2 = _reference_forward(x2, labels2, params, num_classes)
    assert bool(jnp.allclose(out2, ref2, atol=2e-2))

    print("KERNEL_OK")
</pallas_src>

<mosaic_0001>
module attributes {stable_mosaic.version = 11 : i64} {
  func.func @discriminator_kernel(%arg0: i32, %arg1: memref<16x768xf32, #tpu.memory_space<vmem>>, %arg2: memref<16x8xbf16, #tpu.memory_space<vmem>>, %arg3: memref<768x1024xbf16, #tpu.memory_space<vmem>>, %arg4: memref<8x1024xbf16, #tpu.memory_space<vmem>>, %arg5: memref<1x1024xf32, #tpu.memory_space<vmem>>, %arg6: memref<1024x512xbf16, #tpu.memory_space<vmem>>, %arg7: memref<1x512xf32, #tpu.memory_space<vmem>>, %arg8: memref<512x256xbf16, #tpu.memory_space<vmem>>, %arg9: memref<1x256xf32, #tpu.memory_space<vmem>>, %arg10: memref<1x256xf32, #tpu.memory_space<vmem>>, %arg11: memref<1x1xf32, #tpu.memory_space<vmem>>, %arg12: memref<1x16xf32, #tpu.memory_space<vmem>>) attributes {dimension_semantics = [#tpu.dimension_semantics<parallel>], iteration_bounds = array<i64: 1>, scalar_prefetch = 0 : i64, scratch_operands = 0 : i64, tpu.core_type = #tpu.core_type<tc>, window_params = [{transform_indices = @transform_0, window_bounds = array<i64: 16, 768>}, {transform_indices = @transform_1, window_bounds = array<i64: 16, 8>}, {pipeline_mode = #tpu.pipeline_mode<synchronous>, transform_indices = @transform_2, window_bounds = array<i64: 768, 1024>}, {pipeline_mode = #tpu.pipeline_mode<synchronous>, transform_indices = @transform_3, window_bounds = array<i64: 8, 1024>}, {pipeline_mode = #tpu.pipeline_mode<synchronous>, transform_indices = @transform_4, window_bounds = array<i64: 1, 1024>}, {pipeline_mode = #tpu.pipeline_mode<synchronous>, transform_indices = @transform_5, window_bounds = array<i64: 1024, 512>}, {pipeline_mode = #tpu.pipeline_mode<synchronous>, transform_indices = @transform_6, window_bounds = array<i64: 1, 512>}, {pipeline_mode = #tpu.pipeline_mode<synchronous>, transform_indices = @transform_7, window_bounds = array<i64: 512, 256>}, {pipeline_mode = #tpu.pipeline_mode<synchronous>, transform_indices = @transform_8, window_bounds = array<i64: 1, 256>}, {pipeline_mode = #tpu.pipeline_mode<synchronous>, transform_indices = @transform_9, window_bounds = array<i64: 1, 256>}, {pipeline_mode = #tpu.pipeline_mode<synchronous>, transform_indices = @transform_10, window_bounds = array<i64: 1, 1>}, {transform_indices = @transform_11, window_bounds = array<i64: 1, 16>}]} {
    %c0 = arith.constant 0 : index
    %c0_0 = arith.constant 0 : index
    %0 = vector.load %arg1[%c0, %c0_0] : memref<16x768xf32, #tpu.memory_space<vmem>>, vector<16x768xf32>
    %1 = arith.truncf %0 : vector<16x768xf32> to vector<16x768xbf16>
    %c0_1 = arith.constant 0 : index
    %c0_2 = arith.constant 0 : index
    %2 = vector.load %arg3[%c0_1, %c0_2] : memref<768x1024xbf16, #tpu.memory_space<vmem>>, vector<768x1024xbf16>
    %cst = arith.constant dense<0.000000e+00> : vector<16x1024xf32>
    %3 = tpu.matmul %1, %2, %cst {dimension_numbers = #tpu.dot_dimension_numbers<[1], [0], [0], [1], [0, 0, 1, 1], [], []>} : vector<16x768xbf16>, vector<768x1024xbf16>, vector<16x1024xf32> -> vector<16x1024xf32>
    %c0_3 = arith.constant 0 : index
    %c0_4 = arith.constant 0 : index
    %4 = vector.load %arg2[%c0_3, %c0_4] : memref<16x8xbf16, #tpu.memory_space<vmem>>, vector<16x8xbf16>
    %c0_5 = arith.constant 0 : index
    %c0_6 = arith.constant 0 : index
    %5 = vector.load %arg4[%c0_5, %c0_6] : memref<8x1024xbf16, #tpu.memory_space<vmem>>, vector<8x1024xbf16>
    %cst_7 = arith.constant dense<0.000000e+00> : vector<16x1024xf32>
    %6 = tpu.matmul %4, %5, %cst_7 {dimension_numbers = #tpu.dot_dimension_numbers<[1], [0], [0], [1], [0, 0, 1, 1], [], []>} : vector<16x8xbf16>, vector<8x1024xbf16>, vector<16x1024xf32> -> vector<16x1024xf32>
    %7 = arith.addf %3, %6 : vector<16x1024xf32>
    %c0_8 = arith.constant 0 : index
    %c0_9 = arith.constant 0 : index
    %8 = vector.load %arg5[%c0_8, %c0_9] : memref<1x1024xf32, #tpu.memory_space<vmem>>, vector<1x1024xf32>
    %9 = vector.broadcast %8 : vector<1x1024xf32> to vector<16x1024xf32>
    %10 = arith.addf %7, %9 : vector<16x1024xf32>
    %cst_10 = arith.constant 0.000000e+00 : f32
    %11 = vector.broadcast %cst_10 : f32 to vector<16x1024xf32>
    %12 = arith.cmpf ogt, %10, %11 : vector<16x1024xf32>
    %cst_11 = arith.constant 2.000000e-01 : f32
    %13 = vector.broadcast %cst_11 : f32 to vector<16x1024xf32>
    %14 = arith.mulf %13, %10 : vector<16x1024xf32>
    %15 = arith.select %12, %10, %14 : vector<16x1024xi1>, vector<16x1024xf32>
    %16 = arith.truncf %15 : vector<16x1024xf32> to vector<16x1024xbf16>
    %c0_12 = arith.constant 0 : index
    %c0_13 = arith.constant 0 : index
    %17 = vector.load %arg6[%c0_12, %c0_13] : memref<1024x512xbf16, #tpu.memory_space<vmem>>, vector<1024x512xbf16>
    %cst_14 = arith.constant dense<0.000000e+00> : vector<16x512xf32>
    %18 = tpu.matmul %16, %17, %cst_14 {dimension_numbers = #tpu.dot_dimension_numbers<[1], [0], [0], [1], [0, 0, 1, 1], [], []>} : vector<16x1024xbf16>, vector<1024x512xbf16>, vector<16x512xf32> -> vector<16x512xf32>
    %c0_15 = arith.constant 0 : index
    %c0_16 = arith.constant 0 : index
    %19 = vector.load %arg7[%c0_15, %c0_16] : memref<1x512xf32, #tpu.memory_space<vmem>>, vector<1x512xf32>
    %20 = vector.broadcast %19 : vector<1x512xf32> to vector<16x512xf32>
    %21 = arith.addf %18, %20 : vector<16x512xf32>
    %cst_17 = arith.constant 0.000000e+00 : f32
    %22 = vector.broadcast %cst_17 : f32 to vector<16x512xf32>
    %23 = arith.cmpf ogt, %21, %22 : vector<16x512xf32>
    %cst_18 = arith.constant 2.000000e-01 : f32
    %24 = vector.broadcast %cst_18 : f32 to vector<16x512xf32>
    %25 = arith.mulf %24, %21 : vector<16x512xf32>
    %26 = arith.select %23, %21, %25 : vector<16x512xi1>, vector<16x512xf32>
    %27 = arith.truncf %26 : vector<16x512xf32> to vector<16x512xbf16>
    %c0_19 = arith.constant 0 : index
    %c0_20 = arith.constant 0 : index
    %28 = vector.load %arg8[%c0_19, %c0_20] : memref<512x256xbf16, #tpu.memory_space<vmem>>, vector<512x256xbf16>
    %cst_21 = arith.constant dense<0.000000e+00> : vector<16x256xf32>
    %29 = tpu.matmul %27, %28, %cst_21 {dimension_numbers = #tpu.dot_dimension_numbers<[1], [0], [0], [1], [0, 0, 1, 1], [], []>} : vector<16x512xbf16>, vector<512x256xbf16>, vector<16x256xf32> -> vector<16x256xf32>
    %c0_22 = arith.constant 0 : index
    %c0_23 = arith.constant 0 : index
    %30 = vector.load %arg9[%c0_22, %c0_23] : memref<1x256xf32, #tpu.memory_space<vmem>>, vector<1x256xf32>
    %31 = vector.broadcast %30 : vector<1x256xf32> to vector<16x256xf32>
    %32 = arith.addf %29, %31 : vector<16x256xf32>
    %cst_24 = arith.constant 0.000000e+00 : f32
    %33 = vector.broadcast %cst_24 : f32 to vector<16x256xf32>
    %34 = arith.cmpf ogt, %32, %33 : vector<16x256xf32>
    %cst_25 = arith.constant 2.000000e-01 : f32
    %35 = vector.broadcast %cst_25 : f32 to vector<16x256xf32>
    %36 = arith.mulf %35, %32 : vector<16x256xf32>
    %37 = arith.select %34, %32, %36 : vector<16x256xi1>, vector<16x256xf32>
    %c0_26 = arith.constant 0 : index
    %c0_27 = arith.constant 0 : index
    %38 = vector.load %arg10[%c0_26, %c0_27] : memref<1x256xf32, #tpu.memory_space<vmem>>, vector<1x256xf32>
    %cst_28 = arith.constant dense<0.000000e+00> : vector<1x16xf32>
    %39 = tpu.matmul %38, %37, %cst_28 {dimension_numbers = #tpu.dot_dimension_numbers<[1], [1], [0], [0], [0, 0, 1, 0], [], []>} : vector<1x256xf32>, vector<16x256xf32>, vector<1x16xf32> -> vector<1x16xf32>
    %c0_29 = arith.constant 0 : index
    %c0_30 = arith.constant 0 : index
    %40 = vector.load %arg11[%c0_29, %c0_30] : memref<1x1xf32, #tpu.memory_space<vmem>>, vector<1x1xf32>
    %41 = vector.broadcast %40 : vector<1x1xf32> to vector<1x16xf32>
    %42 = arith.addf %39, %41 : vector<1x16xf32>
    %43 = arith.negf %42 : vector<1x16xf32>
    %44 = math.exp %43 : vector<1x16xf32>
    %cst_31 = arith.constant 1.000000e+00 : f32
    %45 = vector.broadcast %cst_31 : f32 to vector<1x16xf32>
    %46 = arith.addf %45, %44 : vector<1x16xf32>
    %47 = arith.divf %45, %46 : vector<1x16xf32>
    %c0_32 = arith.constant 0 : index
    %c0_33 = arith.constant 0 : index
    %48 = vector.load %arg12[%c0_32, %c0_33] : memref<1x16xf32, #tpu.memory_space<vmem>>, vector<1x16xf32>
    tpu.vector_store %arg12[%c0_32, %c0_33], %47 {strides = array<i32>} : memref<1x16xf32, #tpu.memory_space<vmem>>, vector<1x16xf32>,
    return
  }
  func.func @transform_0(%arg0: i32) -> (i32, i32) {
    %c0_i32 = arith.constant 0 : i32
    %c0_i32_0 = arith.constant 0 : i32
    return %arg0, %c0_i32 : i32, i32
  }
  func.func @transform_1(%arg0: i32) -> (i32, i32) {
    %c0_i32 = arith.constant 0 : i32
    %c0_i32_0 = arith.constant 0 : i32
    return %arg0, %c0_i32 : i32, i32
  }
  func.func @transform_2(%arg0: i32) -> (i32, i32) {
    %c0_i32 = arith.constant 0 : i32
    %c0_i32_0 = arith.constant 0 : i32
    %c0_i32_1 = arith.constant 0 : i32
    return %c0_i32, %c0_i32_0 : i32, i32
  }
  func.func @transform_3(%arg0: i32) -> (i32, i32) {
    %c0_i32 = arith.constant 0 : i32
    %c0_i32_0 = arith.constant 0 : i32
    %c0_i32_1 = arith.constant 0 : i32
    return %c0_i32, %c0_i32_0 : i32, i32
  }
  func.func @transform_4(%arg0: i32) -> (i32, i32) {
    %c0_i32 = arith.constant 0 : i32
    %c0_i32_0 = arith.constant 0 : i32
    %c0_i32_1 = arith.constant 0 : i32
    return %c0_i32, %c0_i32_0 : i32, i32
  }
  func.func @transform_5(%arg0: i32) -> (i32, i32) {
    %c0_i32 = arith.constant 0 : i32
    %c0_i32_0 = arith.constant 0 : i32
    %c0_i32_1 = arith.constant 0 : i32
    return %c0_i32, %c0_i32_0 : i32, i32
  }
  func.func @transform_6(%arg0: i32) -> (i32, i32) {
    %c0_i32 = arith.constant 0 : i32
    %c0_i32_0 = arith.constant 0 : i32
    %c0_i32_1 = arith.constant 0 : i32
    return %c0_i32, %c0_i32_0 : i32, i32
  }
  func.func @transform_7(%arg0: i32) -> (i32, i32) {
    %c0_i32 = arith.constant 0 : i32
    %c0_i32_0 = arith.constant 0 : i32
    %c0_i32_1 = arith.constant 0 : i32
    return %c0_i32, %c0_i32_0 : i32, i32
  }
  func.func @transform_8(%arg0: i32) -> (i32, i32) {
    %c0_i32 = arith.constant 0 : i32
    %c0_i32_0 = arith.constant 0 : i32
    %c0_i32_1 = arith.constant 0 : i32
    return %c0_i32, %c0_i32_0 : i32, i32
  }
  func.func @transform_9(%arg0: i32) -> (i32, i32) {
    %c0_i32 = arith.constant 0 : i32
    %c0_i32_0 = arith.constant 0 : i32
    %c0_i32_1 = arith.constant 0 : i32
    return %c0_i32, %c0_i32_0 : i32, i32
  }
  func.func @transform_10(%arg0: i32) -> (i32, i32) {
    %c0_i32 = arith.constant 0 : i32
    %c0_i32_0 = arith.constant 0 : i32
    %c0_i32_1 = arith.constant 0 : i32
    return %c0_i32, %c0_i32_0 : i32, i32
  }
  func.func @transform_11(%arg0: i32) -> (i32, i32) {
    %c0_i32 = arith.constant 0 : i32
    %c0_i32_0 = arith.constant 0 : i32
    return %c0_i32, %arg0 : i32, i32
  }
}

</mosaic_0001>

<llo_original>
// kernel: discriminator_forward.1
$region0: #{discriminator_forward.1}
  #allocation0 [shape = 'u32[]', space=smem, size = 0x4, offset = 0x4, fixed_abs, tag = 'smem constant byte address 0x4 - core index']
  #allocation1 [shape = 'u32[72,128]{1,0:T(1,128)}', space=vmem, size = 0x9000, scoped, tag = 'internal scratch']
  #allocation2 [shape = 'f32[1,1]{1,0:T(1,128)S(1)}', space=vmem, size = 0x200, scoped, tag = 'scoped memory for discriminator_forward.1']
  %s0 = inlined_call_operand.vmem [shape: f32[16,768], index: 0, kind: input, shape index: {}]
  %s1 = inlined_call_operand.vmem [shape: bf16[16,8], index: 1, kind: input, shape index: {}]
  %s2 = inlined_call_operand.vmem [shape: bf16[768,1024], index: 2, kind: input, shape index: {}]
  %s3 = inlined_call_operand.vmem [shape: bf16[8,1024], index: 3, kind: input, shape index: {}]
  %s4 = inlined_call_operand.vmem [shape: f32[1,1024], index: 4, kind: input, shape index: {}]
  %s5 = inlined_call_operand.vmem [shape: bf16[1024,512], index: 5, kind: input, shape index: {}]
  %s6 = inlined_call_operand.vmem [shape: f32[1,512], index: 6, kind: input, shape index: {}]
  %s7 = inlined_call_operand.vmem [shape: bf16[512,256], index: 7, kind: input, shape index: {}]
  %s8 = inlined_call_operand.vmem [shape: f32[1,256], index: 8, kind: input, shape index: {}]
  %s9 = inlined_call_operand.vmem [shape: f32[1,256], index: 9, kind: input, shape index: {}]
  %s10 = inlined_call_operand.<no memory space> [shape: f32[1,1], index: 10, kind: input, shape index: {}]
  %s11 = inlined_call_operand.vmem [shape: f32[1,16], index: 11, kind: output, shape index: {}]
  %s12 = sld [smem:[#allocation0]]
  $region54: #{discriminator_forward.1} parent=0
    _
  %s14 = ssub.s32 1, %s12
  %s15 = scalar_select 0, %s14, %s12
  %v16 = vstv %s10
  %17 = vst [vmem:[#allocation2] sm:$0x1] %v16
  // Predicated region
  $region2: #{discriminator_forward.1} parent=0 // pred_check
    _
  $region3: #{discriminator_forward.1} parent=0 // pred_check_branch
    %19 = sbr.rel (0) target = $region5
  $region4: #{discriminator_forward.1} parent=0 // pred_region
    _
  $region5: #{discriminator_forward.1} parent=0 // pred_fallthru
    _
  // Predicated region
  $region6: #{discriminator_forward.1} parent=0 // pred_check
    _
  $region7: #{discriminator_forward.1} parent=0 // pred_check_branch
    %21 = sbr.rel (0) target = $region9
  $region8: #{discriminator_forward.1} parent=0 // pred_region
    _
  $region9: #{discriminator_forward.1} parent=0 // pred_fallthru
    _
  // Predicated region
  $region10: #{discriminator_forward.1} parent=0 // pred_check
    _
  $region11: #{discriminator_forward.1} parent=0 // pred_check_branch
    %23 = sbr.rel (0) target = $region13
  $region12: #{discriminator_forward.1} parent=0 // pred_region
    _
  $region13: #{discriminator_forward.1} parent=0 // pred_fallthru
    _
  // Predicated region
  $region14: #{discriminator_forward.1} parent=0 // pred_check
    _
  $region15: #{discriminator_forward.1} parent=0 // pred_check_branch
    %25 = sbr.rel (0) target = $region17
  $region16: #{discriminator_forward.1} parent=0 // pred_region
    _
  $region17: #{discriminator_forward.1} parent=0 // pred_fallthru
    _
  // Predicated region
  $region18: #{discriminator_forward.1} parent=0 // pred_check
    _
  $region19: #{discriminator_forward.1} parent=0 // pred_check_branch
    %27 = sbr.rel (0) target = $region21
  $region20: #{discriminator_forward.1} parent=0 // pred_region
    _
  $region21: #{discriminator_forward.1} parent=0 // pred_fallthru
    _
  // Predicated region
  $region22: #{discriminator_forward.1} parent=0 // pred_check
    _
  $region23: #{discriminator_forward.1} parent=0 // pred_check_branch
    %29 = sbr.rel (0) target = $region25
  $region24: #{discriminator_forward.1} parent=0 // pred_region
    _
  $region25: #{discriminator_forward.1} parent=0 // pred_fallthru
    _
  // Predicated region
  $region26: #{discriminator_forward.1} parent=0 // pred_check
    _
  $region27: #{discriminator_forward.1} parent=0 // pred_check_branch
    %31 = sbr.rel (0) target = $region29
  $region28: #{discriminator_forward.1} parent=0 // pred_region
    _
  $region29: #{discriminator_forward.1} parent=0 // pred_fallthru
    _
  // Predicated region
  $region30: #{discriminator_forward.1} parent=0 // pred_check
    _
  $region31: #{discriminator_forward.1} parent=0 // pred_check_branch
    %33 = sbr.rel (0) target = $region33
  $region32: #{discriminator_forward.1} parent=0 // pred_region
    _
  $region33: #{discriminator_forward.1} parent=0 // pred_fallthru
    _
  // Predicated region
  $region34: #{discriminator_forward.1} parent=0 // pred_check
    _
  $region35: #{discriminator_forward.1} parent=0 // pred_check_branch
    %35 = sbr.rel (0) target = $region37
  $region36: #{discriminator_forward.1} parent=0 // pred_region
    _
  $region37: #{discriminator_forward.1} parent=0 // pred_fallthru
    _
  // Predicated region
  $region38: #{discriminator_forward.1} parent=0 // pred_check
    _
  $region39: #{discriminator_forward.1} parent=0 // pred_check_branch
    %37 = sbr.rel (0) target = $region41
  $region40: #{discriminator_forward.1} parent=0 // pred_region
    _
  $region41: #{discriminator_forward.1} parent=0 // pred_fallthru
    _
  // Predicated region
  $region42: #{discriminator_forward.1} parent=0 // pred_check
    _
  $region43: #{discriminator_forward.1} parent=0 // pred_check_branch
    %39 = sbr.rel (0) target = $region45
  $region44: #{discriminator_forward.1} parent=0 // pred_region
    _
  $region45: #{discriminator_forward.1} parent=0 // pred_fallthru
    _
  %v41 = vld [vmem:[%s0] sm:$0xff]
  %v42 = vld [vmem:[%s0 + $0x8] sm:$0xff]
  %v43 = vld [vmem:[%s0 + $0x10] sm:$0xff]
  %v44 = vld [vmem:[%s0 + $0x18] sm:$0xff]
  %v45 = vld [vmem:[%s0 + $0x20] sm:$0xff]
  %v46 = vld [vmem:[%s0 + $0x28] sm:$0xff]
  %v47 = vld [vmem:[%s0 + $0x30] sm:$0xff]
  %v48 = vld [vmem:[%s0 + $0x38] sm:$0xff]
  %v49 = vld [vmem:[%s0 + $0x40] sm:$0xff]
  %v50 = vld [vmem:[%s0 + $0x48] sm:$0xff]
  %v51 = vld [vmem:[%s0 + $0x50] sm:$0xff]
  %v52 = vld [vmem:[%s0 + $0x58] sm:$0xff]
  %v53 = vpack.c.bf16 %v47, %v41
  %v54 = vpack.c.bf16 %v48, %v42
  %v55 = vpack.c.bf16 %v49, %v43
  %v56 = vpack.c.bf16 %v50, %v44
  %v57 = vpack.c.bf16 %v51, %v45
  %v58 = vpack.c.bf16 %v52, %v46
  %v59 = vld [vmem:[%s2] sm:$0xff]
  %v60 = vld [vmem:[%s2 + $0x8] sm:$0xff]
  %v61 = vld [vmem:[%s2 + $0x10] sm:$0xff]
  %v62 = vld [vmem:[%s2 + $0x18] sm:$0xff]
  %v63 = vld [vmem:[%s2 + $0x20] sm:$0xff]
  %v64 = vld [vmem:[%s2 + $0x28] sm:$0xff]
  %v65 = vld [vmem:[%s2 + $0x30] sm:$0xff]
  %v66 = vld [vmem:[%s2 + $0x38] sm:$0xff]
  %v67 = vld [vmem:[%s2 + $0x40] sm:$0xff]
  %v68 = vld [vmem:[%s2 + $0x48] sm:$0xff]
  %v69 = vld [vmem:[%s2 + $0x50] sm:$0xff]
  %v70 = vld [vmem:[%s2 + $0x58] sm:$0xff]
  %v71 = vld [vmem:[%s2 + $0x60] sm:$0xff]
  %v72 = vld [vmem:[%s2 + $0x68] sm:$0xff]
  %v73 = vld [vmem:[%s2 + $0x70] sm:$0xff]
  %v74 = vld [vmem:[%s2 + $0x78] sm:$0xff]
  %v75 = vld [vmem:[%s2 + $0x80] sm:$0xff]
  %v76 = vld [vmem:[%s2 + $0x88] sm:$0xff]
  %v77 = vld [vmem:[%s2 + $0x90] sm:$0xff]
  %v78 = vld [vmem:[%s2 + $0x98] sm:$0xff]
  %v79 = vld [vmem:[%s2 + $0xa0] sm:$0xff]
  %v80 = vld [vmem:[%s2 + $0xa8] sm:$0xff]
  %v81 = vld [vmem:[%s2 + $0xb0] sm:$0xff]
  %v82 = vld [vmem:[%s2 + $0xb8] sm:$0xff]
  %v83 = vld [vmem:[%s2 + $0xc0] sm:$0xff]
  %v84 = vld [vmem:[%s2 + $0xc8] sm:$0xff]
  %v85 = vld [vmem:[%s2 + $0xd0] sm:$0xff]
  %v86 = vld [vmem:[%s2 + $0xd8] sm:$0xff]
  %v87 = vld [vmem:[%s2 + $0xe0] sm:$0xff]
  %v88 = vld [vmem:[%s2 + $0xe8] sm:$0xff]
  %v89 = vld [vmem:[%s2 + $0xf0] sm:$0xff]
  %v90 = vld [vmem:[%s2 + $0xf8] sm:$0xff]
  %v91 = vld [vmem:[%s2 + $0x100] sm:$0xff]
  %v92 = vld [vmem:[%s2 + $0x108] sm:$0xff]
  %v93 = vld [vmem:[%s2 + $0x110] sm:$0xff]
  %v94 = vld [vmem:[%s2 + $0x118] sm:$0xff]
  %v95 = vld [vmem:[%s2 + $0x120] sm:$0xff]
  %v96 = vld [vmem:[%s2 + $0x128] sm:$0xff]
  %v97 = vld [vmem:[%s2 + $0x130] sm:$0xff]
  %v98 = vld [vmem:[%s2 + $0x138] sm:$0xff]
  %v99 = vld [vmem:[%s2 + $0x140] sm:$0xff]
  %v100 = vld [vmem:[%s2 + $0x148] sm:$0xff]
  %v101 = vld [vmem:[%s2 + $0x150] sm:$0xff]
  %v102 = vld [vmem:[%s2 + $0x158] sm:$0xff]
  %v103 = vld [vmem:[%s2 + $0x160] sm:$0xff]
  %v104 = vld [vmem:[%s2 + $0x168] sm:$0xff]
  %v105 = vld [vmem:[%s2 + $0x170] sm:$0xff]
  %v106 = vld [vmem:[%s2 + $0x178] sm:$0xff]
  %v107 = vld [vmem:[%s2 + $0x180] sm:$0xff]
  %v108 = vld [vmem:[%s2 + $0x188] sm:$0xff]
  %v109 = vld [vmem:[%s2 + $0x190] sm:$0xff]
  %v110 = vld [vmem:[%s2 + $0x198] sm:$0xff]
  %v111 = vld [vmem:[%s2 + $0x1a0] sm:$0xff]
  %v112 = vld [vmem:[%s2 + $0x1a8] sm:$0xff]
  %v113 = vld [vmem:[%s2 + $0x1b0] sm:$0xff]
  %v114 = vld [vmem:[%s2 + $0x1b8] sm:$0xff]
  %v115 = vld [vmem:[%s2 + $0x1c0] sm:$0xff]
  %v116 = vld [vmem:[%s2 + $0x1c8] sm:$0xff]
  %v117 = vld [vmem:[%s2 + $0x1d0] sm:$0xff]
  %v118 = vld [vmem:[%s2 + $0x1d8] sm:$0xff]
  %v119 = vld [vmem:[%s2 + $0x1e0] sm:$0xff]
  %v120 = vld [vmem:[%s2 + $0x1e8] sm:$0xff]
  %v121 = vld [vmem:[%s2 + $0x1f0] sm:$0xff]
  %v122 = vld [vmem:[%s2 + $0x1f8] sm:$0xff]
  %v123 = vld [vmem:[%s2 + $0x200] sm:$0xff]
  %v124 = vld [vmem:[%s2 + $0x208] sm:$0xff]
  %v125 = vld [vmem:[%s2 + $0x210] sm:$0xff]
  %v126 = vld [vmem:[%s2 + $0x218] sm:$0xff]
  %v127 = vld [vmem:[%s2 + $0x220] sm:$0xff]
  %v128 = vld [vmem:[%s2 + $0x228] sm:$0xff]
  %v129 = vld [vmem:[%s2 + $0x230] sm:$0xff]
  %v130 = vld [vmem:[%s2 + $0x238] sm:$0xff]
  %v131 = vld [vmem:[%s2 + $0x240] sm:$0xff]
  %v132 = vld [vmem:[%s2 + $0x248] sm:$0xff]
  %v133 = vld [vmem:[%s2 + $0x250] sm:$0xff]
  %v134 = vld [vmem:[%s2 + $0x258] sm:$0xff]
  %v135 = vld [vmem:[%s2 + $0x260] sm:$0xff]
  %v136 = vld [vmem:[%s2 + $0x268] sm:$0xff]
  %v137 = vld [vmem:[%s2 + $0x270] sm:$0xff]
  %v138 = vld [vmem:[%s2 + $0x278] sm:$0xff]
  %v139 = vld [vmem:[%s2 + $0x280] sm:$0xff]
  %v140 = vld [vmem:[%s2 + $0x288] sm:$0xff]
  %v141 = vld [vmem:[%s2 + $0x290] sm:$0xff]
  %v142 = vld [vmem:[%s2 + $0x298] sm:$0xff]
  %v143 = vld [vmem:[%s2 + $0x2a0] sm:$0xff]
  %v144 = vld [vmem:[%s2 + $0x2a8] sm:$0xff]
  %v145 = vld [vmem:[%s2 + $0x2b0] sm:$0xff]
  %v146 = vld [vmem:[%s2 + $0x2b8] sm:$0xff]
  %v147 = vld [vmem:[%s2 + $0x2c0] sm:$0xff]
  %v148 = vld [vmem:[%s2 + $0x2c8] sm:$0xff]
  %v149 = vld [vmem:[%s2 + $0x2d0] sm:$0xff]
  %v150 = vld [vmem:[%s2 + $0x2d8] sm:$0xff]
  %v151 = vld [vmem:[%s2 + $0x2e0] sm:$0xff]
  %v152 = vld [vmem:[%s2 + $0x2e8] sm:$0xff]
  %v153 = vld [vmem:[%s2 + $0x2f0] sm:$0xff]
  %v154 = vld [vmem:[%s2 + $0x2f8] sm:$0xff]
  %v155 = vld [vmem:[%s2 + $0x300] sm:$0xff]
  %v156 = vld [vmem:[%s2 + $0x308] sm:$0xff]
  %v157 = vld [vmem:[%s2 + $0x310] sm:$0xff]
  %v158 = vld [vmem:[%s2 + $0x318] sm:$0xff]
  %v159 = vld [vmem:[%s2 + $0x320] sm:$0xff]
  %v160 = vld [vmem:[%s2 + $0x328] sm:$0xff]
  %v161 = vld [vmem:[%s2 + $0x330] sm:$0xff]
  %v162 = vld [vmem:[%s2 + $0x338] sm:$0xff]
  %v163 = vld [vmem:[%s2 + $0x340] sm:$0xff]
  %v164 = vld [vmem:[%s2 + $0x348] sm:$0xff]
  %v165 = vld [vmem:[%s2 + $0x350] sm:$0xff]
  %v166 = vld [vmem:[%s2 + $0x358] sm:$0xff]
  %v167 = vld [vmem:[%s2 + $0x360] sm:$0xff]
  %v168 = vld [vmem:[%s2 + $0x368] sm:$0xff]
  %v169 = vld [vmem:[%s2 + $0x370] sm:$0xff]
  %v170 = vld [vmem:[%s2 + $0x378] sm:$0xff]
  %v171 = vld [vmem:[%s2 + $0x380] sm:$0xff]
  %v172 = vld [vmem:[%s2 + $0x388] sm:$0xff]
  %v173 = vld [vmem:[%s2 + $0x390] sm:$0xff]
  %v174 = vld [vmem:[%s2 + $0x398] sm:$0xff]
  %v175 = vld [vmem:[%s2 + $0x3a0] sm:$0xff]
  %v176 = vld [vmem:[%s2 + $0x3a8] sm:$0xff]
  %v177 = vld [vmem:[%s2 + $0x3b0] sm:$0xff]
  %v178 = vld [vmem:[%s2 + $0x3b8] sm:$0xff]
  %v179 = vld [vmem:[%s2 + $0x3c0] sm:$0xff]
  %v180 = vld [vmem:[%s2 + $0x3c8] sm:$0xff]
  %v181 = vld [vmem:[%s2 + $0x3d0] sm:$0xff]
  %v182 = vld [vmem:[%s2 + $0x3d8] sm:$0xff]
  %v183 = vld [vmem:[%s2 + $0x3e0] sm:$0xff]
  %v184 = vld [vmem:[%s2 + $0x3e8] sm:$0xff]
  %v185 = vld [vmem:[%s2 + $0x3f0] sm:$0xff]
  %v186 = vld [vmem:[%s2 + $0x3f8] sm:$0xff]
  %v187 = vld [vmem:[%s2 + $0x400] sm:$0xff]
  %v188 = vld [vmem:[%s2 + $0x408] sm:$0xff]
  %v189 = vld [vmem:[%s2 + $0x410] sm:$0xff]
  %v190 = vld [vmem:[%s2 + $0x418] sm:$0xff]
  %v191 = vld [vmem:[%s2 + $0x420] sm:$0xff]
  %v192 = vld [vmem:[%s2 + $0x428] sm:$0xff]
  %v193 = vld [vmem:[%s2 + $0x430] sm:$0xff]
  %v194 = vld [vmem:[%s2 + $0x438] sm:$0xff]
  %v195 = vld [vmem:[%s2 + $0x440] sm:$0xff]
  %v196 = vld [vmem:[%s2 + $0x448] sm:$0xff]
  %v197 = vld [vmem:[%s2 + $0x450] sm:$0xff]
  %v198 = vld [vmem:[%s2 + $0x458] sm:$0xff]
  %v199 = vld [vmem:[%s2 + $0x460] sm:$0xff]
  %v200 = vld [vmem:[%s2 + $0x468] sm:$0xff]
  %v201 = vld [vmem:[%s2 + $0x470] sm:$0xff]
  %v202 = vld [vmem:[%s2 + $0x478] sm:$0xff]
  %v203 = vld [vmem:[%s2 + $0x480] sm:$0xff]
  %v204 = vld [vmem:[%s2 + $0x488] sm:$0xff]
  %v205 = vld [vmem:[%s2 + $0x490] sm:$0xff]
  %v206 = vld [vmem:[%s2 + $0x498] sm:$0xff]
  %v207 = vld [vmem:[%s2 + $0x4a0] sm:$0xff]
  %v208 = vld [vmem:[%s2 + $0x4a8] sm:$0xff]
  %v209 = vld [vmem:[%s2 + $0x4b0] sm:$0xff]
  %v210 = vld [vmem:[%s2 + $0x4b8] sm:$0xff]
  %v211 = vld [vmem:[%s2 + $0x4c0] sm:$0xff]
  %v212 = vld [vmem:[%s2 + $0x4c8] sm:$0xff]
  %v213 = vld [vmem:[%s2 + $0x4d0] sm:$0xff]
  %v214 = vld [vmem:[%s2 + $0x4d8] sm:$0xff]
  %v215 = vld [vmem:[%s2 + $0x4e0] sm:$0xff]
  %v216 = vld [vmem:[%s2 + $0x4e8] sm:$0xff]
  %v217 = vld [vmem:[%s2 + $0x4f0] sm:$0xff]
  %v218 = vld [vmem:[%s2 + $0x4f8] sm:$0xff]
  %v219 = vld [vmem:[%s2 + $0x500] sm:$0xff]
  %v220 = vld [vmem:[%s2 + $0x508] sm:$0xff]
  %v221 = vld [vmem:[%s2 + $0x510] sm:$0xff]
  %v222 = vld [vmem:[%s2 + $0x518] sm:$0xff]
  %v223 = vld [vmem:[%s2 + $0x520] sm:$0xff]
  %v224 = vld [vmem:[%s2 + $0x528] sm:$0xff]
  %v225 = vld [vmem:[%s2 + $0x530] sm:$0xff]
  %v226 = vld [vmem:[%s2 + $0x538] sm:$0xff]
  %v227 = vld [vmem:[%s2 + $0x540] sm:$0xff]
  %v228 = vld [vmem:[%s2 + $0x548] sm:$0xff]
  %v229 = vld [vmem:[%s2 + $0x550] sm:$0xff]
  %v230 = vld [vmem:[%s2 + $0x558] sm:$0xff]
  %v231 = vld [vmem:[%s2 + $0x560] sm:$0xff]
  %v232 = vld [vmem:[%s2 + $0x568] sm:$0xff]
  %v233 = vld [vmem:[%s2 + $0x570] sm:$0xff]
  %v234 = vld [vmem:[%s2 + $0x578] sm:$0xff]
  %v235 = vld [vmem:[%s2 + $0x580] sm:$0xff]
  %v236 = vld [vmem:[%s2 + $0x588] sm:$0xff]
  %v237 = vld [vmem:[%s2 + $0x590] sm:$0xff]
  %v238 = vld [vmem:[%s2 + $0x598] sm:$0xff]
  %v239 = vld [vmem:[%s2 + $0x5a0] sm:$0xff]
  %v240 = vld [vmem:[%s2 + $0x5a8] sm:$0xff]
  %v241 = vld [vmem:[%s2 + $0x5b0] sm:$0xff]
  %v242 = vld [vmem:[%s2 + $0x5b8] sm:$0xff]
  %v243 = vld [vmem:[%s2 + $0x5c0] sm:$0xff]
  %v244 = vld [vmem:[%s2 + $0x5c8] sm:$0xff]
  %v245 = vld [vmem:[%s2 + $0x5d0] sm:$0xff]
  %v246 = vld [vmem:[%s2 + $0x5d8] sm:$0xff]
  %v247 = vld [vmem:[%s2 + $0x5e0] sm:$0xff]
  %v248 = vld [vmem:[%s2 + $0x5e8] sm:$0xff]
  %v249 = vld [vmem:[%s2 + $0x5f0] sm:$0xff]
  %v250 = vld [vmem:[%s2 + $0x5f8] sm:$0xff]
  %v251 = vld [vmem:[%s2 + $0x600] sm:$0xff]
  %v252 = vld [vmem:[%s2 + $0x608] sm:$0xff]
  %v253 = vld [vmem:[%s2 + $0x610] sm:$0xff]
  %v254 = vld [vmem:[%s2 + $0x618] sm:$0xff]
  %v255 = vld [vmem:[%s2 + $0x620] sm:$0xff]
  %v256 = vld [vmem:[%s2 + $0x628] sm:$0xff]
  %v257 = vld [vmem:[%s2 + $0x630] sm:$0xff]
  %v258 = vld [vmem:[%s2 + $0x638] sm:$0xff]
  %v259 = vld [vmem:[%s2 + $0x640] sm:$0xff]
  %v260 = vld [vmem:[%s2 + $0x648] sm:$0xff]
  %v261 = vld [vmem:[%s2 + $0x650] sm:$0xff]
  %v262 = vld [vmem:[%s2 + $0x658] sm:$0xff]
  %v263 = vld [vmem:[%s2 + $0x660] sm:$0xff]
  %v264 = vld [vmem:[%s2 + $0x668] sm:$0xff]
  %v265 = vld [vmem:[%s2 + $0x670] sm:$0xff]
  %v266 = vld [vmem:[%s2 + $0x678] sm:$0xff]
  %v267 = vld [vmem:[%s2 + $0x680] sm:$0xff]
  %v268 = vld [vmem:[%s2 + $0x688] sm:$0xff]
  %v269 = vld [vmem:[%s2 + $0x690] sm:$0xff]
  %v270 = vld [vmem:[%s2 + $0x698] sm:$0xff]
  %v271 = vld [vmem:[%s2 + $0x6a0] sm:$0xff]
  %v272 = vld [vmem:[%s2 + $0x6a8] sm:$0xff]
  %v273 = vld [vmem:[%s2 + $0x6b0] sm:$0xff]
  %v274 = vld [vmem:[%s2 + $0x6b8] sm:$0xff]
  %v275 = vld [vmem:[%s2 + $0x6c0] sm:$0xff]
  %v276 = vld [vmem:[%s2 + $0x6c8] sm:$0xff]
  %v277 = vld [vmem:[%s2 + $0x6d0] sm:$0xff]
  %v278 = vld [vmem:[%s2 + $0x6d8] sm:$0xff]
  %v279 = vld [vmem:[%s2 + $0x6e0] sm:$0xff]
  %v280 = vld [vmem:[%s2 + $0x6e8] sm:$0xff]
  %v281 = vld [vmem:[%s2 + $0x6f0] sm:$0xff]
  %v282 = vld [vmem:[%s2 + $0x6f8] sm:$0xff]
  %v283 = vld [vmem:[%s2 + $0x700] sm:$0xff]
  %v284 = vld [vmem:[%s2 + $0x708] sm:$0xff]
  %v285 = vld [vmem:[%s2 + $0x710] sm:$0xff]
  %v286 = vld [vmem:[%s2 + $0x718] sm:$0xff]
  %v287 = vld [vmem:[%s2 + $0x720] sm:$0xff]
  %v288 = vld [vmem:[%s2 + $0x728] sm:$0xff]
  %v289 = vld [vmem:[%s2 + $0x730] sm:$0xff]
  %v290 = vld [vmem:[%s2 + $0x738] sm:$0xff]
  %v291 = vld [vmem:[%s2 + $0x740] sm:$0xff]
  %v292 = vld [vmem:[%s2 + $0x748] sm:$0xff]
  %v293 = vld [vmem:[%s2 + $0x750] sm:$0xff]
  %v294 = vld [vmem:[%s2 + $0x758] sm:$0xff]
  %v295 = vld [vmem:[%s2 + $0x760] sm:$0xff]
  %v296 = vld [vmem:[%s2 + $0x768] sm:$0xff]
  %v297 = vld [vmem:[%s2 + $0x770] sm:$0xff]
  %v298 = vld [vmem:[%s2 + $0x778] sm:$0xff]
  %v299 = vld [vmem:[%s2 + $0x780] sm:$0xff]
  %v300 = vld [vmem:[%s2 + $0x788] sm:$0xff]
  %v301 = vld [vmem:[%s2 + $0x790] sm:$0xff]
  %v302 = vld [vmem:[%s2 + $0x798] sm:$0xff]
  %v303 = vld [vmem:[%s2 + $0x7a0] sm:$0xff]
  %v304 = vld [vmem:[%s2 + $0x7a8] sm:$0xff]
  %v305 = vld [vmem:[%s2 + $0x7b0] sm:$0xff]
  %v306 = vld [vmem:[%s2 + $0x7b8] sm:$0xff]
  %v307 = vld [vmem:[%s2 + $0x7c0] sm:$0xff]
  %v308 = vld [vmem:[%s2 + $0x7c8] sm:$0xff]
  %v309 = vld [vmem:[%s2 + $0x7d0] sm:$0xff]
  %v310 = vld [vmem:[%s2 + $0x7d8] sm:$0xff]
  %v311 = vld [vmem:[%s2 + $0x7e0] sm:$0xff]
  %v312 = vld [vmem:[%s2 + $0x7e8] sm:$0xff]
  %v313 = vld [vmem:[%s2 + $0x7f0] sm:$0xff]
  %v314 = vld [vmem:[%s2 + $0x7f8] sm:$0xff]
  %v315 = vld [vmem:[%s2 + $0x800] sm:$0xff]
  %v316 = vld [vmem:[%s2 + $0x808] sm:$0xff]
  %v317 = vld [vmem:[%s2 + $0x810] sm:$0xff]
  %v318 = vld [vmem:[%s2 + $0x818] sm:$0xff]
  %v319 = vld [vmem:[%s2 + $0x820] sm:$0xff]
  %v320 = vld [vmem:[%s2 + $0x828] sm:$0xff]
  %v321 = vld [vmem:[%s2 + $0x830] sm:$0xff]
  %v322 = vld [vmem:[%s2 + $0x838] sm:$0xff]
  %v323 = vld [vmem:[%s2 + $0x840] sm:$0xff]
  %v324 = vld [vmem:[%s2 + $0x848] sm:$0xff]
  %v325 = vld [vmem:[%s2 + $0x850] sm:$0xff]
  %v326 = vld [vmem:[%s2 + $0x858] sm:$0xff]
  %v327 = vld [vmem:[%s2 + $0x860] sm:$0xff]
  %v328 = vld [vmem:[%s2 + $0x868] sm:$0xff]
  %v329 = vld [vmem:[%s2 + $0x870] sm:$0xff]
  %v330 = vld [vmem:[%s2 + $0x878] sm:$0xff]
  %v331 = vld [vmem:[%s2 + $0x880] sm:$0xff]
  %v332 = vld [vmem:[%s2 + $0x888] sm:$0xff]
  %v333 = vld [vmem:[%s2 + $0x890] sm:$0xff]
  %v334 = vld [vmem:[%s2 + $0x898] sm:$0xff]
  %v335 = vld [vmem:[%s2 + $0x8a0] sm:$0xff]
  %v336 = vld [vmem:[%s2 + $0x8a8] sm:$0xff]
  %v337 = vld [vmem:[%s2 + $0x8b0] sm:$0xff]
  %v338 = vld [vmem:[%s2 + $0x8b8] sm:$0xff]
  %v339 = vld [vmem:[%s2 + $0x8c0] sm:$0xff]
  %v340 = vld [vmem:[%s2 + $0x8c8] sm:$0xff]
  %v341 = vld [vmem:[%s2 + $0x8d0] sm:$0xff]
  %v342 = vld [vmem:[%s2 + $0x8d8] sm:$0xff]
  %v343 = vld [vmem:[%s2 + $0x8e0] sm:$0xff]
  %v344 = vld [vmem:[%s2 + $0x8e8] sm:$0xff]
  %v345 = vld [vmem:[%s2 + $0x8f0] sm:$0xff]
  %v346 = vld [vmem:[%s2 + $0x8f8] sm:$0xff]
  %v347 = vld [vmem:[%s2 + $0x900] sm:$0xff]
  %v348 = vld [vmem:[%s2 + $0x908] sm:$0xff]
  %v349 = vld [vmem:[%s2 + $0x910] sm:$0xff]
  %v350 = vld [vmem:[%s2 + $0x918] sm:$0xff]
  %v351 = vld [vmem:[%s2 + $0x920] sm:$0xff]
  %v352 = vld [vmem:[%s2 + $0x928] sm:$0xff]
  %v353 = vld [vmem:[%s2 + $0x930] sm:$0xff]
  %v354 = vld [vmem:[%s2 + $0x938] sm:$0xff]
  %v355 = vld [vmem:[%s2 + $0x940] sm:$0xff]
  %v356 = vld [vmem:[%s2 + $0x948] sm:$0xff]
  %v357 = vld [vmem:[%s2 + $0x950] sm:$0xff]
  %v358 = vld [vmem:[%s2 + $0x958] sm:$0xff]
  %v359 = vld [vmem:[%s2 + $0x960] sm:$0xff]
  %v360 = vld [vmem:[%s2 + $0x968] sm:$0xff]
  %v361 = vld [vmem:[%s2 + $0x970] sm:$0xff]
  %v362 = vld [vmem:[%s2 + $0x978] sm:$0xff]
  %v363 = vld [vmem:[%s2 + $0x980] sm:$0xff]
  %v364 = vld [vmem:[%s2 + $0x988] sm:$0xff]
  %v365 = vld [vmem:[%s2 + $0x990] sm:$0xff]
  %v366 = vld [vmem:[%s2 + $0x998] sm:$0xff]
  %v367 = vld [vmem:[%s2 + $0x9a0] sm:$0xff]
  %v368 = vld [vmem:[%s2 + $0x9a8] sm:$0xff]
  %v369 = vld [vmem:[%s2 + $0x9b0] sm:$0xff]
  %v370 = vld [vmem:[%s2 + $0x9b8] sm:$0xff]
  %v371 = vld [vmem:[%s2 + $0x9c0] sm:$0xff]
  %v372 = vld [vmem:[%s2 + $0x9c8] sm:$0xff]
  %v373 = vld [vmem:[%s2 + $0x9d0] sm:$0xff]
  %v374 = vld [vmem:[%s2 + $0x9d8] sm:$0xff]
  %v375 = vld [vmem:[%s2 + $0x9e0] sm:$0xff]
  %v376 = vld [vmem:[%s2 + $0x9e8] sm:$0xff]
  %v377 = vld [vmem:[%s2 + $0x9f0] sm:$0xff]
  %v378 = vld [vmem:[%s2 + $0x9f8] sm:$0xff]
  %v379 = vld [vmem:[%s2 + $0xa00] sm:$0xff]
  %v380 = vld [vmem:[%s2 + $0xa08] sm:$0xff]
  %v381 = vld [vmem:[%s2 + $0xa10] sm:$0xff]
  %v382 = vld [vmem:[%s2 + $0xa18] sm:$0xff]
  %v383 = vld [vmem:[%s2 + $0xa20] sm:$0xff]
  %v384 = vld [vmem:[%s2 + $0xa28] sm:$0xff]
  %v385 = vld [vmem:[%s2 + $0xa30] sm:$0xff]
  %v386 = vld [vmem:[%s2 + $0xa38] sm:$0xff]
  %v387 = vld [vmem:[%s2 + $0xa40] sm:$0xff]
  %v388 = vld [vmem:[%s2 + $0xa48] sm:$0xff]
  %v389 = vld [vmem:[%s2 + $0xa50] sm:$0xff]
  %v390 = vld [vmem:[%s2 + $0xa58] sm:$0xff]
  %v391 = vld [vmem:[%s2 + $0xa60] sm:$0xff]
  %v392 = vld [vmem:[%s2 + $0xa68] sm:$0xff]
  %v393 = vld [vmem:[%s2 + $0xa70] sm:$0xff]
  %v394 = vld [vmem:[%s2 + $0xa78] sm:$0xff]
  %v395 = vld [vmem:[%s2 + $0xa80] sm:$0xff]
  %v396 = vld [vmem:[%s2 + $0xa88] sm:$0xff]
  %v397 = vld [vmem:[%s2 + $0xa90] sm:$0xff]
  %v398 = vld [vmem:[%s2 + $0xa98] sm:$0xff]
  %v399 = vld [vmem:[%s2 + $0xaa0] sm:$0xff]
  %v400 = vld [vmem:[%s2 + $0xaa8] sm:$0xff]
  %v401 = vld [vmem:[%s2 + $0xab0] sm:$0xff]
  %v402 = vld [vmem:[%s2 + $0xab8] sm:$0xff]
  %v403 = vld [vmem:[%s2 + $0xac0] sm:$0xff]
  %v404 = vld [vmem:[%s2 + $0xac8] sm:$0xff]
  %v405 = vld [vmem:[%s2 + $0xad0] sm:$0xff]
  %v406 = vld [vmem:[%s2 + $0xad8] sm:$0xff]
  %v407 = vld [vmem:[%s2 + $0xae0] sm:$0xff]
  %v408 = vld [vmem:[%s2 + $0xae8] sm:$0xff]
  %v409 = vld [vmem:[%s2 + $0xaf0] sm:$0xff]
  %v410 = vld [vmem:[%s2 + $0xaf8] sm:$0xff]
  %v411 = vld [vmem:[%s2 + $0xb00] sm:$0xff]
  %v412 = vld [vmem:[%s2 + $0xb08] sm:$0xff]
  %v413 = vld [vmem:[%s2 + $0xb10] sm:$0xff]
  %v414 = vld [vmem:[%s2 + $0xb18] sm:$0xff]
  %v415 = vld [vmem:[%s2 + $0xb20] sm:$0xff]
  %v416 = vld [vmem:[%s2 + $0xb28] sm:$0xff]
  %v417 = vld [vmem:[%s2 + $0xb30] sm:$0xff]
  %v418 = vld [vmem:[%s2 + $0xb38] sm:$0xff]
  %v419 = vld [vmem:[%s2 + $0xb40] sm:$0xff]
  %v420 = vld [vmem:[%s2 + $0xb48] sm:$0xff]
  %v421 = vld [vmem:[%s2 + $0xb50] sm:$0xff]
  %v422 = vld [vmem:[%s2 + $0xb58] sm:$0xff]
  %v423 = vld [vmem:[%s2 + $0xb60] sm:$0xff]
  %v424 = vld [vmem:[%s2 + $0xb68] sm:$0xff]
  %v425 = vld [vmem:[%s2 + $0xb70] sm:$0xff]
  %v426 = vld [vmem:[%s2 + $0xb78] sm:$0xff]
  %v427 = vld [vmem:[%s2 + $0xb80] sm:$0xff]
  %v428 = vld [vmem:[%s2 + $0xb88] sm:$0xff]
  %v429 = vld [vmem:[%s2 + $0xb90] sm:$0xff]
  %v430 = vld [vmem:[%s2 + $0xb98] sm:$0xff]
  %v431 = vld [vmem:[%s2 + $0xba0] sm:$0xff]
  %v432 = vld [vmem:[%s2 + $0xba8] sm:$0xff]
  %v433 = vld [vmem:[%s2 + $0xbb0] sm:$0xff]
  %v434 = vld [vmem:[%s2 + $0xbb8] sm:$0xff]
  %v435 = vld [vmem:[%s2 + $0xbc0] sm:$0xff]
  %v436 = vld [vmem:[%s2 + $0xbc8] sm:$0xff]
  %v437 = vld [vmem:[%s2 + $0xbd0] sm:$0xff]
  %v438 = vld [vmem:[%s2 + $0xbd8] sm:$0xff]
  %v439 = vld [vmem:[%s2 + $0xbe0] sm:$0xff]
  %v440 = vld [vmem:[%s2 + $0xbe8] sm:$0xff]
  %v441 = vld [vmem:[%s2 + $0xbf0] sm:$0xff]
  %v442 = vld [vmem:[%s2 + $0xbf8] sm:$0xff]
  %v443 = vld [vmem:[%s1] sm:$0xf]
  %v444 = vld [vmem:[%s1 + $0x4] sm:$0xf]
  %v445 = vld [vmem:[%s3] sm:$0xff]
  %v446 = vld [vmem:[%s3 + $0x8] sm:$0xff]
  %v447 = vld [vmem:[%s3 + $0x10] sm:$0xff]
  %v448 = vld [vmem:[%s3 + $0x18] sm:$0xff]
  %v451 = vunpack.c.l.b16 %v443
  %v452 = vunpack.c.l.b16 %v444
  %v453 = vpack.c.b16 %v452, %v451
  %v458 = vunpack.c.l.b16 %v445
  %v459 = vunpack.c.h.b16 %v445
  %v460 = vunpack.c.l.b16 %v446
  %v461 = vunpack.c.h.b16 %v446
  %v462 = vunpack.c.l.b16 %v447
  %v463 = vunpack.c.h.b16 %v447
  %v464 = vunpack.c.l.b16 %v448
  %v465 = vunpack.c.h.b16 %v448
  %v466 = vpack.c.b16 %v458, %v458
  %v467 = vpack.c.b16 %v459, %v459
  %v468 = vpack.c.b16 %v460, %v460
  %v469 = vpack.c.b16 %v461, %v461
  %v470 = vpack.c.b16 %v462, %v462
  %v471 = vpack.c.b16 %v463, %v463
  %v472 = vpack.c.b16 %v464, %v464
  %v473 = vpack.c.b16 %v465, %v465
  %vm474 = vcmask 64512
  %v476 = vsel %vm474, %v453, 0
  %vm478 = vcmask 1043456
  %v480 = vsel %vm478, %v466, 0
  %v483 = vsel %vm478, %v467, 0
  %v486 = vsel %vm478, %v468, 0
  %v489 = vsel %vm478, %v469, 0
  %v492 = vsel %vm478, %v470, 0
  %v495 = vsel %vm478, %v471, 0
  %v498 = vsel %vm478, %v472, 0
  %v501 = vsel %vm478, %v473, 0
  %503 = vmatpush.bf16.msra.mxu0 0
  %504 = vmatpush.bf16.msra.mxu0 0
  %505 = vmatpush.bf16.msra.mxu0 0
  %506 = vmatpush.bf16.msra.mxu0 0
  %507 = vmatpush.bf16.msra.mxu0 0
  %508 = vmatpush.bf16.msra.mxu0 0
  %509 = vmatpush.bf16.msra.mxu0 0
  %510 = vmatpush.bf16.msra.mxu0 %v480
  %511 = vmatmul.bf16.gmra.mxu0 %v476
  %v512 = vpop.f32.mrf.mxu0
  %v513 = vadd.f32 0.0, %v512
  %v514 = vpop.f32.mrf.mxu0
  %v515 = vadd.f32 0.0, %v514
  %516 = vdwg.mxu0
  %517 = vmatpush.bf16.msra.mxu0 0
  %518 = vmatpush.bf16.msra.mxu0 0
  %519 = vmatpush.bf16.msra.mxu0 0
  %520 = vmatpush.bf16.msra.mxu0 0
  %521 = vmatpush.bf16.msra.mxu0 0
  %522 = vmatpush.bf16.msra.mxu0 0
  %523 = vmatpush.bf16.msra.mxu0 0
  %524 = vmatpush.bf16.msra.mxu0 %v483
  %525 = vmatmul.bf16.gmra.mxu0 %v476
  %v526 = vpop.f32.mrf.mxu0
  %v527 = vadd.f32 0.0, %v526
  %v528 = vpop.f32.mrf.mxu0
  %v529 = vadd.f32 0.0, %v528
  %530 = vdwg.mxu0
  %531 = vmatpush.bf16.msra.mxu0 0
  %532 = vmatpush.bf16.msra.mxu0 0
  %533 = vmatpush.bf16.msra.mxu0 0
  %534 = vmatpush.bf16.msra.mxu0 0
  %535 = vmatpush.bf16.msra.mxu0 0
  %536 = vmatpush.bf16.msra.mxu0 0
  %537 = vmatpush.bf16.msra.mxu0 0
  %538 = vmatpush.bf16.msra.mxu0 %v486
  %539 = vmatmul.bf16.gmra.mxu0 %v476
  %v540 = vpop.f32.mrf.mxu0
  %v541 = vadd.f32 0.0, %v540
  %v542 = vpop.f32.mrf.mxu0
  %v543 = vadd.f32 0.0, %v542
  %544 = vdwg.mxu0
  %545 = vmatpush.bf16.msra.mxu0 0
  %546 = vmatpush.bf16.msra.mxu0 0
  %547 = vmatpush.bf16.msra.mxu0 0
  %548 = vmatpush.bf16.msra.mxu0 0
  %549 = vmatpush.bf16.msra.mxu0 0
  %550 = vmatpush.bf16.msra.mxu0 0
  %551 = vmatpush.bf16.msra.mxu0 0
  %552 = vmatpush.bf16.msra.mxu0 %v489
  %553 = vmatmul.bf16.gmra.mxu0 %v476
  %v554 = vpop.f32.mrf.mxu0
  %v555 = vadd.f32 0.0, %v554
  %v556 = vpop.f32.mrf.mxu0
  %v557 = vadd.f32 0.0, %v556
  %558 = vdwg.mxu0
  %559 = vmatpush.bf16.msra.mxu0 0
  %560 = vmatpush.bf16.msra.mxu0 0
  %561 = vmatpush.bf16.msra.mxu0 0
  %562 = vmatpush.bf16.msra.mxu0 0
  %563 = vmatpush.bf16.msra.mxu0 0
  %564 = vmatpush.bf16.msra.mxu0 0
  %565 = vmatpush.bf16.msra.mxu0 0
  %566 = vmatpush.bf16.msra.mxu0 %v492
  %567 = vmatmul.bf16.gmra.mxu0 %v476
  %v568 = vpop.f32.mrf.mxu0
  %v569 = vadd.f32 0.0, %v568
  %v570 = vpop.f32.mrf.mxu0
  %v571 = vadd.f32 0.0, %v570
  %572 = vdwg.mxu0
  %573 = vmatpush.bf16.msra.mxu0 0
  %574 = vmatpush.bf16.msra.mxu0 0
  %575 = vmatpush.bf16.msra.mxu0 0
  %576 = vmatpush.bf16.msra.mxu0 0
  %577 = vmatpush.bf16.msra.mxu0 0
  %578 = vmatpush.bf16.msra.mxu0 0
  %579 = vmatpush.bf16.msra.mxu0 0
  %580 = vmatpush.bf16.msra.mxu0 %v495
  %581 = vmatmul.bf16.gmra.mxu0 %v476
  %v582 = vpop.f32.mrf.mxu0
  %v583 = vadd.f32 0.0, %v582
  %v584 = vpop.f32.mrf.mxu0
  %v585 = vadd.f32 0.0, %v584
  %586 = vdwg.mxu0
  %587 = vmatpush.bf16.msra.mxu0 0
  %588 = vmatpush.bf16.msra.mxu0 0
  %589 = vmatpush.bf16.msra.mxu0 0
  %590 = vmatpush.bf16.msra.mxu0 0
  %591 = vmatpush.bf16.msra.mxu0 0
  %592 = vmatpush.bf16.msra.mxu0 0
  %593 = vmatpush.bf16.msra.mxu0 0
  %594 = vmatpush.bf16.msra.mxu0 %v498
  %595 = vmatmul.bf16.gmra.mxu0 %v476
  %v596 = vpop.f32.mrf.mxu0
  %v597 = vadd.f32 0.0, %v596
  %v598 = vpop.f32.mrf.mxu0
  %v599 = vadd.f32 0.0, %v598
  %600 = vdwg.mxu0
  %601 = vmatpush.bf16.msra.mxu0 0
  %602 = vmatpush.bf16.msra.mxu0 0
  %603 = vmatpush.bf16.msra.mxu0 0
  %604 = vmatpush.bf16.msra.mxu0 0
  %605 = vmatpush.bf16.msra.mxu0 0
  %606 = vmatpush.bf16.msra.mxu0 0
  %607 = vmatpush.bf16.msra.mxu0 0
  %608 = vmatpush.bf16.msra.mxu0 %v501
  %609 = vmatmul.bf16.gmra.mxu0 %v476
  %v610 = vpop.f32.mrf.mxu0
  %v611 = vadd.f32 0.0, %v610
  %v612 = vpop.f32.mrf.mxu0
  %v613 = vadd.f32 0.0, %v612
  %614 = vdwg.mxu0
  %v999 = vunpack.c.l.b16 %v59
  %v1000 = vunpack.c.h.b16 %v59
  %v1001 = vunpack.c.l.b16 %v60
  %v1002 = vunpack.c.h.b16 %v60
  %v1003 = vunpack.c.l.b16 %v61
  %v1004 = vunpack.c.h.b16 %v61
  %v1005 = vunpack.c.l.b16 %v62
  %v1006 = vunpack.c.h.b16 %v62
  %v1007 = vunpack.c.l.b16 %v63
  %v1008 = vunpack.c.h.b16 %v63
  %v1009 = vunpack.c.l.b16 %v64
  %v1010 = vunpack.c.h.b16 %v64
  %v1011 = vunpack.c.l.b16 %v65
  %v1012 = vunpack.c.h.b16 %v65
  %v1013 = vunpack.c.l.b16 %v66
  %v1014 = vunpack.c.h.b16 %v66
  %v1015 = vunpack.c.l.b16 %v67
  %v1016 = vunpack.c.h.b16 %v67
  %v1017 = vunpack.c.l.b16 %v68
  %v1018 = vunpack.c.h.b16 %v68
  %v1019 = vunpack.c.l.b16 %v69
  %v1020 = vunpack.c.h.b16 %v69
  %v1021 = vunpack.c.l.b16 %v70
  %v1022 = vunpack.c.h.b16 %v70
  %v1023 = vunpack.c.l.b16 %v71
  %v1024 = vunpack.c.h.b16 %v71
  %v1025 = vunpack.c.l.b16 %v72
  %v1026 = vunpack.c.h.b16 %v72
  %v1027 = vunpack.c.l.b16 %v73
  %v1028 = vunpack.c.h.b16 %v73
  %v1029 = vunpack.c.l.b16 %v74
  %v1030 = vunpack.c.h.b16 %v74
  %v1031 = vunpack.c.l.b16 %v75
  %v1032 = vunpack.c.h.b16 %v75
  %v1033 = vunpack.c.l.b16 %v76
  %v1034 = vunpack.c.h.b16 %v76
  %v1035 = vunpack.c.l.b16 %v77
  %v1036 = vunpack.c.h.b16 %v77
  %v1037 = vunpack.c.l.b16 %v78
  %v1038 = vunpack.c.h.b16 %v78
  %v1039 = vunpack.c.l.b16 %v79
  %v1040 = vunpack.c.h.b16 %v79
  %v1041 = vunpack.c.l.b16 %v80
  %v1042 = vunpack.c.h.b16 %v80
  %v1043 = vunpack.c.l.b16 %v81
  %v1044 = vunpack.c.h.b16 %v81
  %v1045 = vunpack.c.l.b16 %v82
  %v1046 = vunpack.c.h.b16 %v82
  %v1047 = vunpack.c.l.b16 %v83
  %v1048 = vunpack.c.h.b16 %v83
  %v1049 = vunpack.c.l.b16 %v84
  %v1050 = vunpack.c.h.b16 %v84
  %v1051 = vunpack.c.l.b16 %v85
  %v1052 = vunpack.c.h.b16 %v85
  %v1053 = vunpack.c.l.b16 %v86
  %v1054 = vunpack.c.h.b16 %v86
  %v1055 = vunpack.c.l.b16 %v87
  %v1056 = vunpack.c.h.b16 %v87
  %v1057 = vunpack.c.l.b16 %v88
  %v1058 = vunpack.c.h.b16 %v88
  %v1059 = vunpack.c.l.b16 %v89
  %v1060 = vunpack.c.h.b16 %v89
  %v1061 = vunpack.c.l.b16 %v90
  %v1062 = vunpack.c.h.b16 %v90
  %v1063 = vunpack.c.l.b16 %v91
  %v1064 = vunpack.c.h.b16 %v91
  %v1065 = vunpack.c.l.b16 %v92
  %v1066 = vunpack.c.h.b16 %v92
  %v1067 = vunpack.c.l.b16 %v93
  %v1068 = vunpack.c.h.b16 %v93
  %v1069 = vunpack.c.l.b16 %v94
  %v1070 = vunpack.c.h.b16 %v94
  %v1071 = vunpack.c.l.b16 %v95
  %v1072 = vunpack.c.h.b16 %v95
  %v1073 = vunpack.c.l.b16 %v96
  %v1074 = vunpack.c.h.b16 %v96
  %v1075 = vunpack.c.l.b16 %v97
  %v1076 = vunpack.c.h.b16 %v97
  %v1077 = vunpack.c.l.b16 %v98
  %v1078 = vunpack.c.h.b16 %v98
  %v1079 = vunpack.c.l.b16 %v99
  %v1080 = vunpack.c.h.b16 %v99
  %v1081 = vunpack.c.l.b16 %v100
  %v1082 = vunpack.c.h.b16 %v100
  %v1083 = vunpack.c.l.b16 %v101
  %v1084 = vunpack.c.h.b16 %v101
  %v1085 = vunpack.c.l.b16 %v102
  %v1086 = vunpack.c.h.b16 %v102
  %v1087 = vunpack.c.l.b16 %v103
  %v1088 = vunpack.c.h.b16 %v103
  %v1089 = vunpack.c.l.b16 %v104
  %v1090 = vunpack.c.h.b16 %v104
  %v1091 = vunpack.c.l.b16 %v105
  %v1092 = vunpack.c.h.b16 %v105
  %v1093 = vunpack.c.l.b16 %v106
  %v1094 = vunpack.c.h.b16 %v106
  %v1095 = vunpack.c.l.b16 %v107
  %v1096 = vunpack.c.h.b16 %v107
  %v1097 = vunpack.c.l.b16 %v108
  %v1098 = vunpack.c.h.b16 %v108
  %v1099 = vunpack.c.l.b16 %v109
  %v1100 = vunpack.c.h.b16 %v109
  %v1101 = vunpack.c.l.b16 %v110
  %v1102 = vunpack.c.h.b16 %v110
  %v1103 = vunpack.c.l.b16 %v111
  %v1104 = vunpack.c.h.b16 %v111
  %v1105 = vunpack.c.l.b16 %v112
  %v1106 = vunpack.c.h.b16 %v112
  %v1107 = vunpack.c.l.b16 %v113
  %v1108 = vunpack.c.h.b16 %v113
  %v1109 = vunpack.c.l.b16 %v114
  %v1110 = vunpack.c.h.b16 %v114
  %v1111 = vunpack.c.l.b16 %v115
  %v1112 = vunpack.c.h.b16 %v115
  %v1113 = vunpack.c.l.b16 %v116
  %v1114 = vunpack.c.h.b16 %v116
  %v1115 = vunpack.c.l.b16 %v117
  %v1116 = vunpack.c.h.b16 %v117
  %v1117 = vunpack.c.l.b16 %v118
  %v1118 = vunpack.c.h.b16 %v118
  %v1119 = vunpack.c.l.b16 %v119
  %v1120 = vunpack.c.h.b16 %v119
  %v1121 = vunpack.c.l.b16 %v120
  %v1122 = vunpack.c.h.b16 %v120
  %v1123 = vunpack.c.l.b16 %v121
  %v1124 = vunpack.c.h.b16 %v121
  %v1125 = vunpack.c.l.b16 %v122
  %v1126 = vunpack.c.h.b16 %v122
  %v1127 = vunpack.c.l.b16 %v123
  %v1128 = vunpack.c.h.b16 %v123
  %v1129 = vunpack.c.l.b16 %v124
  %v1130 = vunpack.c.h.b16 %v124
  %v1131 = vunpack.c.l.b16 %v125
  %v1132 = vunpack.c.h.b16 %v125
  %v1133 = vunpack.c.l.b16 %v126
  %v1134 = vunpack.c.h.b16 %v126
  %v1135 = vunpack.c.l.b16 %v127
  %v1136 = vunpack.c.h.b16 %v127
  %v1137 = vunpack.c.l.b16 %v128
  %v1138 = vunpack.c.h.b16 %v128
  %v1139 = vunpack.c.l.b16 %v129
  %v1140 = vunpack.c.h.b16 %v129
  %v1141 = vunpack.c.l.b16 %v130
  %v1142 = vunpack.c.h.b16 %v130
  %v1143 = vunpack.c.l.b16 %v131
  %v1144 = vunpack.c.h.b16 %v131
  %v1145 = vunpack.c.l.b16 %v132
  %v1146 = vunpack.c.h.b16 %v132
  %v1147 = vunpack.c.l.b16 %v133
  %v1148 = vunpack.c.h.b16 %v133
  %v1149 = vunpack.c.l.b16 %v134
  %v1150 = vunpack.c.h.b16 %v134
  %v1151 = vunpack.c.l.b16 %v135
  %v1152 = vunpack.c.h.b16 %v135
  %v1153 = vunpack.c.l.b16 %v136
  %v1154 = vunpack.c.h.b16 %v136
  %v1155 = vunpack.c.l.b16 %v137
  %v1156 = vunpack.c.h.b16 %v137
  %v1157 = vunpack.c.l.b16 %v138
  %v1158 = vunpack.c.h.b16 %v138
  %v1159 = vunpack.c.l.b16 %v139
  %v1160 = vunpack.c.h.b16 %v139
  %v1161 = vunpack.c.l.b16 %v140
  %v1162 = vunpack.c.h.b16 %v140
  %v1163 = vunpack.c.l.b16 %v141
  %v1164 = vunpack.c.h.b16 %v141
  %v1165 = vunpack.c.l.b16 %v142
  %v1166 = vunpack.c.h.b16 %v142
  %v1167 = vunpack.c.l.b16 %v143
  %v1168 = vunpack.c.h.b16 %v143
  %v1169 = vunpack.c.l.b16 %v144
  %v1170 = vunpack.c.h.b16 %v144
  %v1171 = vunpack.c.l.b16 %v145
  %v1172 = vunpack.c.h.b16 %v145
  %v1173 = vunpack.c.l.b16 %v146
  %v1174 = vunpack.c.h.b16 %v146
  %v1175 = vunpack.c.l.b16 %v147
  %v1176 = vunpack.c.h.b16 %v147
  %v1177 = vunpack.c.l.b16 %v148
  %v1178 = vunpack.c.h.b16 %v148
  %v1179 = vunpack.c.l.b16 %v149
  %v1180 = vunpack.c.h.b16 %v149
  %v1181 = vunpack.c.l.b16 %v150
  %v1182 = vunpack.c.h.b16 %v150
  %v1183 = vunpack.c.l.b16 %v151
  %v1184 = vunpack.c.h.b16 %v151
  %v1185 = vunpack.c.l.b16 %v152
  %v1186 = vunpack.c.h.b16 %v152
  %v1187 = vunpack.c.l.b16 %v153
  %v1188 = vunpack.c.h.b16 %v153
  %v1189 = vunpack.c.l.b16 %v154
  %v1190 = vunpack.c.h.b16 %v154
  %v1191 = vunpack.c.l.b16 %v155
  %v1192 = vunpack.c.h.b16 %v155
  %v1193 = vunpack.c.l.b16 %v156
  %v1194 = vunpack.c.h.b16 %v156
  %v1195 = vunpack.c.l.b16 %v157
  %v1196 = vunpack.c.h.b16 %v157
  %v1197 = vunpack.c.l.b16 %v158
  %v1198 = vunpack.c.h.b16 %v158
  %v1199 = vunpack.c.l.b16 %v159
  %v1200 = vunpack.c.h.b16 %v159
  %v1201 = vunpack.c.l.b16 %v160
  %v1202 = vunpack.c.h.b16 %v160
  %v1203 = vunpack.c.l.b16 %v161
  %v1204 = vunpack.c.h.b16 %v161
  %v1205 = vunpack.c.l.b16 %v162
  %v1206 = vunpack.c.h.b16 %v162
  %v1207 = vunpack.c.l.b16 %v163
  %v1208 = vunpack.c.h.b16 %v163
  %v1209 = vunpack.c.l.b16 %v164
  %v1210 = vunpack.c.h.b16 %v164
  %v1211 = vunpack.c.l.b16 %v165
  %v1212 = vunpack.c.h.b16 %v165
  %v1213 = vunpack.c.l.b16 %v166
  %v1214 = vunpack.c.h.b16 %v166
  %v1215 = vunpack.c.l.b16 %v167
  %v1216 = vunpack.c.h.b16 %v167
  %v1217 = vunpack.c.l.b16 %v168
  %v1218 = vunpack.c.h.b16 %v168
  %v1219 = vunpack.c.l.b16 %v169
  %v1220 = vunpack.c.h.b16 %v169
  %v1221 = vunpack.c.l.b16 %v170
  %v1222 = vunpack.c.h.b16 %v170
  %v1223 = vunpack.c.l.b16 %v171
  %v1224 = vunpack.c.h.b16 %v171
  %v1225 = vunpack.c.l.b16 %v172
  %v1226 = vunpack.c.h.b16 %v172
  %v1227 = vunpack.c.l.b16 %v173
  %v1228 = vunpack.c.h.b16 %v173
  %v1229 = vunpack.c.l.b16 %v174
  %v1230 = vunpack.c.h.b16 %v174
  %v1231 = vunpack.c.l.b16 %v175
  %v1232 = vunpack.c.h.b16 %v175
  %v1233 = vunpack.c.l.b16 %v176
  %v1234 = vunpack.c.h.b16 %v176
  %v1235 = vunpack.c.l.b16 %v177
  %v1236 = vunpack.c.h.b16 %v177
  %v1237 = vunpack.c.l.b16 %v178
  %v1238 = vunpack.c.h.b16 %v178
  %v1239 = vunpack.c.l.b16 %v179
  %v1240 = vunpack.c.h.b16 %v179
  %v1241 = vunpack.c.l.b16 %v180
  %v1242 = vunpack.c.h.b16 %v180
  %v1243 = vunpack.c.l.b16 %v181
  %v1244 = vunpack.c.h.b16 %v181
  %v1245 = vunpack.c.l.b16 %v182
  %v1246 = vunpack.c.h.b16 %v182
  %v1247 = vunpack.c.l.b16 %v183
  %v1248 = vunpack.c.h.b16 %v183
  %v1249 = vunpack.c.l.b16 %v184
  %v1250 = vunpack.c.h.b16 %v184
  %v1251 = vunpack.c.l.b16 %v185
  %v1252 = vunpack.c.h.b16 %v185
  %v1253 = vunpack.c.l.b16 %v186
  %v1254 = vunpack.c.h.b16 %v186
  %v1255 = vunpack.c.l.b16 %v187
  %v1256 = vunpack.c.h.b16 %v187
  %v1257 = vunpack.c.l.b16 %v188
  %v1258 = vunpack.c.h.b16 %v188
  %v1259 = vunpack.c.l.b16 %v189
  %v1260 = vunpack.c.h.b16 %v189
  %v1261 = vunpack.c.l.b16 %v190
  %v1262 = vunpack.c.h.b16 %v190
  %v1263 = vunpack.c.l.b16 %v191
  %v1264 = vunpack.c.h.b16 %v191
  %v1265 = vunpack.c.l.b16 %v192
  %v1266 = vunpack.c.h.b16 %v192
  %v1267 = vunpack.c.l.b16 %v193
  %v1268 = vunpack.c.h.b16 %v193
  %v1269 = vunpack.c.l.b16 %v194
  %v1270 = vunpack.c.h.b16 %v194
  %v1271 = vunpack.c.l.b16 %v195
  %v1272 = vunpack.c.h.b16 %v195
  %v1273 = vunpack.c.l.b16 %v196
  %v1274 = vunpack.c.h.b16 %v196
  %v1275 = vunpack.c.l.b16 %v197
  %v1276 = vunpack.c.h.b16 %v197
  %v1277 = vunpack.c.l.b16 %v198
  %v1278 = vunpack.c.h.b16 %v198
  %v1279 = vunpack.c.l.b16 %v199
  %v1280 = vunpack.c.h.b16 %v199
  %v1281 = vunpack.c.l.b16 %v200
  %v1282 = vunpack.c.h.b16 %v200
  %v1283 = vunpack.c.l.b16 %v201
  %v1284 = vunpack.c.h.b16 %v201
  %v1285 = vunpack.c.l.b16 %v202
  %v1286 = vunpack.c.h.b16 %v202
  %v1287 = vunpack.c.l.b16 %v203
  %v1288 = vunpack.c.h.b16 %v203
  %v1289 = vunpack.c.l.b16 %v204
  %v1290 = vunpack.c.h.b16 %v204
  %v1291 = vunpack.c.l.b16 %v205
  %v1292 = vunpack.c.h.b16 %v205
  %v1293 = vunpack.c.l.b16 %v206
  %v1294 = vunpack.c.h.b16 %v206
  %v1295 = vunpack.c.l.b16 %v207
  %v1296 = vunpack.c.h.b16 %v207
  %v1297 = vunpack.c.l.b16 %v208
  %v1298 = vunpack.c.h.b16 %v208
  %v1299 = vunpack.c.l.b16 %v209
  %v1300 = vunpack.c.h.b16 %v209
  %v1301 = vunpack.c.l.b16 %v210
  %v1302 = vunpack.c.h.b16 %v210
  %v1303 = vunpack.c.l.b16 %v211
  %v1304 = vunpack.c.h.b16 %v211
  %v1305 = vunpack.c.l.b16 %v212
  %v1306 = vunpack.c.h.b16 %v212
  %v1307 = vunpack.c.l.b16 %v213
  %v1308 = vunpack.c.h.b16 %v213
  %v1309 = vunpack.c.l.b16 %v214
  %v1310 = vunpack.c.h.b16 %v214
  %v1311 = vunpack.c.l.b16 %v215
  %v1312 = vunpack.c.h.b16 %v215
  %v1313 = vunpack.c.l.b16 %v216
  %v1314 = vunpack.c.h.b16 %v216
  %v1315 = vunpack.c.l.b16 %v217
  %v1316 = vunpack.c.h.b16 %v217
  %v1317 = vunpack.c.l.b16 %v218
  %v1318 = vunpack.c.h.b16 %v218
  %v1319 = vunpack.c.l.b16 %v219
  %v1320 = vunpack.c.h.b16 %v219
  %v1321 = vunpack.c.l.b16 %v220
  %v1322 = vunpack.c.h.b16 %v220
  %v1323 = vunpack.c.l.b16 %v221
  %v1324 = vunpack.c.h.b16 %v221
  %v1325 = vunpack.c.l.b16 %v222
  %v1326 = vunpack.c.h.b16 %v222
  %v1327 = vunpack.c.l.b16 %v223
  %v1328 = vunpack.c.h.b16 %v223
  %v1329 = vunpack.c.l.b16 %v224
  %v1330 = vunpack.c.h.b16 %v224
  %v1331 = vunpack.c.l.b16 %v225
  %v1332 = vunpack.c.h.b16 %v225
  %v1333 = vunpack.c.l.b16 %v226
  %v1334 = vunpack.c.h.b16 %v226
  %v1335 = vunpack.c.l.b16 %v227
  %v1336 = vunpack.c.h.b16 %v227
  %v1337 = vunpack.c.l.b16 %v228
  %v1338 = vunpack.c.h.b16 %v228
  %v1339 = vunpack.c.l.b16 %v229
  %v1340 = vunpack.c.h.b16 %v229
  %v1341 = vunpack.c.l.b16 %v230
  %v1342 = vunpack.c.h.b16 %v230
  %v1343 = vunpack.c.l.b16 %v231
  %v1344 = vunpack.c.h.b16 %v231
  %v1345 = vunpack.c.l.b16 %v232
  %v1346 = vunpack.c.h.b16 %v232
  %v1347 = vunpack.c.l.b16 %v233
  %v1348 = vunpack.c.h.b16 %v233
  %v1349 = vunpack.c.l.b16 %v234
  %v1350 = vunpack.c.h.b16 %v234
  %v1351 = vunpack.c.l.b16 %v235
  %v1352 = vunpack.c.h.b16 %v235
  %v1353 = vunpack.c.l.b16 %v236
  %v1354 = vunpack.c.h.b16 %v236
  %v1355 = vunpack.c.l.b16 %v237
  %v1356 = vunpack.c.h.b16 %v237
  %v1357 = vunpack.c.l.b16 %v238
  %v1358 = vunpack.c.h.b16 %v238
  %v1359 = vunpack.c.l.b16 %v239
  %v1360 = vunpack.c.h.b16 %v239
  %v1361 = vunpack.c.l.b16 %v240
  %v1362 = vunpack.c.h.b16 %v240
  %v1363 = vunpack.c.l.b16 %v241
  %v1364 = vunpack.c.h.b16 %v241
  %v1365 = vunpack.c.l.b16 %v242
  %v1366 = vunpack.c.h.b16 %v242
  %v1367 = vunpack.c.l.b16 %v243
  %v1368 = vunpack.c.h.b16 %v243
  %v1369 = vunpack.c.l.b16 %v244
  %v1370 = vunpack.c.h.b16 %v244
  %v1371 = vunpack.c.l.b16 %v245
  %v1372 = vunpack.c.h.b16 %v245
  %v1373 = vunpack.c.l.b16 %v246
  %v1374 = vunpack.c.h.b16 %v246
  %v1375 = vunpack.c.l.b16 %v247
  %v1376 = vunpack.c.h.b16 %v247
  %v1377 = vunpack.c.l.b16 %v248
  %v1378 = vunpack.c.h.b16 %v248
  %v1379 = vunpack.c.l.b16 %v249
  %v1380 = vunpack.c.h.b16 %v249
  %v1381 = vunpack.c.l.b16 %v250
  %v1382 = vunpack.c.h.b16 %v250
  %v1383 = vunpack.c.l.b16 %v251
  %v1384 = vunpack.c.h.b16 %v251
  %v1385 = vunpack.c.l.b16 %v252
  %v1386 = vunpack.c.h.b16 %v252
  %v1387 = vunpack.c.l.b16 %v253
  %v1388 = vunpack.c.h.b16 %v253
  %v1389 = vunpack.c.l.b16 %v254
  %v1390 = vunpack.c.h.b16 %v254
  %v1391 = vunpack.c.l.b16 %v255
  %v1392 = vunpack.c.h.b16 %v255
  %v1393 = vunpack.c.l.b16 %v256
  %v1394 = vunpack.c.h.b16 %v256
  %v1395 = vunpack.c.l.b16 %v257
  %v1396 = vunpack.c.h.b16 %v257
  %v1397 = vunpack.c.l.b16 %v258
  %v1398 = vunpack.c.h.b16 %v258
  %v1399 = vunpack.c.l.b16 %v259
  %v1400 = vunpack.c.h.b16 %v259
  %v1401 = vunpack.c.l.b16 %v260
  %v1402 = vunpack.c.h.b16 %v260
  %v1403 = vunpack.c.l.b16 %v261
  %v1404 = vunpack.c.h.b16 %v261
  %v1405 = vunpack.c.l.b16 %v262
  %v1406 = vunpack.c.h.b16 %v262
  %v1407 = vunpack.c.l.b16 %v263
  %v1408 = vunpack.c.h.b16 %v263
  %v1409 = vunpack.c.l.b16 %v264
  %v1410 = vunpack.c.h.b16 %v264
  %v1411 = vunpack.c.l.b16 %v265
  %v1412 = vunpack.c.h.b16 %v265
  %v1413 = vunpack.c.l.b16 %v266
  %v1414 = vunpack.c.h.b16 %v266
  %v1415 = vunpack.c.l.b16 %v267
  %v1416 = vunpack.c.h.b16 %v267
  %v1417 = vunpack.c.l.b16 %v268
  %v1418 = vunpack.c.h.b16 %v268
  %v1419 = vunpack.c.l.b16 %v269
  %v1420 = vunpack.c.h.b16 %v269
  %v1421 = vunpack.c.l.b16 %v270
  %v1422 = vunpack.c.h.b16 %v270
  %v1423 = vunpack.c.l.b16 %v271
  %v1424 = vunpack.c.h.b16 %v271
  %v1425 = vunpack.c.l.b16 %v272
  %v1426 = vunpack.c.h.b16 %v272
  %v1427 = vunpack.c.l.b16 %v273
  %v1428 = vunpack.c.h.b16 %v273
  %v1429 = vunpack.c.l.b16 %v274
  %v1430 = vunpack.c.h.b16 %v274
  %v1431 = vunpack.c.l.b16 %v275
  %v1432 = vunpack.c.h.b16 %v275
  %v1433 = vunpack.c.l.b16 %v276
  %v1434 = vunpack.c.h.b16 %v276
  %v1435 = vunpack.c.l.b16 %v277
  %v1436 = vunpack.c.h.b16 %v277
  %v1437 = vunpack.c.l.b16 %v278
  %v1438 = vunpack.c.h.b16 %v278
  %v1439 = vunpack.c.l.b16 %v279
  %v1440 = vunpack.c.h.b16 %v279
  %v1441 = vunpack.c.l.b16 %v280
  %v1442 = vunpack.c.h.b16 %v280
  %v1443 = vunpack.c.l.b16 %v281
  %v1444 = vunpack.c.h.b16 %v281
  %v1445 = vunpack.c.l.b16 %v282
  %v1446 = vunpack.c.h.b16 %v282
  %v1447 = vunpack.c.l.b16 %v283
  %v1448 = vunpack.c.h.b16 %v283
  %v1449 = vunpack.c.l.b16 %v284
  %v1450 = vunpack.c.h.b16 %v284
  %v1451 = vunpack.c.l.b16 %v285
  %v1452 = vunpack.c.h.b16 %v285
  %v1453 = vunpack.c.l.b16 %v286
  %v1454 = vunpack.c.h.b16 %v286
  %v1455 = vunpack.c.l.b16 %v287
  %v1456 = vunpack.c.h.b16 %v287
  %v1457 = vunpack.c.l.b16 %v288
  %v1458 = vunpack.c.h.b16 %v288
  %v1459 = vunpack.c.l.b16 %v289
  %v1460 = vunpack.c.h.b16 %v289
  %v1461 = vunpack.c.l.b16 %v290
  %v1462 = vunpack.c.h.b16 %v290
  %v1463 = vunpack.c.l.b16 %v291
  %v1464 = vunpack.c.h.b16 %v291
  %v1465 = vunpack.c.l.b16 %v292
  %v1466 = vunpack.c.h.b16 %v292
  %v1467 = vunpack.c.l.b16 %v293
  %v1468 = vunpack.c.h.b16 %v293
  %v1469 = vunpack.c.l.b16 %v294
  %v1470 = vunpack.c.h.b16 %v294
  %v1471 = vunpack.c.l.b16 %v295
  %v1472 = vunpack.c.h.b16 %v295
  %v1473 = vunpack.c.l.b16 %v296
  %v1474 = vunpack.c.h.b16 %v296
  %v1475 = vunpack.c.l.b16 %v297
  %v1476 = vunpack.c.h.b16 %v297
  %v1477 = vunpack.c.l.b16 %v298
  %v1478 = vunpack.c.h.b16 %v298
  %v1479 = vunpack.c.l.b16 %v299
  %v1480 = vunpack.c.h.b16 %v299
  %v1481 = vunpack.c.l.b16 %v300
  %v1482 = vunpack.c.h.b16 %v300
  %v1483 = vunpack.c.l.b16 %v301
  %v1484 = vunpack.c.h.b16 %v301
  %v1485 = vunpack.c.l.b16 %v302
  %v1486 = vunpack.c.h.b16 %v302
  %v1487 = vunpack.c.l.b16 %v303
  %v1488 = vunpack.c.h.b16 %v303
  %v1489 = vunpack.c.l.b16 %v304
  %v1490 = vunpack.c.h.b16 %v304
  %v1491 = vunpack.c.l.b16 %v305
  %v1492 = vunpack.c.h.b16 %v305
  %v1493 = vunpack.c.l.b16 %v306
  %v1494 = vunpack.c.h.b16 %v306
  %v1495 = vunpack.c.l.b16 %v307
  %v1496 = vunpack.c.h.b16 %v307
  %v1497 = vunpack.c.l.b16 %v308
  %v1498 = vunpack.c.h.b16 %v308
  %v1499 = vunpack.c.l.b16 %v309
  %v1500 = vunpack.c.h.b16 %v309
  %v1501 = vunpack.c.l.b16 %v310
  %v1502 = vunpack.c.h.b16 %v310
  %v1503 = vunpack.c.l.b16 %v311
  %v1504 = vunpack.c.h.b16 %v311
  %v1505 = vunpack.c.l.b16 %v312
  %v1506 = vunpack.c.h.b16 %v312
  %v1507 = vunpack.c.l.b16 %v313
  %v1508 = vunpack.c.h.b16 %v313
  %v1509 = vunpack.c.l.b16 %v314
  %v1510 = vunpack.c.h.b16 %v314
  %v1511 = vunpack.c.l.b16 %v315
  %v1512 = vunpack.c.h.b16 %v315
  %v1513 = vunpack.c.l.b16 %v316
  %v1514 = vunpack.c.h.b16 %v316
  %v1515 = vunpack.c.l.b16 %v317
  %v1516 = vunpack.c.h.b16 %v317
  %v1517 = vunpack.c.l.b16 %v318
  %v1518 = vunpack.c.h.b16 %v318
  %v1519 = vunpack.c.l.b16 %v319
  %v1520 = vunpack.c.h.b16 %v319
  %v1521 = vunpack.c.l.b16 %v320
  %v1522 = vunpack.c.h.b16 %v320
  %v1523 = vunpack.c.l.b16 %v321
  %v1524 = vunpack.c.h.b16 %v321
  %v1525 = vunpack.c.l.b16 %v322
  %v1526 = vunpack.c.h.b16 %v322
  %v1527 = vunpack.c.l.b16 %v323
  %v1528 = vunpack.c.h.b16 %v323
  %v1529 = vunpack.c.l.b16 %v324
  %v1530 = vunpack.c.h.b16 %v324
  %v1531 = vunpack.c.l.b16 %v325
  %v1532 = vunpack.c.h.b16 %v325
  %v1533 = vunpack.c.l.b16 %v326
  %v1534 = vunpack.c.h.b16 %v326
  %v1535 = vunpack.c.l.b16 %v327
  %v1536 = vunpack.c.h.b16 %v327
  %v1537 = vunpack.c.l.b16 %v328
  %v1538 = vunpack.c.h.b16 %v328
  %v1539 = vunpack.c.l.b16 %v329
  %v1540 = vunpack.c.h.b16 %v329
  %v1541 = vunpack.c.l.b16 %v330
  %v1542 = vunpack.c.h.b16 %v330
  %v1543 = vunpack.c.l.b16 %v331
  %v1544 = vunpack.c.h.b16 %v331
  %v1545 = vunpack.c.l.b16 %v332
  %v1546 = vunpack.c.h.b16 %v332
  %v1547 = vunpack.c.l.b16 %v333
  %v1548 = vunpack.c.h.b16 %v333
  %v1549 = vunpack.c.l.b16 %v334
  %v1550 = vunpack.c.h.b16 %v334
  %v1551 = vunpack.c.l.b16 %v335
  %v1552 = vunpack.c.h.b16 %v335
  %v1553 = vunpack.c.l.b16 %v336
  %v1554 = vunpack.c.h.b16 %v336
  %v1555 = vunpack.c.l.b16 %v337
  %v1556 = vunpack.c.h.b16 %v337
  %v1557 = vunpack.c.l.b16 %v338
  %v1558 = vunpack.c.h.b16 %v338
  %v1559 = vunpack.c.l.b16 %v339
  %v1560 = vunpack.c.h.b16 %v339
  %v1561 = vunpack.c.l.b16 %v340
  %v1562 = vunpack.c.h.b16 %v340
  %v1563 = vunpack.c.l.b16 %v341
  %v1564 = vunpack.c.h.b16 %v341
  %v1565 = vunpack.c.l.b16 %v342
  %v1566 = vunpack.c.h.b16 %v342
  %v1567 = vunpack.c.l.b16 %v343
  %v1568 = vunpack.c.h.b16 %v343
  %v1569 = vunpack.c.l.b16 %v344
  %v1570 = vunpack.c.h.b16 %v344
  %v1571 = vunpack.c.l.b16 %v345
  %v1572 = vunpack.c.h.b16 %v345
  %v1573 = vunpack.c.l.b16 %v346
  %v1574 = vunpack.c.h.b16 %v346
  %v1575 = vunpack.c.l.b16 %v347
  %v1576 = vunpack.c.h.b16 %v347
  %v1577 = vunpack.c.l.b16 %v348
  %v1578 = vunpack.c.h.b16 %v348
  %v1579 = vunpack.c.l.b16 %v349
  %v1580 = vunpack.c.h.b16 %v349
  %v1581 = vunpack.c.l.b16 %v350
  %v1582 = vunpack.c.h.b16 %v350
  %v1583 = vunpack.c.l.b16 %v351
  %v1584 = vunpack.c.h.b16 %v351
  %v1585 = vunpack.c.l.b16 %v352
  %v1586 = vunpack.c.h.b16 %v352
  %v1587 = vunpack.c.l.b16 %v353
  %v1588 = vunpack.c.h.b16 %v353
  %v1589 = vunpack.c.l.b16 %v354
  %v1590 = vunpack.c.h.b16 %v354
  %v1591 = vunpack.c.l.b16 %v355
  %v1592 = vunpack.c.h.b16 %v355
  %v1593 = vunpack.c.l.b16 %v356
  %v1594 = vunpack.c.h.b16 %v356
  %v1595 = vunpack.c.l.b16 %v357
  %v1596 = vunpack.c.h.b16 %v357
  %v1597 = vunpack.c.l.b16 %v358
  %v1598 = vunpack.c.h.b16 %v358
  %v1599 = vunpack.c.l.b16 %v359
  %v1600 = vunpack.c.h.b16 %v359
  %v1601 = vunpack.c.l.b16 %v360
  %v1602 = vunpack.c.h.b16 %v360
  %v1603 = vunpack.c.l.b16 %v361
  %v1604 = vunpack.c.h.b16 %v361
  %v1605 = vunpack.c.l.b16 %v362
  %v1606 = vunpack.c.h.b16 %v362
  %v1607 = vunpack.c.l.b16 %v363
  %v1608 = vunpack.c.h.b16 %v363
  %v1609 = vunpack.c.l.b16 %v364
  %v1610 = vunpack.c.h.b16 %v364
  %v1611 = vunpack.c.l.b16 %v365
  %v1612 = vunpack.c.h.b16 %v365
  %v1613 = vunpack.c.l.b16 %v366
  %v1614 = vunpack.c.h.b16 %v366
  %v1615 = vunpack.c.l.b16 %v367
  %v1616 = vunpack.c.h.b16 %v367
  %v1617 = vunpack.c.l.b16 %v368
  %v1618 = vunpack.c.h.b16 %v368
  %v1619 = vunpack.c.l.b16 %v369
  %v1620 = vunpack.c.h.b16 %v369
  %v1621 = vunpack.c.l.b16 %v370
  %v1622 = vunpack.c.h.b16 %v370
  %v1623 = vunpack.c.l.b16 %v371
  %v1624 = vunpack.c.h.b16 %v371
  %v1625 = vunpack.c.l.b16 %v372
  %v1626 = vunpack.c.h.b16 %v372
  %v1627 = vunpack.c.l.b16 %v373
  %v1628 = vunpack.c.h.b16 %v373
  %v1629 = vunpack.c.l.b16 %v374
  %v1630 = vunpack.c.h.b16 %v374
  %v1631 = vunpack.c.l.b16 %v375
  %v1632 = vunpack.c.h.b16 %v375
  %v1633 = vunpack.c.l.b16 %v376
  %v1634 = vunpack.c.h.b16 %v376
  %v1635 = vunpack.c.l.b16 %v377
  %v1636 = vunpack.c.h.b16 %v377
  %v1637 = vunpack.c.l.b16 %v378
  %v1638 = vunpack.c.h.b16 %v378
  %v1639 = vunpack.c.l.b16 %v379
  %v1640 = vunpack.c.h.b16 %v379
  %v1641 = vunpack.c.l.b16 %v380
  %v1642 = vunpack.c.h.b16 %v380
  %v1643 = vunpack.c.l.b16 %v381
  %v1644 = vunpack.c.h.b16 %v381
  %v1645 = vunpack.c.l.b16 %v382
  %v1646 = vunpack.c.h.b16 %v382
  %v1647 = vunpack.c.l.b16 %v383
  %v1648 = vunpack.c.h.b16 %v383
  %v1649 = vunpack.c.l.b16 %v384
  %v1650 = vunpack.c.h.b16 %v384
  %v1651 = vunpack.c.l.b16 %v385
  %v1652 = vunpack.c.h.b16 %v385
  %v1653 = vunpack.c.l.b16 %v386
  %v1654 = vunpack.c.h.b16 %v386
  %v1655 = vunpack.c.l.b16 %v387
  %v1656 = vunpack.c.h.b16 %v387
  %v1657 = vunpack.c.l.b16 %v388
  %v1658 = vunpack.c.h.b16 %v388
  %v1659 = vunpack.c.l.b16 %v389
  %v1660 = vunpack.c.h.b16 %v389
  %v1661 = vunpack.c.l.b16 %v390
  %v1662 = vunpack.c.h.b16 %v390
  %v1663 = vunpack.c.l.b16 %v391
  %v1664 = vunpack.c.h.b16 %v391
  %v1665 = vunpack.c.l.b16 %v392
  %v1666 = vunpack.c.h.b16 %v392
  %v1667 = vunpack.c.l.b16 %v393
  %v1668 = vunpack.c.h.b16 %v393
  %v1669 = vunpack.c.l.b16 %v394
  %v1670 = vunpack.c.h.b16 %v394
  %v1671 = vunpack.c.l.b16 %v395
  %v1672 = vunpack.c.h.b16 %v395
  %v1673 = vunpack.c.l.b16 %v396
  %v1674 = vunpack.c.h.b16 %v396
  %v1675 = vunpack.c.l.b16 %v397
  %v1676 = vunpack.c.h.b16 %v397
  %v1677 = vunpack.c.l.b16 %v398
  %v1678 = vunpack.c.h.b16 %v398
  %v1679 = vunpack.c.l.b16 %v399
  %v1680 = vunpack.c.h.b16 %v399
  %v1681 = vunpack.c.l.b16 %v400
  %v1682 = vunpack.c.h.b16 %v400
  %v1683 = vunpack.c.l.b16 %v401
  %v1684 = vunpack.c.h.b16 %v401
  %v1685 = vunpack.c.l.b16 %v402
  %v1686 = vunpack.c.h.b16 %v402
  %v1687 = vunpack.c.l.b16 %v403
  %v1688 = vunpack.c.h.b16 %v403
  %v1689 = vunpack.c.l.b16 %v404
  %v1690 = vunpack.c.h.b16 %v404
  %v1691 = vunpack.c.l.b16 %v405
  %v1692 = vunpack.c.h.b16 %v405
  %v1693 = vunpack.c.l.b16 %v406
  %v1694 = vunpack.c.h.b16 %v406
  %v1695 = vunpack.c.l.b16 %v407
  %v1696 = vunpack.c.h.b16 %v407
  %v1697 = vunpack.c.l.b16 %v408
  %v1698 = vunpack.c.h.b16 %v408
  %v1699 = vunpack.c.l.b16 %v409
  %v1700 = vunpack.c.h.b16 %v409
  %v1701 = vunpack.c.l.b16 %v410
  %v1702 = vunpack.c.h.b16 %v410
  %v1703 = vunpack.c.l.b16 %v411
  %v1704 = vunpack.c.h.b16 %v411
  %v1705 = vunpack.c.l.b16 %v412
  %v1706 = vunpack.c.h.b16 %v412
  %v1707 = vunpack.c.l.b16 %v413
  %v1708 = vunpack.c.h.b16 %v413
  %v1709 = vunpack.c.l.b16 %v414
  %v1710 = vunpack.c.h.b16 %v414
  %v1711 = vunpack.c.l.b16 %v415
  %v1712 = vunpack.c.h.b16 %v415
  %v1713 = vunpack.c.l.b16 %v416
  %v1714 = vunpack.c.h.b16 %v416
  %v1715 = vunpack.c.l.b16 %v417
  %v1716 = vunpack.c.h.b16 %v417
  %v1717 = vunpack.c.l.b16 %v418
  %v1718 = vunpack.c.h.b16 %v418
  %v1719 = vunpack.c.l.b16 %v419
  %v1720 = vunpack.c.h.b16 %v419
  %v1721 = vunpack.c.l.b16 %v420
  %v1722 = vunpack.c.h.b16 %v420
  %v1723 = vunpack.c.l.b16 %v421
  %v1724 = vunpack.c.h.b16 %v421
  %v1725 = vunpack.c.l.b16 %v422
  %v1726 = vunpack.c.h.b16 %v422
  %v1727 = vunpack.c.l.b16 %v423
  %v1728 = vunpack.c.h.b16 %v423
  %v1729 = vunpack.c.l.b16 %v424
  %v1730 = vunpack.c.h.b16 %v424
  %v1731 = vunpack.c.l.b16 %v425
  %v1732 = vunpack.c.h.b16 %v425
  %v1733 = vunpack.c.l.b16 %v426
  %v1734 = vunpack.c.h.b16 %v426
  %v1735 = vunpack.c.l.b16 %v427
  %v1736 = vunpack.c.h.b16 %v427
  %v1737 = vunpack.c.l.b16 %v428
  %v1738 = vunpack.c.h.b16 %v428
  %v1739 = vunpack.c.l.b16 %v429
  %v1740 = vunpack.c.h.b16 %v429
  %v1741 = vunpack.c.l.b16 %v430
  %v1742 = vunpack.c.h.b16 %v430
  %v1743 = vunpack.c.l.b16 %v431
  %v1744 = vunpack.c.h.b16 %v431
  %v1745 = vunpack.c.l.b16 %v432
  %v1746 = vunpack.c.h.b16 %v432
  %v1747 = vunpack.c.l.b16 %v433
  %v1748 = vunpack.c.h.b16 %v433
  %v1749 = vunpack.c.l.b16 %v434
  %v1750 = vunpack.c.h.b16 %v434
  %v1751 = vunpack.c.l.b16 %v435
  %v1752 = vunpack.c.h.b16 %v435
  %v1753 = vunpack.c.l.b16 %v436
  %v1754 = vunpack.c.h.b16 %v436
  %v1755 = vunpack.c.l.b16 %v437
  %v1756 = vunpack.c.h.b16 %v437
  %v1757 = vunpack.c.l.b16 %v438
  %v1758 = vunpack.c.h.b16 %v438
  %v1759 = vunpack.c.l.b16 %v439
  %v1760 = vunpack.c.h.b16 %v439
  %v1761 = vunpack.c.l.b16 %v440
  %v1762 = vunpack.c.h.b16 %v440
  %v1763 = vunpack.c.l.b16 %v441
  %v1764 = vunpack.c.h.b16 %v441
  %v1765 = vunpack.c.l.b16 %v442
  %v1766 = vunpack.c.h.b16 %v442
  %v1767 = vpack.c.b16 %v1007, %v999
  %v1768 = vpack.c.b16 %v1008, %v1000
  %v1769 = vpack.c.b16 %v1009, %v1001
  %v1770 = vpack.c.b16 %v1010, %v1002
  %v1771 = vpack.c.b16 %v1011, %v1003
  %v1772 = vpack.c.b16 %v1012, %v1004
  %v1773 = vpack.c.b16 %v1013, %v1005
  %v1774 = vpack.c.b16 %v1014, %v1006
  %v1775 = vpack.c.b16 %v1023, %v1015
  %v1776 = vpack.c.b16 %v1024, %v1016
  %v1777 = vpack.c.b16 %v1025, %v1017
  %v1778 = vpack.c.b16 %v1026, %v1018
  %v1779 = vpack.c.b16 %v1027, %v1019
  %v1780 = vpack.c.b16 %v1028, %v1020
  %v1781 = vpack.c.b16 %v1029, %v1021
  %v1782 = vpack.c.b16 %v1030, %v1022
  %v1783 = vpack.c.b16 %v1039, %v1031
  %v1784 = vpack.c.b16 %v1040, %v1032
  %v1785 = vpack.c.b16 %v1041, %v1033
  %v1786 = vpack.c.b16 %v1042, %v1034
  %v1787 = vpack.c.b16 %v1043, %v1035
  %v1788 = vpack.c.b16 %v1044, %v1036
  %v1789 = vpack.c.b16 %v1045, %v1037
  %v1790 = vpack.c.b16 %v1046, %v1038
  %v1791 = vpack.c.b16 %v1055, %v1047
  %v1792 = vpack.c.b16 %v1056, %v1048
  %v1793 = vpack.c.b16 %v1057, %v1049
  %v1794 = vpack.c.b16 %v1058, %v1050
  %v1795 = vpack.c.b16 %v1059, %v1051
  %v1796 = vpack.c.b16 %v1060, %v1052
  %v1797 = vpack.c.b16 %v1061, %v1053
  %v1798 = vpack.c.b16 %v1062, %v1054
  %v1799 = vpack.c.b16 %v1071, %v1063
  %v1800 = vpack.c.b16 %v1072, %v1064
  %v1801 = vpack.c.b16 %v1073, %v1065
  %v1802 = vpack.c.b16 %v1074, %v1066
  %v1803 = vpack.c.b16 %v1075, %v1067
  %v1804 = vpack.c.b16 %v1076, %v1068
  %v1805 = vpack.c.b16 %v1077, %v1069
  %v1806 = vpack.c.b16 %v1078, %v1070
  %v1807 = vpack.c.b16 %v1087, %v1079
  %v1808 = vpack.c.b16 %v1088, %v1080
  %v1809 = vpack.c.b16 %v1089, %v1081
  %v1810 = vpack.c.b16 %v1090, %v1082
  %v1811 = vpack.c.b16 %v1091, %v1083
  %v1812 = vpack.c.b16 %v1092, %v1084
  %v1813 = vpack.c.b16 %v1093, %v1085
  %v1814 = vpack.c.b16 %v1094, %v1086
  %v1815 = vpack.c.b16 %v1103, %v1095
  %v1816 = vpack.c.b16 %v1104, %v1096
  %v1817 = vpack.c.b16 %v1105, %v1097
  %v1818 = vpack.c.b16 %v1106, %v1098
  %v1819 = vpack.c.b16 %v1107, %v1099
  %v1820 = vpack.c.b16 %v1108, %v1100
  %v1821 = vpack.c.b16 %v1109, %v1101
  %v1822 = vpack.c.b16 %v1110, %v1102
  %v1823 = vpack.c.b16 %v1119, %v1111
  %v1824 = vpack.c.b16 %v1120, %v1112
  %v1825 = vpack.c.b16 %v1121, %v1113
  %v1826 = vpack.c.b16 %v1122, %v1114
  %v1827 = vpack.c.b16 %v1123, %v1115
  %v1828 = vpack.c.b16 %v1124, %v1116
  %v1829 = vpack.c.b16 %v1125, %v1117
  %v1830 = vpack.c.b16 %v1126, %v1118
  %v1831 = vpack.c.b16 %v1135, %v1127
  %v1832 = vpack.c.b16 %v1136, %v1128
  %v1833 = vpack.c.b16 %v1137, %v1129
  %v1834 = vpack.c.b16 %v1138, %v1130
  %v1835 = vpack.c.b16 %v1139, %v1131
  %v1836 = vpack.c.b16 %v1140, %v1132
  %v1837 = vpack.c.b16 %v1141, %v1133
  %v1838 = vpack.c.b16 %v1142, %v1134
  %v1839 = vpack.c.b16 %v1151, %v1143
  %v1840 = vpack.c.b16 %v1152, %v1144
  %v1841 = vpack.c.b16 %v1153, %v1145
  %v1842 = vpack.c.b16 %v1154, %v1146
  %v1843 = vpack.c.b16 %v1155, %v1147
  %v1844 = vpack.c.b16 %v1156, %v1148
  %v1845 = vpack.c.b16 %v1157, %v1149
  %v1846 = vpack.c.b16 %v1158, %v1150
  %v1847 = vpack.c.b16 %v1167, %v1159
  %v1848 = vpack.c.b16 %v1168, %v1160
  %v1849 = vpack.c.b16 %v1169, %v1161
  %v1850 = vpack.c.b16 %v1170, %v1162
  %v1851 = vpack.c.b16 %v1171, %v1163
  %v1852 = vpack.c.b16 %v1172, %v1164
  %v1853 = vpack.c.b16 %v1173, %v1165
  %v1854 = vpack.c.b16 %v1174, %v1166
  %v1855 = vpack.c.b16 %v1183, %v1175
  %v1856 = vpack.c.b16 %v1184, %v1176
  %v1857 = vpack.c.b16 %v1185, %v1177
  %v1858 = vpack.c.b16 %v1186, %v1178
  %v1859 = vpack.c.b16 %v1187, %v1179
  %v1860 = vpack.c.b16 %v1188, %v1180
  %v1861 = vpack.c.b16 %v1189, %v1181
  %v1862 = vpack.c.b16 %v1190, %v1182
  %v1863 = vpack.c.b16 %v1199, %v1191
  %v1864 = vpack.c.b16 %v1200, %v1192
  %v1865 = vpack.c.b16 %v1201, %v1193
  %v1866 = vpack.c.b16 %v1202, %v1194
  %v1867 = vpack.c.b16 %v1203, %v1195
  %v1868 = vpack.c.b16 %v1204, %v1196
  %v1869 = vpack.c.b16 %v1205, %v1197
  %v1870 = vpack.c.b16 %v1206, %v1198
  %v1871 = vpack.c.b16 %v1215, %v1207
  %v1872 = vpack.c.b16 %v1216, %v1208
  %v1873 = vpack.c.b16 %v1217, %v1209
  %v1874 = vpack.c.b16 %v1218, %v1210
  %v1875 = vpack.c.b16 %v1219, %v1211
  %v1876 = vpack.c.b16 %v1220, %v1212
  %v1877 = vpack.c.b16 %v1221, %v1213
  %v1878 = vpack.c.b16 %v1222, %v1214
  %v1879 = vpack.c.b16 %v1231, %v1223
  %v1880 = vpack.c.b16 %v1232, %v1224
  %v1881 = vpack.c.b16 %v1233, %v1225
  %v1882 = vpack.c.b16 %v1234, %v1226
  %v1883 = vpack.c.b16 %v1235, %v1227
  %v1884 = vpack.c.b16 %v1236, %v1228
  %v1885 = vpack.c.b16 %v1237, %v1229
  %v1886 = vpack.c.b16 %v1238, %v1230
  %v1887 = vpack.c.b16 %v1247, %v1239
  %v1888 = vpack.c.b16 %v1248, %v1240
  %v1889 = vpack.c.b16 %v1249, %v1241
  %v1890 = vpack.c.b16 %v1250, %v1242
  %v1891 = vpack.c.b16 %v1251, %v1243
  %v1892 = vpack.c.b16 %v1252, %v1244
  %v1893 = vpack.c.b16 %v1253, %v1245
  %v1894 = vpack.c.b16 %v1254, %v1246
  %v1895 = vpack.c.b16 %v1263, %v1255
  %v1896 = vpack.c.b16 %v1264, %v1256
  %v1897 = vpack.c.b16 %v1265, %v1257
  %v1898 = vpack.c.b16 %v1266, %v1258
  %v1899 = vpack.c.b16 %v1267, %v1259
  %v1900 = vpack.c.b16 %v1268, %v1260
  %v1901 = vpack.c.b16 %v1269, %v1261
  %v1902 = vpack.c.b16 %v1270, %v1262
  %v1903 = vpack.c.b16 %v1279, %v1271
  %v1904 = vpack.c.b16 %v1280, %v1272
  %v1905 = vpack.c.b16 %v1281, %v1273
  %v1906 = vpack.c.b16 %v1282, %v1274
  %v1907 = vpack.c.b16 %v1283, %v1275
  %v1908 = vpack.c.b16 %v1284, %v1276
  %v1909 = vpack.c.b16 %v1285, %v1277
  %v1910 = vpack.c.b16 %v1286, %v1278
  %v1911 = vpack.c.b16 %v1295, %v1287
  %v1912 = vpack.c.b16 %v1296, %v1288
  %v1913 = vpack.c.b16 %v1297, %v1289
  %v1914 = vpack.c.b16 %v1298, %v1290
  %v1915 = vpack.c.b16 %v1299, %v1291
  %v1916 = vpack.c.b16 %v1300, %v1292
  %v1917 = vpack.c.b16 %v1301, %v1293
  %v1918 = vpack.c.b16 %v1302, %v1294
  %v1919 = vpack.c.b16 %v1311, %v1303
  %v1920 = vpack.c.b16 %v1312, %v1304
  %v1921 = vpack.c.b16 %v1313, %v1305
  %v1922 = vpack.c.b16 %v1314, %v1306
  %v1923 = vpack.c.b16 %v1315, %v1307
  %v1924 = vpack.c.b16 %v1316, %v1308
  %v1925 = vpack.c.b16 %v1317, %v1309
  %v1926 = vpack.c.b16 %v1318, %v1310
  %v1927 = vpack.c.b16 %v1327, %v1319
  %v1928 = vpack.c.b16 %v1328, %v1320
  %v1929 = vpack.c.b16 %v1329, %v1321
  %v1930 = vpack.c.b16 %v1330, %v1322
  %v1931 = vpack.c.b16 %v1331, %v1323
  %v1932 = vpack.c.b16 %v1332, %v1324
  %v1933 = vpack.c.b16 %v1333, %v1325
  %v1934 = vpack.c.b16 %v1334, %v1326
  %v1935 = vpack.c.b16 %v1343, %v1335
  %v1936 = vpack.c.b16 %v1344, %v1336
  %v1937 = vpack.c.b16 %v1345, %v1337
  %v1938 = vpack.c.b16 %v1346, %v1338
  %v1939 = vpack.c.b16 %v1347, %v1339
  %v1940 = vpack.c.b16 %v1348, %v1340
  %v1941 = vpack.c.b16 %v1349, %v1341
  %v1942 = vpack.c.b16 %v1350, %v1342
  %v1943 = vpack.c.b16 %v1359, %v1351
  %v1944 = vpack.c.b16 %v1360, %v1352
  %v1945 = vpack.c.b16 %v1361, %v1353
  %v1946 = vpack.c.b16 %v1362, %v1354
  %v1947 = vpack.c.b16 %v1363, %v1355
  %v1948 = vpack.c.b16 %v1364, %v1356
  %v1949 = vpack.c.b16 %v1365, %v1357
  %v1950 = vpack.c.b16 %v1366, %v1358
  %v1951 = vpack.c.b16 %v1375, %v1367
  %v1952 = vpack.c.b16 %v1376, %v1368
  %v1953 = vpack.c.b16 %v1377, %v1369
  %v1954 = vpack.c.b16 %v1378, %v1370
  %v1955 = vpack.c.b16 %v1379, %v1371
  %v1956 = vpack.c.b16 %v1380, %v1372
  %v1957 = vpack.c.b16 %v1381, %v1373
  %v1958 = vpack.c.b16 %v1382, %v1374
  %v1959 = vpack.c.b16 %v1391, %v1383
  %v1960 = vpack.c.b16 %v1392, %v1384
  %v1961 = vpack.c.b16 %v1393, %v1385
  %v1962 = vpack.c.b16 %v1394, %v1386
  %v1963 = vpack.c.b16 %v1395, %v1387
  %v1964 = vpack.c.b16 %v1396, %v1388
  %v1965 = vpack.c.b16 %v1397, %v1389
  %v1966 = vpack.c.b16 %v1398, %v1390
  %v1967 = vpack.c.b16 %v1407, %v1399
  %v1968 = vpack.c.b16 %v1408, %v1400
  %v1969 = vpack.c.b16 %v1409, %v1401
  %v1970 = vpack.c.b16 %v1410, %v1402
  %v1971 = vpack.c.b16 %v1411, %v1403
  %v1972 = vpack.c.b16 %v1412, %v1404
  %v1973 = vpack.c.b16 %v1413, %v1405
  %v1974 = vpack.c.b16 %v1414, %v1406
  %v1975 = vpack.c.b16 %v1423, %v1415
  %v1976 = vpack.c.b16 %v1424, %v1416
  %v1977 = vpack.c.b16 %v1425, %v1417
  %v1978 = vpack.c.b16 %v1426, %v1418
  %v1979 = vpack.c.b16 %v1427, %v1419
  %v1980 = vpack.c.b16 %v1428, %v1420
  %v1981 = vpack.c.b16 %v1429, %v1421
  %v1982 = vpack.c.b16 %v1430, %v1422
  %v1983 = vpack.c.b16 %v1439, %v1431
  %v1984 = vpack.c.b16 %v1440, %v1432
  %v1985 = vpack.c.b16 %v1441, %v1433
  %v1986 = vpack.c.b16 %v1442, %v1434
  %v1987 = vpack.c.b16 %v1443, %v1435
  %v1988 = vpack.c.b16 %v1444, %v1436
  %v1989 = vpack.c.b16 %v1445, %v1437
  %v1990 = vpack.c.b16 %v1446, %v1438
  %v1991 = vpack.c.b16 %v1455, %v1447
  %v1992 = vpack.c.b16 %v1456, %v1448
  %v1993 = vpack.c.b16 %v1457, %v1449
  %v1994 = vpack.c.b16 %v1458, %v1450
  %v1995 = vpack.c.b16 %v1459, %v1451
  %v1996 = vpack.c.b16 %v1460, %v1452
  %v1997 = vpack.c.b16 %v1461, %v1453
  %v1998 = vpack.c.b16 %v1462, %v1454
  %v1999 = vpack.c.b16 %v1471, %v1463
  %v2000 = vpack.c.b16 %v1472, %v1464
  %v2001 = vpack.c.b16 %v1473, %v1465
  %v2002 = vpack.c.b16 %v1474, %v1466
  %v2003 = vpack.c.b16 %v1475, %v1467
  %v2004 = vpack.c.b16 %v1476, %v1468
  %v2005 = vpack.c.b16 %v1477, %v1469
  %v2006 = vpack.c.b16 %v1478, %v1470
  %v2007 = vpack.c.b16 %v1487, %v1479
  %v2008 = vpack.c.b16 %v1488, %v1480
  %v2009 = vpack.c.b16 %v1489, %v1481
  %v2010 = vpack.c.b16 %v1490, %v1482
  %v2011 = vpack.c.b16 %v1491, %v1483
  %v2012 = vpack.c.b16 %v1492, %v1484
  %v2013 = vpack.c.b16 %v1493, %v1485
  %v2014 = vpack.c.b16 %v1494, %v1486
  %v2015 = vpack.c.b16 %v1503, %v1495
  %v2016 = vpack.c.b16 %v1504, %v1496
  %v2017 = vpack.c.b16 %v1505, %v1497
  %v2018 = vpack.c.b16 %v1506, %v1498
  %v2019 = vpack.c.b16 %v1507, %v1499
  %v2020 = vpack.c.b16 %v1508, %v1500
  %v2021 = vpack.c.b16 %v1509, %v1501
  %v2022 = vpack.c.b16 %v1510, %v1502
  %v2023 = vpack.c.b16 %v1519, %v1511
  %v2024 = vpack.c.b16 %v1520, %v1512
  %v2025 = vpack.c.b16 %v1521, %v1513
  %v2026 = vpack.c.b16 %v1522, %v1514
  %v2027 = vpack.c.b16 %v1523, %v1515
  %v2028 = vpack.c.b16 %v1524, %v1516
  %v2029 = vpack.c.b16 %v1525, %v1517
  %v2030 = vpack.c.b16 %v1526, %v1518
  %v2031 = vpack.c.b16 %v1535, %v1527
  %v2032 = vpack.c.b16 %v1536, %v1528
  %v2033 = vpack.c.b16 %v1537, %v1529
  %v2034 = vpack.c.b16 %v1538, %v1530
  %v2035 = vpack.c.b16 %v1539, %v1531
  %v2036 = vpack.c.b16 %v1540, %v1532
  %v2037 = vpack.c.b16 %v1541, %v1533
  %v2038 = vpack.c.b16 %v1542, %v1534
  %v2039 = vpack.c.b16 %v1551, %v1543
  %v2040 = vpack.c.b16 %v1552, %v1544
  %v2041 = vpack.c.b16 %v1553, %v1545
  %v2042 = vpack.c.b16 %v1554, %v1546
  %v2043 = vpack.c.b16 %v1555, %v1547
  %v2044 = vpack.c.b16 %v1556, %v1548
  %v2045 = vpack.c.b16 %v1557, %v1549
  %v2046 = vpack.c.b16 %v1558, %v1550
  %v2047 = vpack.c.b16 %v1567, %v1559
  %v2048 = vpack.c.b16 %v1568, %v1560
  %v2049 = vpack.c.b16 %v1569, %v1561
  %v2050 = vpack.c.b16 %v1570, %v1562
  %v2051 = vpack.c.b16 %v1571, %v1563
  %v2052 = vpack.c.b16 %v1572, %v1564
  %v2053 = vpack.c.b16 %v1573, %v1565
  %v2054 = vpack.c.b16 %v1574, %v1566
  %v2055 = vpack.c.b16 %v1583, %v1575
  %v2056 = vpack.c.b16 %v1584, %v1576
  %v2057 = vpack.c.b16 %v1585, %v1577
  %v2058 = vpack.c.b16 %v1586, %v1578
  %v2059 = vpack.c.b16 %v1587, %v1579
  %v2060 = vpack.c.b16 %v1588, %v1580
  %v2061 = vpack.c.b16 %v1589, %v1581
  %v2062 = vpack.c.b16 %v1590, %v1582
  %v2063 = vpack.c.b16 %v1599, %v1591
  %v2064 = vpack.c.b16 %v1600, %v1592
  %v2065 = vpack.c.b16 %v1601, %v1593
  %v2066 = vpack.c.b16 %v1602, %v1594
  %v2067 = vpack.c.b16 %v1603, %v1595
  %v2068 = vpack.c.b16 %v1604, %v1596
  %v2069 = vpack.c.b16 %v1605, %v1597
  %v2070 = vpack.c.b16 %v1606, %v1598
  %v2071 = vpack.c.b16 %v1615, %v1607
  %v2072 = vpack.c.b16 %v1616, %v1608
  %v2073 = vpack.c.b16 %v1617, %v1609
  %v2074 = vpack.c.b16 %v1618, %v1610
  %v2075 = vpack.c.b16 %v1619, %v1611
  %v2076 = vpack.c.b16 %v1620, %v1612
  %v2077 = vpack.c.b16 %v1621, %v1613
  %v2078 = vpack.c.b16 %v1622, %v1614
  %v2079 = vpack.c.b16 %v1631, %v1623
  %v2080 = vpack.c.b16 %v1632, %v1624
  %v2081 = vpack.c.b16 %v1633, %v1625
  %v2082 = vpack.c.b16 %v1634, %v1626
  %v2083 = vpack.c.b16 %v1635, %v1627
  %v2084 = vpack.c.b16 %v1636, %v1628
  %v2085 = vpack.c.b16 %v1637, %v1629
  %v2086 = vpack.c.b16 %v1638, %v1630
  %v2087 = vpack.c.b16 %v1647, %v1639
  %v2088 = vpack.c.b16 %v1648, %v1640
  %v2089 = vpack.c.b16 %v1649, %v1641
  %v2090 = vpack.c.b16 %v1650, %v1642
  %v2091 = vpack.c.b16 %v1651, %v1643
  %v2092 = vpack.c.b16 %v1652, %v1644
  %v2093 = vpack.c.b16 %v1653, %v1645
  %v2094 = vpack.c.b16 %v1654, %v1646
  %v2095 = vpack.c.b16 %v1663, %v1655
  %v2096 = vpack.c.b16 %v1664, %v1656
  %v2097 = vpack.c.b16 %v1665, %v1657
  %v2098 = vpack.c.b16 %v1666, %v1658
  %v2099 = vpack.c.b16 %v1667, %v1659
  %v2100 = vpack.c.b16 %v1668, %v1660
  %v2101 = vpack.c.b16 %v1669, %v1661
  %v2102 = vpack.c.b16 %v1670, %v1662
  %v2103 = vpack.c.b16 %v1679, %v1671
  %v2104 = vpack.c.b16 %v1680, %v1672
  %v2105 = vpack.c.b16 %v1681, %v1673
  %v2106 = vpack.c.b16 %v1682, %v1674
  %v2107 = vpack.c.b16 %v1683, %v1675
  %v2108 = vpack.c.b16 %v1684, %v1676
  %v2109 = vpack.c.b16 %v1685, %v1677
  %v2110 = vpack.c.b16 %v1686, %v1678
  %v2111 = vpack.c.b16 %v1695, %v1687
  %v2112 = vpack.c.b16 %v1696, %v1688
  %v2113 = vpack.c.b16 %v1697, %v1689
  %v2114 = vpack.c.b16 %v1698, %v1690
  %v2115 = vpack.c.b16 %v1699, %v1691
  %v2116 = vpack.c.b16 %v1700, %v1692
  %v2117 = vpack.c.b16 %v1701, %v1693
  %v2118 = vpack.c.b16 %v1702, %v1694
  %v2119 = vpack.c.b16 %v1711, %v1703
  %v2120 = vpack.c.b16 %v1712, %v1704
  %v2121 = vpack.c.b16 %v1713, %v1705
  %v2122 = vpack.c.b16 %v1714, %v1706
  %v2123 = vpack.c.b16 %v1715, %v1707
  %v2124 = vpack.c.b16 %v1716, %v1708
  %v2125 = vpack.c.b16 %v1717, %v1709
  %v2126 = vpack.c.b16 %v1718, %v1710
  %v2127 = vpack.c.b16 %v1727, %v1719
  %v2128 = vpack.c.b16 %v1728, %v1720
  %v2129 = vpack.c.b16 %v1729, %v1721
  %v2130 = vpack.c.b16 %v1730, %v1722
  %v2131 = vpack.c.b16 %v1731, %v1723
  %v2132 = vpack.c.b16 %v1732, %v1724
  %v2133 = vpack.c.b16 %v1733, %v1725
  %v2134 = vpack.c.b16 %v1734, %v1726
  %v2135 = vpack.c.b16 %v1743, %v1735
  %v2136 = vpack.c.b16 %v1744, %v1736
  %v2137 = vpack.c.b16 %v1745, %v1737
  %v2138 = vpack.c.b16 %v1746, %v1738
  %v2139 = vpack.c.b16 %v1747, %v1739
  %v2140 = vpack.c.b16 %v1748, %v1740
  %v2141 = vpack.c.b16 %v1749, %v1741
  %v2142 = vpack.c.b16 %v1750, %v1742
  %v2143 = vpack.c.b16 %v1759, %v1751
  %v2144 = vpack.c.b16 %v1760, %v1752
  %v2145 = vpack.c.b16 %v1761, %v1753
  %v2146 = vpack.c.b16 %v1762, %v1754
  %v2147 = vpack.c.b16 %v1763, %v1755
  %v2148 = vpack.c.b16 %v1764, %v1756
  %v2149 = vpack.c.b16 %v1765, %v1757
  %v2150 = vpack.c.b16 %v1766, %v1758
  %2535 = vmatpush.bf16.msra.mxu0 %v1823
  %2536 = vmatpush.bf16.msra.mxu0 %v1815
  %2537 = vmatpush.bf16.msra.mxu0 %v1807
  %2538 = vmatpush.bf16.msra.mxu0 %v1799
  %2539 = vmatpush.bf16.msra.mxu0 %v1791
  %2540 = vmatpush.bf16.msra.mxu0 %v1783
  %2541 = vmatpush.bf16.msra.mxu0 %v1775
  %2542 = vmatpush.bf16.msra.mxu0 %v1767
  %2543 = vmatmul.bf16.gmra.mxu0 %v53
  %v2544 = vpop.f32.mrf.mxu0
  %v2545 = vadd.f32 %v513, %v2544
  %v2546 = vpop.f32.mrf.mxu0
  %v2547 = vadd.f32 %v515, %v2546
  %2548 = vdwg.mxu0
  %2549 = vmatpush.bf16.msra.mxu0 %v1887
  %2550 = vmatpush.bf16.msra.mxu0 %v1879
  %2551 = vmatpush.bf16.msra.mxu0 %v1871
  %2552 = vmatpush.bf16.msra.mxu0 %v1863
  %2553 = vmatpush.bf16.msra.mxu0 %v1855
  %2554 = vmatpush.bf16.msra.mxu0 %v1847
  %2555 = vmatpush.bf16.msra.mxu0 %v1839
  %2556 = vmatpush.bf16.msra.mxu0 %v1831
  %2557 = vmatmul.bf16.gmra.mxu0 %v54
  %v2558 = vpop.f32.mrf.mxu0
  %v2559 = vadd.f32 %v2545, %v2558
  %v2560 = vpop.f32.mrf.mxu0
  %v2561 = vadd.f32 %v2547, %v2560
  %2562 = vdwg.mxu0
  %2563 = vmatpush.bf16.msra.mxu0 %v1951
  %2564 = vmatpush.bf16.msra.mxu0 %v1943
  %2565 = vmatpush.bf16.msra.mxu0 %v1935
  %2566 = vmatpush.bf16.msra.mxu0 %v1927
  %2567 = vmatpush.bf16.msra.mxu0 %v1919
  %2568 = vmatpush.bf16.msra.mxu0 %v1911
  %2569 = vmatpush.bf16.msra.mxu0 %v1903
  %2570 = vmatpush.bf16.msra.mxu0 %v1895
  %2571 = vmatmul.bf16.gmra.mxu0 %v55
  %v2572 = vpop.f32.mrf.mxu0
  %v2573 = vadd.f32 %v2559, %v2572
  %v2574 = vpop.f32.mrf.mxu0
  %v2575 = vadd.f32 %v2561, %v2574
  %2576 = vdwg.mxu0
  %2577 = vmatpush.bf16.msra.mxu0 %v2015
  %2578 = vmatpush.bf16.msra.mxu0 %v2007
  %2579 = vmatpush.bf16.msra.mxu0 %v1999
  %2580 = vmatpush.bf16.msra.mxu0 %v1991
  %2581 = vmatpush.bf16.msra.mxu0 %v1983
  %2582 = vmatpush.bf16.msra.mxu0 %v1975
  %2583 = vmatpush.bf16.msra.mxu0 %v1967
  %2584 = vmatpush.bf16.msra.mxu0 %v1959
  %2585 = vmatmul.bf16.gmra.mxu0 %v56
  %v2586 = vpop.f32.mrf.mxu0
  %v2587 = vadd.f32 %v2573, %v2586
  %v2588 = vpop.f32.mrf.mxu0
  %v2589 = vadd.f32 %v2575, %v2588
  %2590 = vdwg.mxu0
  %2591 = vmatpush.bf16.msra.mxu0 %v2079
  %2592 = vmatpush.bf16.msra.mxu0 %v2071
  %2593 = vmatpush.bf16.msra.mxu0 %v2063
  %2594 = vmatpush.bf16.msra.mxu0 %v2055
  %2595 = vmatpush.bf16.msra.mxu0 %v2047
  %2596 = vmatpush.bf16.msra.mxu0 %v2039
  %2597 = vmatpush.bf16.msra.mxu0 %v2031
  %2598 = vmatpush.bf16.msra.mxu0 %v2023
  %2599 = vmatmul.bf16.gmra.mxu0 %v57
  %v2600 = vpop.f32.mrf.mxu0
  %v2601 = vadd.f32 %v2587, %v2600
  %v2602 = vpop.f32.mrf.mxu0
  %v2603 = vadd.f32 %v2589, %v2602
  %2604 = vdwg.mxu0
  %2605 = vmatpush.bf16.msra.mxu0 %v2143
  %2606 = vmatpush.bf16.msra.mxu0 %v2135
  %2607 = vmatpush.bf16.msra.mxu0 %v2127
  %2608 = vmatpush.bf16.msra.mxu0 %v2119
  %2609 = vmatpush.bf16.msra.mxu0 %v2111
  %2610 = vmatpush.bf16.msra.mxu0 %v2103
  %2611 = vmatpush.bf16.msra.mxu0 %v2095
  %2612 = vmatpush.bf16.msra.mxu0 %v2087
  %2613 = vmatmul.bf16.gmra.mxu0 %v58
  %v2614 = vpop.f32.mrf.mxu0
  %v2615 = vadd.f32 %v2601, %v2614
  %v2616 = vpop.f32.mrf.mxu0
  %v2617 = vadd.f32 %v2603, %v2616
  %2618 = vdwg.mxu0
  %2619 = vmatpush.bf16.msra.mxu0 %v1824
  %2620 = vmatpush.bf16.msra.mxu0 %v1816
  %2621 = vmatpush.bf16.msra.mxu0 %v1808
  %2622 = vmatpush.bf16.msra.mxu0 %v1800
  %2623 = vmatpush.bf16.msra.mxu0 %v1792
  %2624 = vmatpush.bf16.msra.mxu0 %v1784
  %2625 = vmatpush.bf16.msra.mxu0 %v1776
  %2626 = vmatpush.bf16.msra.mxu0 %v1768
  %2627 = vmatmul.bf16.gmra.mxu0 %v53
  %v2628 = vpop.f32.mrf.mxu0
  %v2629 = vadd.f32 %v527, %v2628
  %v2630 = vpop.f32.mrf.mxu0
  %v2631 = vadd.f32 %v529, %v2630
  %2632 = vdwg.mxu0
  %2633 = vmatpush.bf16.msra.mxu0 %v1888
  %2634 = vmatpush.bf16.msra.mxu0 %v1880
  %2635 = vmatpush.bf16.msra.mxu0 %v1872
  %2636 = vmatpush.bf16.msra.mxu0 %v1864
  %2637 = vmatpush.bf16.msra.mxu0 %v1856
  %2638 = vmatpush.bf16.msra.mxu0 %v1848
  %2639 = vmatpush.bf16.msra.mxu0 %v1840
  %2640 = vmatpush.bf16.msra.mxu0 %v1832
  %2641 = vmatmul.bf16.gmra.mxu0 %v54
  %v2642 = vpop.f32.mrf.mxu0
  %v2643 = vadd.f32 %v2629, %v2642
  %v2644 = vpop.f32.mrf.mxu0
  %v2645 = vadd.f32 %v2631, %v2644
  %2646 = vdwg.mxu0
  %2647 = vmatpush.bf16.msra.mxu0 %v1952
  %2648 = vmatpush.bf16.msra.mxu0 %v1944
  %2649 = vmatpush.bf16.msra.mxu0 %v1936
  %2650 = vmatpush.bf16.msra.mxu0 %v1928
  %2651 = vmatpush.bf16.msra.mxu0 %v1920
  %2652 = vmatpush.bf16.msra.mxu0 %v1912
  %2653 = vmatpush.bf16.msra.mxu0 %v1904
  %2654 = vmatpush.bf16.msra.mxu0 %v1896
  %2655 = vmatmul.bf16.gmra.mxu0 %v55
  %v2656 = vpop.f32.mrf.mxu0
  %v2657 = vadd.f32 %v2643, %v2656
  %v2658 = vpop.f32.mrf.mxu0
  %v2659 = vadd.f32 %v2645, %v2658
  %2660 = vdwg.mxu0
  %2661 = vmatpush.bf16.msra.mxu0 %v2016
  %2662 = vmatpush.bf16.msra.mxu0 %v2008
  %2663 = vmatpush.bf16.msra.mxu0 %v2000
  %2664 = vmatpush.bf16.msra.mxu0 %v1992
  %2665 = vmatpush.bf16.msra.mxu0 %v1984
  %2666 = vmatpush.bf16.msra.mxu0 %v1976
  %2667 = vmatpush.bf16.msra.mxu0 %v1968
  %2668 = vmatpush.bf16.msra.mxu0 %v1960
  %2669 = vmatmul.bf16.gmra.mxu0 %v56
  %v2670 = vpop.f32.mrf.mxu0
  %v2671 = vadd.f32 %v2657, %v2670
  %v2672 = vpop.f32.mrf.mxu0
  %v2673 = vadd.f32 %v2659, %v2672
  %2674 = vdwg.mxu0
  %2675 = vmatpush.bf16.msra.mxu0 %v2080
  %2676 = vmatpush.bf16.msra.mxu0 %v2072
  %2677 = vmatpush.bf16.msra.mxu0 %v2064
  %2678 = vmatpush.bf16.msra.mxu0 %v2056
  %2679 = vmatpush.bf16.msra.mxu0 %v2048
  %2680 = vmatpush.bf16.msra.mxu0 %v2040
  %2681 = vmatpush.bf16.msra.mxu0 %v2032
  %2682 = vmatpush.bf16.msra.mxu0 %v2024
  %2683 = vmatmul.bf16.gmra.mxu0 %v57
  %v2684 = vpop.f32.mrf.mxu0
  %v2685 = vadd.f32 %v2671, %v2684
  %v2686 = vpop.f32.mrf.mxu0
  %v2687 = vadd.f32 %v2673, %v2686
  %2688 = vdwg.mxu0
  %2689 = vmatpush.bf16.msra.mxu0 %v2144
  %2690 = vmatpush.bf16.msra.mxu0 %v2136
  %2691 = vmatpush.bf16.msra.mxu0 %v2128
  %2692 = vmatpush.bf16.msra.mxu0 %v2120
  %2693 = vmatpush.bf16.msra.mxu0 %v2112
  %2694 = vmatpush.bf16.msra.mxu0 %v2104
  %2695 = vmatpush.bf16.msra.mxu0 %v2096
  %2696 = vmatpush.bf16.msra.mxu0 %v2088
  %2697 = vmatmul.bf16.gmra.mxu0 %v58
  %v2698 = vpop.f32.mrf.mxu0
  %v2699 = vadd.f32 %v2685, %v2698
  %v2700 = vpop.f32.mrf.mxu0
  %v2701 = vadd.f32 %v2687, %v2700
  %2702 = vdwg.mxu0
  %2703 = vmatpush.bf16.msra.mxu0 %v1825
  %2704 = vmatpush.bf16.msra.mxu0 %v1817
  %2705 = vmatpush.bf16.msra.mxu0 %v1809
  %2706 = vmatpush.bf16.msra.mxu0 %v1801
  %2707 = vmatpush.bf16.msra.mxu0 %v1793
  %2708 = vmatpush.bf16.msra.mxu0 %v1785
  %2709 = vmatpush.bf16.msra.mxu0 %v1777
  %2710 = vmatpush.bf16.msra.mxu0 %v1769
  %2711 = vmatmul.bf16.gmra.mxu0 %v53
  %v2712 = vpop.f32.mrf.mxu0
  %v2713 = vadd.f32 %v541, %v2712
  %v2714 = vpop.f32.mrf.mxu0
  %v2715 = vadd.f32 %v543, %v2714
  %2716 = vdwg.mxu0
  %2717 = vmatpush.bf16.msra.mxu0 %v1889
  %2718 = vmatpush.bf16.msra.mxu0 %v1881
  %2719 = vmatpush.bf16.msra.mxu0 %v1873
  %2720 = vmatpush.bf16.msra.mxu0 %v1865
  %2721 = vmatpush.bf16.msra.mxu0 %v1857
  %2722 = vmatpush.bf16.msra.mxu0 %v1849
  %2723 = vmatpush.bf16.msra.mxu0 %v1841
  %2724 = vmatpush.bf16.msra.mxu0 %v1833
  %2725 = vmatmul.bf16.gmra.mxu0 %v54
  %v2726 = vpop.f32.mrf.mxu0
  %v2727 = vadd.f32 %v2713, %v2726
  %v2728 = vpop.f32.mrf.mxu0
  %v2729 = vadd.f32 %v2715, %v2728
  %2730 = vdwg.mxu0
  %2731 = vmatpush.bf16.msra.mxu0 %v1953
  %2732 = vmatpush.bf16.msra.mxu0 %v1945
  %2733 = vmatpush.bf16.msra.mxu0 %v1937
  %2734 = vmatpush.bf16.msra.mxu0 %v1929
  %2735 = vmatpush.bf16.msra.mxu0 %v1921
  %2736 = vmatpush.bf16.msra.mxu0 %v1913
  %2737 = vmatpush.bf16.msra.mxu0 %v1905
  %2738 = vmatpush.bf16.msra.mxu0 %v1897
  %2739 = vmatmul.bf16.gmra.mxu0 %v55
  %v2740 = vpop.f32.mrf.mxu0
  %v2741 = vadd.f32 %v2727, %v2740
  %v2742 = vpop.f32.mrf.mxu0
  %v2743 = vadd.f32 %v2729, %v2742
  %2744 = vdwg.mxu0
  %2745 = vmatpush.bf16.msra.mxu0 %v2017
  %2746 = vmatpush.bf16.msra.mxu0 %v2009
  %2747 = vmatpush.bf16.msra.mxu0 %v2001
  %2748 = vmatpush.bf16.msra.mxu0 %v1993
  %2749 = vmatpush.bf16.msra.mxu0 %v1985
  %2750 = vmatpush.bf16.msra.mxu0 %v1977
  %2751 = vmatpush.bf16.msra.mxu0 %v1969
  %2752 = vmatpush.bf16.msra.mxu0 %v1961
  %2753 = vmatmul.bf16.gmra.mxu0 %v56
  %v2754 = vpop.f32.mrf.mxu0
  %v2755 = vadd.f32 %v2741, %v2754
  %v2756 = vpop.f32.mrf.mxu0
  %v2757 = vadd.f32 %v2743, %v2756
  %2758 = vdwg.mxu0
  %2759 = vmatpush.bf16.msra.mxu0 %v2081
  %2760 = vmatpush.bf16.msra.mxu0 %v2073
  %2761 = vmatpush.bf16.msra.mxu0 %v2065
  %2762 = vmatpush.bf16.msra.mxu0 %v2057
  %2763 = vmatpush.bf16.msra.mxu0 %v2049
  %2764 = vmatpush.bf16.msra.mxu0 %v2041
  %2765 = vmatpush.bf16.msra.mxu0 %v2033
  %2766 = vmatpush.bf16.msra.mxu0 %v2025
  %2767 = vmatmul.bf16.gmra.mxu0 %v57
  %v2768 = vpop.f32.mrf.mxu0
  %v2769 = vadd.f32 %v2755, %v2768
  %v2770 = vpop.f32.mrf.mxu0
  %v2771 = vadd.f32 %v2757, %v2770
  %2772 = vdwg.mxu0
  %2773 = vmatpush.bf16.msra.mxu0 %v2145
  %2774 = vmatpush.bf16.msra.mxu0 %v2137
  %2775 = vmatpush.bf16.msra.mxu0 %v2129
  %2776 = vmatpush.bf16.msra.mxu0 %v2121
  %2777 = vmatpush.bf16.msra.mxu0 %v2113
  %2778 = vmatpush.bf16.msra.mxu0 %v2105
  %2779 = vmatpush.bf16.msra.mxu0 %v2097
  %2780 = vmatpush.bf16.msra.mxu0 %v2089
  %2781 = vmatmul.bf16.gmra.mxu0 %v58
  %v2782 = vpop.f32.mrf.mxu0
  %v2783 = vadd.f32 %v2769, %v2782
  %v2784 = vpop.f32.mrf.mxu0
  %v2785 = vadd.f32 %v2771, %v2784
  %2786 = vdwg.mxu0
  %2787 = vmatpush.bf16.msra.mxu0 %v1826
  %2788 = vmatpush.bf16.msra.mxu0 %v1818
  %2789 = vmatpush.bf16.msra.mxu0 %v1810
  %2790 = vmatpush.bf16.msra.mxu0 %v1802
  %2791 = vmatpush.bf16.msra.mxu0 %v1794
  %2792 = vmatpush.bf16.msra.mxu0 %v1786
  %2793 = vmatpush.bf16.msra.mxu0 %v1778
  %2794 = vmatpush.bf16.msra.mxu0 %v1770
  %2795 = vmatmul.bf16.gmra.mxu0 %v53
  %v2796 = vpop.f32.mrf.mxu0
  %v2797 = vadd.f32 %v555, %v2796
  %v2798 = vpop.f32.mrf.mxu0
  %v2799 = vadd.f32 %v557, %v2798
  %2800 = vdwg.mxu0
  %2801 = vmatpush.bf16.msra.mxu0 %v1890
  %2802 = vmatpush.bf16.msra.mxu0 %v1882
  %2803 = vmatpush.bf16.msra.mxu0 %v1874
  %2804 = vmatpush.bf16.msra.mxu0 %v1866
  %2805 = vmatpush.bf16.msra.mxu0 %v1858
  %2806 = vmatpush.bf16.msra.mxu0 %v1850
  %2807 = vmatpush.bf16.msra.mxu0 %v1842
  %2808 = vmatpush.bf16.msra.mxu0 %v1834
  %2809 = vmatmul.bf16.gmra.mxu0 %v54
  %v2810 = vpop.f32.mrf.mxu0
  %v2811 = vadd.f32 %v2797, %v2810
  %v2812 = vpop.f32.mrf.mxu0
  %v2813 = vadd.f32 %v2799, %v2812
  %2814 = vdwg.mxu0
  %2815 = vmatpush.bf16.msra.mxu0 %v1954
  %2816 = vmatpush.bf16.msra.mxu0 %v1946
  %2817 = vmatpush.bf16.msra.mxu0 %v1938
  %2818 = vmatpush.bf16.msra.mxu0 %v1930
  %2819 = vmatpush.bf16.msra.mxu0 %v1922
  %2820 = vmatpush.bf16.msra.mxu0 %v1914
  %2821 = vmatpush.bf16.msra.mxu0 %v1906
  %2822 = vmatpush.bf16.msra.mxu0 %v1898
  %2823 = vmatmul.bf16.gmra.mxu0 %v55
  %v2824 = vpop.f32.mrf.mxu0
  %v2825 = vadd.f32 %v2811, %v2824
  %v2826 = vpop.f32.mrf.mxu0
  %v2827 = vadd.f32 %v2813, %v2826
  %2828 = vdwg.mxu0
  %2829 = vmatpush.bf16.msra.mxu0 %v2018
  %2830 = vmatpush.bf16.msra.mxu0 %v2010
  %2831 = vmatpush.bf16.msra.mxu0 %v2002
  %2832 = vmatpush.bf16.msra.mxu0 %v1994
  %2833 = vmatpush.bf16.msra.mxu0 %v1986
  %2834 = vmatpush.bf16.msra.mxu0 %v1978
  %2835 = vmatpush.bf16.msra.mxu0 %v1970
  %2836 = vmatpush.bf16.msra.mxu0 %v1962
  %2837 = vmatmul.bf16.gmra.mxu0 %v56
  %v2838 = vpop.f32.mrf.mxu0
  %v2839 = vadd.f32 %v2825, %v2838
  %v2840 = vpop.f32.mrf.mxu0
  %v2841 = vadd.f32 %v2827, %v2840
  %2842 = vdwg.mxu0
  %2843 = vmatpush.bf16.msra.mxu0 %v2082
  %2844 = vmatpush.bf16.msra.mxu0 %v2074
  %2845 = vmatpush.bf16.msra.mxu0 %v2066
  %2846 = vmatpush.bf16.msra.mxu0 %v2058
  %2847 = vmatpush.bf16.msra.mxu0 %v2050
  %2848 = vmatpush.bf16.msra.mxu0 %v2042
  %2849 = vmatpush.bf16.msra.mxu0 %v2034
  %2850 = vmatpush.bf16.msra.mxu0 %v2026
  %2851 = vmatmul.bf16.gmra.mxu0 %v57
  %v2852 = vpop.f32.mrf.mxu0
  %v2853 = vadd.f32 %v2839, %v2852
  %v2854 = vpop.f32.mrf.mxu0
  %v2855 = vadd.f32 %v2841, %v2854
  %2856 = vdwg.mxu0
  %2857 = vmatpush.bf16.msra.mxu0 %v2146
  %2858 = vmatpush.bf16.msra.mxu0 %v2138
  %2859 = vmatpush.bf16.msra.mxu0 %v2130
  %2860 = vmatpush.bf16.msra.mxu0 %v2122
  %2861 = vmatpush.bf16.msra.mxu0 %v2114
  %2862 = vmatpush.bf16.msra.mxu0 %v2106
  %2863 = vmatpush.bf16.msra.mxu0 %v2098
  %2864 = vmatpush.bf16.msra.mxu0 %v2090
  %2865 = vmatmul.bf16.gmra.mxu0 %v58
  %v2866 = vpop.f32.mrf.mxu0
  %v2867 = vadd.f32 %v2853, %v2866
  %v2868 = vpop.f32.mrf.mxu0
  %v2869 = vadd.f32 %v2855, %v2868
  %2870 = vdwg.mxu0
  %2871 = vmatpush.bf16.msra.mxu0 %v1827
  %2872 = vmatpush.bf16.msra.mxu0 %v1819
  %2873 = vmatpush.bf16.msra.mxu0 %v1811
  %2874 = vmatpush.bf16.msra.mxu0 %v1803
  %2875 = vmatpush.bf16.msra.mxu0 %v1795
  %2876 = vmatpush.bf16.msra.mxu0 %v1787
  %2877 = vmatpush.bf16.msra.mxu0 %v1779
  %2878 = vmatpush.bf16.msra.mxu0 %v1771
  %2879 = vmatmul.bf16.gmra.mxu0 %v53
  %v2880 = vpop.f32.mrf.mxu0
  %v2881 = vadd.f32 %v569, %v2880
  %v2882 = vpop.f32.mrf.mxu0
  %v2883 = vadd.f32 %v571, %v2882
  %2884 = vdwg.mxu0
  %2885 = vmatpush.bf16.msra.mxu0 %v1891
  %2886 = vmatpush.bf16.msra.mxu0 %v1883
  %2887 = vmatpush.bf16.msra.mxu0 %v1875
  %2888 = vmatpush.bf16.msra.mxu0 %v1867
  %2889 = vmatpush.bf16.msra.mxu0 %v1859
  %2890 = vmatpush.bf16.msra.mxu0 %v1851
  %2891 = vmatpush.bf16.msra.mxu0 %v1843
  %2892 = vmatpush.bf16.msra.mxu0 %v1835
  %2893 = vmatmul.bf16.gmra.mxu0 %v54
  %v2894 = vpop.f32.mrf.mxu0
  %v2895 = vadd.f32 %v2881, %v2894
  %v2896 = vpop.f32.mrf.mxu0
  %v2897 = vadd.f32 %v2883, %v2896
  %2898 = vdwg.mxu0
  %2899 = vmatpush.bf16.msra.mxu0 %v1955
  %2900 = vmatpush.bf16.msra.mxu0 %v1947
  %2901 = vmatpush.bf16.msra.mxu0 %v1939
  %2902 = vmatpush.bf16.msra.mxu0 %v1931
  %2903 = vmatpush.bf16.msra.mxu0 %v1923
  %2904 = vmatpush.bf16.msra.mxu0 %v1915
  %2905 = vmatpush.bf16.msra.mxu0 %v1907
  %2906 = vmatpush.bf16.msra.mxu0 %v1899
  %2907 = vmatmul.bf16.gmra.mxu0 %v55
  %v2908 = vpop.f32.mrf.mxu0
  %v2909 = vadd.f32 %v2895, %v2908
  %v2910 = vpop.f32.mrf.mxu0
  %v2911 = vadd.f32 %v2897, %v2910
  %2912 = vdwg.mxu0
  %2913 = vmatpush.bf16.msra.mxu0 %v2019
  %2914 = vmatpush.bf16.msra.mxu0 %v2011
  %2915 = vmatpush.bf16.msra.mxu0 %v2003
  %2916 = vmatpush.bf16.msra.mxu0 %v1995
  %2917 = vmatpush.bf16.msra.mxu0 %v1987
  %2918 = vmatpush.bf16.msra.mxu0 %v1979
  %2919 = vmatpush.bf16.msra.mxu0 %v1971
  %2920 = vmatpush.bf16.msra.mxu0 %v1963
  %2921 = vmatmul.bf16.gmra.mxu0 %v56
  %v2922 = vpop.f32.mrf.mxu0
  %v2923 = vadd.f32 %v2909, %v2922
  %v2924 = vpop.f32.mrf.mxu0
  %v2925 = vadd.f32 %v2911, %v2924
  %2926 = vdwg.mxu0
  %2927 = vmatpush.bf16.msra.mxu0 %v2083
  %2928 = vmatpush.bf16.msra.mxu0 %v2075
  %2929 = vmatpush.bf16.msra.mxu0 %v2067
  %2930 = vmatpush.bf16.msra.mxu0 %v2059
  %2931 = vmatpush.bf16.msra.mxu0 %v2051
  %2932 = vmatpush.bf16.msra.mxu0 %v2043
  %2933 = vmatpush.bf16.msra.mxu0 %v2035
  %2934 = vmatpush.bf16.msra.mxu0 %v2027
  %2935 = vmatmul.bf16.gmra.mxu0 %v57
  %v2936 = vpop.f32.mrf.mxu0
  %v2937 = vadd.f32 %v2923, %v2936
  %v2938 = vpop.f32.mrf.mxu0
  %v2939 = vadd.f32 %v2925, %v2938
  %2940 = vdwg.mxu0
  %2941 = vmatpush.bf16.msra.mxu0 %v2147
  %2942 = vmatpush.bf16.msra.mxu0 %v2139
  %2943 = vmatpush.bf16.msra.mxu0 %v2131
  %2944 = vmatpush.bf16.msra.mxu0 %v2123
  %2945 = vmatpush.bf16.msra.mxu0 %v2115
  %2946 = vmatpush.bf16.msra.mxu0 %v2107
  %2947 = vmatpush.bf16.msra.mxu0 %v2099
  %2948 = vmatpush.bf16.msra.mxu0 %v2091
  %2949 = vmatmul.bf16.gmra.mxu0 %v58
  %v2950 = vpop.f32.mrf.mxu0
  %v2951 = vadd.f32 %v2937, %v2950
  %v2952 = vpop.f32.mrf.mxu0
  %v2953 = vadd.f32 %v2939, %v2952
  %2954 = vdwg.mxu0
  %2955 = vmatpush.bf16.msra.mxu0 %v1828
  %2956 = vmatpush.bf16.msra.mxu0 %v1820
  %2957 = vmatpush.bf16.msra.mxu0 %v1812
  %2958 = vmatpush.bf16.msra.mxu0 %v1804
  %2959 = vmatpush.bf16.msra.mxu0 %v1796
  %2960 = vmatpush.bf16.msra.mxu0 %v1788
  %2961 = vmatpush.bf16.msra.mxu0 %v1780
  %2962 = vmatpush.bf16.msra.mxu0 %v1772
  %2963 = vmatmul.bf16.gmra.mxu0 %v53
  %v2964 = vpop.f32.mrf.mxu0
  %v2965 = vadd.f32 %v583, %v2964
  %v2966 = vpop.f32.mrf.mxu0
  %v2967 = vadd.f32 %v585, %v2966
  %2968 = vdwg.mxu0
  %2969 = vmatpush.bf16.msra.mxu0 %v1892
  %2970 = vmatpush.bf16.msra.mxu0 %v1884
  %2971 = vmatpush.bf16.msra.mxu0 %v1876
  %2972 = vmatpush.bf16.msra.mxu0 %v1868
  %2973 = vmatpush.bf16.msra.mxu0 %v1860
  %2974 = vmatpush.bf16.msra.mxu0 %v1852
  %2975 = vmatpush.bf16.msra.mxu0 %v1844
  %2976 = vmatpush.bf16.msra.mxu0 %v1836
  %2977 = vmatmul.bf16.gmra.mxu0 %v54
  %v2978 = vpop.f32.mrf.mxu0
  %v2979 = vadd.f32 %v2965, %v2978
  %v2980 = vpop.f32.mrf.mxu0
  %v2981 = vadd.f32 %v2967, %v2980
  %2982 = vdwg.mxu0
  %2983 = vmatpush.bf16.msra.mxu0 %v1956
  %2984 = vmatpush.bf16.msra.mxu0 %v1948
  %2985 = vmatpush.bf16.msra.mxu0 %v1940
  %2986 = vmatpush.bf16.msra.mxu0 %v1932
  %2987 = vmatpush.bf16.msra.mxu0 %v1924
  %2988 = vmatpush.bf16.msra.mxu0 %v1916
  %2989 = vmatpush.bf16.msra.mxu0 %v1908
  %2990 = vmatpush.bf16.msra.mxu0 %v1900
  %2991 = vmatmul.bf16.gmra.mxu0 %v55
  %v2992 = vpop.f32.mrf.mxu0
  %v2993 = vadd.f32 %v2979, %v2992
  %v2994 = vpop.f32.mrf.mxu0
  %v2995 = vadd.f32 %v2981, %v2994
  %2996 = vdwg.mxu0
  %2997 = vmatpush.bf16.msra.mxu0 %v2020
  %2998 = vmatpush.bf16.msra.mxu0 %v2012
  %2999 = vmatpush.bf16.msra.mxu0 %v2004
  %3000 = vmatpush.bf16.msra.mxu0 %v1996
  %3001 = vmatpush.bf16.msra.mxu0 %v1988
  %3002 = vmatpush.bf16.msra.mxu0 %v1980
  %3003 = vmatpush.bf16.msra.mxu0 %v1972
  %3004 = vmatpush.bf16.msra.mxu0 %v1964
  %3005 = vmatmul.bf16.gmra.mxu0 %v56
  %v3006 = vpop.f32.mrf.mxu0
  %v3007 = vadd.f32 %v2993, %v3006
  %v3008 = vpop.f32.mrf.mxu0
  %v3009 = vadd.f32 %v2995, %v3008
  %3010 = vdwg.mxu0
  %3011 = vmatpush.bf16.msra.mxu0 %v2084
  %3012 = vmatpush.bf16.msra.mxu0 %v2076
  %3013 = vmatpush.bf16.msra.mxu0 %v2068
  %3014 = vmatpush.bf16.msra.mxu0 %v2060
  %3015 = vmatpush.bf16.msra.mxu0 %v2052
  %3016 = vmatpush.bf16.msra.mxu0 %v2044
  %3017 = vmatpush.bf16.msra.mxu0 %v2036
  %3018 = vmatpush.bf16.msra.mxu0 %v2028
  %3019 = vmatmul.bf16.gmra.mxu0 %v57
  %v3020 = vpop.f32.mrf.mxu0
  %v3021 = vadd.f32 %v3007, %v3020
  %v3022 = vpop.f32.mrf.mxu0
  %v3023 = vadd.f32 %v3009, %v3022
  %3024 = vdwg.mxu0
  %3025 = vmatpush.bf16.msra.mxu0 %v2148
  %3026 = vmatpush.bf16.msra.mxu0 %v2140
  %3027 = vmatpush.bf16.msra.mxu0 %v2132
  %3028 = vmatpush.bf16.msra.mxu0 %v2124
  %3029 = vmatpush.bf16.msra.mxu0 %v2116
  %3030 = vmatpush.bf16.msra.mxu0 %v2108
  %3031 = vmatpush.bf16.msra.mxu0 %v2100
  %3032 = vmatpush.bf16.msra.mxu0 %v2092
  %3033 = vmatmul.bf16.gmra.mxu0 %v58
  %v3034 = vpop.f32.mrf.mxu0
  %v3035 = vadd.f32 %v3021, %v3034
  %v3036 = vpop.f32.mrf.mxu0
  %v3037 = vadd.f32 %v3023, %v3036
  %3038 = vdwg.mxu0
  %3039 = vmatpush.bf16.msra.mxu0 %v1829
  %3040 = vmatpush.bf16.msra.mxu0 %v1821
  %3041 = vmatpush.bf16.msra.mxu0 %v1813
  %3042 = vmatpush.bf16.msra.mxu0 %v1805
  %3043 = vmatpush.bf16.msra.mxu0 %v1797
  %3044 = vmatpush.bf16.msra.mxu0 %v1789
  %3045 = vmatpush.bf16.msra.mxu0 %v1781
  %3046 = vmatpush.bf16.msra.mxu0 %v1773
  %3047 = vmatmul.bf16.gmra.mxu0 %v53
  %v3048 = vpop.f32.mrf.mxu0
  %v3049 = vadd.f32 %v597, %v3048
  %v3050 = vpop.f32.mrf.mxu0
  %v3051 = vadd.f32 %v599, %v3050
  %3052 = vdwg.mxu0
  %3053 = vmatpush.bf16.msra.mxu0 %v1893
  %3054 = vmatpush.bf16.msra.mxu0 %v1885
  %3055 = vmatpush.bf16.msra.mxu0 %v1877
  %3056 = vmatpush.bf16.msra.mxu0 %v1869
  %3057 = vmatpush.bf16.msra.mxu0 %v1861
  %3058 = vmatpush.bf16.msra.mxu0 %v1853
  %3059 = vmatpush.bf16.msra.mxu0 %v1845
  %3060 = vmatpush.bf16.msra.mxu0 %v1837
  %3061 = vmatmul.bf16.gmra.mxu0 %v54
  %v3062 = vpop.f32.mrf.mxu0
  %v3063 = vadd.f32 %v3049, %v3062
  %v3064 = vpop.f32.mrf.mxu0
  %v3065 = vadd.f32 %v3051, %v3064
  %3066 = vdwg.mxu0
  %3067 = vmatpush.bf16.msra.mxu0 %v1957
  %3068 = vmatpush.bf16.msra.mxu0 %v1949
  %3069 = vmatpush.bf16.msra.mxu0 %v1941
  %3070 = vmatpush.bf16.msra.mxu0 %v1933
  %3071 = vmatpush.bf16.msra.mxu0 %v1925
  %3072 = vmatpush.bf16.msra.mxu0 %v1917
  %3073 = vmatpush.bf16.msra.mxu0 %v1909
  %3074 = vmatpush.bf16.msra.mxu0 %v1901
  %3075 = vmatmul.bf16.gmra.mxu0 %v55
  %v3076 = vpop.f32.mrf.mxu0
  %v3077 = vadd.f32 %v3063, %v3076
  %v3078 = vpop.f32.mrf.mxu0
  %v3079 = vadd.f32 %v3065, %v3078
  %3080 = vdwg.mxu0
  %3081 = vmatpush.bf16.msra.mxu0 %v2021
  %3082 = vmatpush.bf16.msra.mxu0 %v2013
  %3083 = vmatpush.bf16.msra.mxu0 %v2005
  %3084 = vmatpush.bf16.msra.mxu0 %v1997
  %3085 = vmatpush.bf16.msra.mxu0 %v1989
  %3086 = vmatpush.bf16.msra.mxu0 %v1981
  %3087 = vmatpush.bf16.msra.mxu0 %v1973
  %3088 = vmatpush.bf16.msra.mxu0 %v1965
  %3089 = vmatmul.bf16.gmra.mxu0 %v56
  %v3090 = vpop.f32.mrf.mxu0
  %v3091 = vadd.f32 %v3077, %v3090
  %v3092 = vpop.f32.mrf.mxu0
  %v3093 = vadd.f32 %v3079, %v3092
  %3094 = vdwg.mxu0
  %3095 = vmatpush.bf16.msra.mxu0 %v2085
  %3096 = vmatpush.bf16.msra.mxu0 %v2077
  %3097 = vmatpush.bf16.msra.mxu0 %v2069
  %3098 = vmatpush.bf16.msra.mxu0 %v2061
  %3099 = vmatpush.bf16.msra.mxu0 %v2053
  %3100 = vmatpush.bf16.msra.mxu0 %v2045
  %3101 = vmatpush.bf16.msra.mxu0 %v2037
  %3102 = vmatpush.bf16.msra.mxu0 %v2029
  %3103 = vmatmul.bf16.gmra.mxu0 %v57
  %v3104 = vpop.f32.mrf.mxu0
  %v3105 = vadd.f32 %v3091, %v3104
  %v3106 = vpop.f32.mrf.mxu0
  %v3107 = vadd.f32 %v3093, %v3106
  %3108 = vdwg.mxu0
  %3109 = vmatpush.bf16.msra.mxu0 %v2149
  %3110 = vmatpush.bf16.msra.mxu0 %v2141
  %3111 = vmatpush.bf16.msra.mxu0 %v2133
  %3112 = vmatpush.bf16.msra.mxu0 %v2125
  %3113 = vmatpush.bf16.msra.mxu0 %v2117
  %3114 = vmatpush.bf16.msra.mxu0 %v2109
  %3115 = vmatpush.bf16.msra.mxu0 %v2101
  %3116 = vmatpush.bf16.msra.mxu0 %v2093
  %3117 = vmatmul.bf16.gmra.mxu0 %v58
  %v3118 = vpop.f32.mrf.mxu0
  %v3119 = vadd.f32 %v3105, %v3118
  %v3120 = vpop.f32.mrf.mxu0
  %v3121 = vadd.f32 %v3107, %v3120
  %3122 = vdwg.mxu0
  %3123 = vmatpush.bf16.msra.mxu0 %v1830
  %3124 = vmatpush.bf16.msra.mxu0 %v1822
  %3125 = vmatpush.bf16.msra.mxu0 %v1814
  %3126 = vmatpush.bf16.msra.mxu0 %v1806
  %3127 = vmatpush.bf16.msra.mxu0 %v1798
  %3128 = vmatpush.bf16.msra.mxu0 %v1790
  %3129 = vmatpush.bf16.msra.mxu0 %v1782
  %3130 = vmatpush.bf16.msra.mxu0 %v1774
  %3131 = vmatmul.bf16.gmra.mxu0 %v53
  %v3132 = vpop.f32.mrf.mxu0
  %v3133 = vadd.f32 %v611, %v3132
  %v3134 = vpop.f32.mrf.mxu0
  %v3135 = vadd.f32 %v613, %v3134
  %3136 = vdwg.mxu0
  %3137 = vmatpush.bf16.msra.mxu0 %v1894
  %3138 = vmatpush.bf16.msra.mxu0 %v1886
  %3139 = vmatpush.bf16.msra.mxu0 %v1878
  %3140 = vmatpush.bf16.msra.mxu0 %v1870
  %3141 = vmatpush.bf16.msra.mxu0 %v1862
  %3142 = vmatpush.bf16.msra.mxu0 %v1854
  %3143 = vmatpush.bf16.msra.mxu0 %v1846
  %3144 = vmatpush.bf16.msra.mxu0 %v1838
  %3145 = vmatmul.bf16.gmra.mxu0 %v54
  %v3146 = vpop.f32.mrf.mxu0
  %v3147 = vadd.f32 %v3133, %v3146
  %v3148 = vpop.f32.mrf.mxu0
  %v3149 = vadd.f32 %v3135, %v3148
  %3150 = vdwg.mxu0
  %3151 = vmatpush.bf16.msra.mxu0 %v1958
  %3152 = vmatpush.bf16.msra.mxu0 %v1950
  %3153 = vmatpush.bf16.msra.mxu0 %v1942
  %3154 = vmatpush.bf16.msra.mxu0 %v1934
  %3155 = vmatpush.bf16.msra.mxu0 %v1926
  %3156 = vmatpush.bf16.msra.mxu0 %v1918
  %3157 = vmatpush.bf16.msra.mxu0 %v1910
  %3158 = vmatpush.bf16.msra.mxu0 %v1902
  %3159 = vmatmul.bf16.gmra.mxu0 %v55
  %v3160 = vpop.f32.mrf.mxu0
  %v3161 = vadd.f32 %v3147, %v3160
  %v3162 = vpop.f32.mrf.mxu0
  %v3163 = vadd.f32 %v3149, %v3162
  %3164 = vdwg.mxu0
  %3165 = vmatpush.bf16.msra.mxu0 %v2022
  %3166 = vmatpush.bf16.msra.mxu0 %v2014
  %3167 = vmatpush.bf16.msra.mxu0 %v2006
  %3168 = vmatpush.bf16.msra.mxu0 %v1998
  %3169 = vmatpush.bf16.msra.mxu0 %v1990
  %3170 = vmatpush.bf16.msra.mxu0 %v1982
  %3171 = vmatpush.bf16.msra.mxu0 %v1974
  %3172 = vmatpush.bf16.msra.mxu0 %v1966
  %3173 = vmatmul.bf16.gmra.mxu0 %v56
  %v3174 = vpop.f32.mrf.mxu0
  %v3175 = vadd.f32 %v3161, %v3174
  %v3176 = vpop.f32.mrf.mxu0
  %v3177 = vadd.f32 %v3163, %v3176
  %3178 = vdwg.mxu0
  %3179 = vmatpush.bf16.msra.mxu0 %v2086
  %3180 = vmatpush.bf16.msra.mxu0 %v2078
  %3181 = vmatpush.bf16.msra.mxu0 %v2070
  %3182 = vmatpush.bf16.msra.mxu0 %v2062
  %3183 = vmatpush.bf16.msra.mxu0 %v2054
  %3184 = vmatpush.bf16.msra.mxu0 %v2046
  %3185 = vmatpush.bf16.msra.mxu0 %v2038
  %3186 = vmatpush.bf16.msra.mxu0 %v2030
  %3187 = vmatmul.bf16.gmra.mxu0 %v57
  %v3188 = vpop.f32.mrf.mxu0
  %v3189 = vadd.f32 %v3175, %v3188
  %v3190 = vpop.f32.mrf.mxu0
  %v3191 = vadd.f32 %v3177, %v3190
  %3192 = vdwg.mxu0
  %3193 = vmatpush.bf16.msra.mxu0 %v2150
  %3194 = vmatpush.bf16.msra.mxu0 %v2142
  %3195 = vmatpush.bf16.msra.mxu0 %v2134
  %3196 = vmatpush.bf16.msra.mxu0 %v2126
  %3197 = vmatpush.bf16.msra.mxu0 %v2118
  %3198 = vmatpush.bf16.msra.mxu0 %v2110
  %3199 = vmatpush.bf16.msra.mxu0 %v2102
  %3200 = vmatpush.bf16.msra.mxu0 %v2094
  %3201 = vmatmul.bf16.gmra.mxu0 %v58
  %v3202 = vpop.f32.mrf.mxu0
  %v3203 = vadd.f32 %v3189, %v3202
  %v3204 = vpop.f32.mrf.mxu0
  %v3205 = vadd.f32 %v3191, %v3204
  %3206 = vdwg.mxu0
  %v3207 = vld [vmem:[%s4] sm:$0xff]
  %v3209 = vperm.slane %v3207, 0
  %v3210 = vperm.slane %v3207, 1
  %v3211 = vperm.slane %v3207, 2
  %v3212 = vperm.slane %v3207, 3
  %v3213 = vperm.slane %v3207, 4
  %v3214 = vperm.slane %v3207, 5
  %v3215 = vperm.slane %v3207, 6
  %v3216 = vperm.slane %v3207, 7
  %v3225 = vadd.f32 %v2615, %v3209
  %v3226 = vadd.f32 %v2699, %v3210
  %v3227 = vadd.f32 %v2783, %v3211
  %v3228 = vadd.f32 %v2867, %v3212
  %v3229 = vadd.f32 %v2951, %v3213
  %v3230 = vadd.f32 %v3035, %v3214
  %v3231 = vadd.f32 %v3119, %v3215
  %v3232 = vadd.f32 %v3203, %v3216
  %v3233 = vadd.f32 %v2617, %v3209
  %v3234 = vadd.f32 %v2701, %v3210
  %v3235 = vadd.f32 %v2785, %v3211
  %v3236 = vadd.f32 %v2869, %v3212
  %v3237 = vadd.f32 %v2953, %v3213
  %v3238 = vadd.f32 %v3037, %v3214
  %v3239 = vadd.f32 %v3121, %v3215
  %v3240 = vadd.f32 %v3205, %v3216
  %vm3241 = vcmp.gt.f32.partialorder %v3225, 0.0
  %vm3242 = vcmp.gt.f32.partialorder %v3226, 0.0
  %vm3243 = vcmp.gt.f32.partialorder %v3227, 0.0
  %vm3244 = vcmp.gt.f32.partialorder %v3228, 0.0
  %vm3245 = vcmp.gt.f32.partialorder %v3229, 0.0
  %vm3246 = vcmp.gt.f32.partialorder %v3230, 0.0
  %vm3247 = vcmp.gt.f32.partialorder %v3231, 0.0
  %vm3248 = vcmp.gt.f32.partialorder %v3232, 0.0
  %vm3249 = vcmp.gt.f32.partialorder %v3233, 0.0
  %vm3250 = vcmp.gt.f32.partialorder %v3234, 0.0
  %vm3251 = vcmp.gt.f32.partialorder %v3235, 0.0
  %vm3252 = vcmp.gt.f32.partialorder %v3236, 0.0
  %vm3253 = vcmp.gt.f32.partialorder %v3237, 0.0
  %vm3254 = vcmp.gt.f32.partialorder %v3238, 0.0
  %vm3255 = vcmp.gt.f32.partialorder %v3239, 0.0
  %vm3256 = vcmp.gt.f32.partialorder %v3240, 0.0
  %v3257 = vmul.f32 %v3225, 0.2
  %v3258 = vmul.f32 %v3226, 0.2
  %v3259 = vmul.f32 %v3227, 0.2
  %v3260 = vmul.f32 %v3228, 0.2
  %v3261 = vmul.f32 %v3229, 0.2
  %v3262 = vmul.f32 %v3230, 0.2
  %v3263 = vmul.f32 %v3231, 0.2
  %v3264 = vmul.f32 %v3232, 0.2
  %v3265 = vmul.f32 %v3233, 0.2
  %v3266 = vmul.f32 %v3234, 0.2
  %v3267 = vmul.f32 %v3235, 0.2
  %v3268 = vmul.f32 %v3236, 0.2
  %v3269 = vmul.f32 %v3237, 0.2
  %v3270 = vmul.f32 %v3238, 0.2
  %v3271 = vmul.f32 %v3239, 0.2
  %v3272 = vmul.f32 %v3240, 0.2
  %v3273 = vsel %vm3241, %v3225, %v3257
  %v3274 = vsel %vm3242, %v3226, %v3258
  %v3275 = vsel %vm3243, %v3227, %v3259
  %v3276 = vsel %vm3244, %v3228, %v3260
  %v3277 = vsel %vm3245, %v3229, %v3261
  %v3278 = vsel %vm3246, %v3230, %v3262
  %v3279 = vsel %vm3247, %v3231, %v3263
  %v3280 = vsel %vm3248, %v3232, %v3264
  %v3281 = vsel %vm3249, %v3233, %v3265
  %v3282 = vsel %vm3250, %v3234, %v3266
  %v3283 = vsel %vm3251, %v3235, %v3267
  %v3284 = vsel %vm3252, %v3236, %v3268
  %v3285 = vsel %vm3253, %v3237, %v3269
  %v3286 = vsel %vm3254, %v3238, %v3270
  %v3287 = vsel %vm3255, %v3239, %v3271
  %v3288 = vsel %vm3256, %v3240, %v3272
  %v3289 = vpack.c.bf16 %v3281, %v3273
  %v3290 = vpack.c.bf16 %v3282, %v3274
  %v3291 = vpack.c.bf16 %v3283, %v3275
  %v3292 = vpack.c.bf16 %v3284, %v3276
  %v3293 = vpack.c.bf16 %v3285, %v3277
  %v3294 = vpack.c.bf16 %v3286, %v3278
  %v3295 = vpack.c.bf16 %v3287, %v3279
  %v3296 = vpack.c.bf16 %v3288, %v3280
  %v3297 = vld [vmem:[%s5] sm:$0xff]
  %v3298 = vld [vmem:[%s5 + $0x8] sm:$0xff]
  %v3299 = vld [vmem:[%s5 + $0x10] sm:$0xff]
  %v3300 = vld [vmem:[%s5 + $0x18] sm:$0xff]
  %v3301 = vld [vmem:[%s5 + $0x20] sm:$0xff]
  %v3302 = vld [vmem:[%s5 + $0x28] sm:$0xff]
  %v3303 = vld [vmem:[%s5 + $0x30] sm:$0xff]
  %v3304 = vld [vmem:[%s5 + $0x38] sm:$0xff]
  %v3305 = vld [vmem:[%s5 + $0x40] sm:$0xff]
  %v3306 = vld [vmem:[%s5 + $0x48] sm:$0xff]
  %v3307 = vld [vmem:[%s5 + $0x50] sm:$0xff]
  %v3308 = vld [vmem:[%s5 + $0x58] sm:$0xff]
  %v3309 = vld [vmem:[%s5 + $0x60] sm:$0xff]
  %v3310 = vld [vmem:[%s5 + $0x68] sm:$0xff]
  %v3311 = vld [vmem:[%s5 + $0x70] sm:$0xff]
  %v3312 = vld [vmem:[%s5 + $0x78] sm:$0xff]
  %v3313 = vld [vmem:[%s5 + $0x80] sm:$0xff]
  %v3314 = vld [vmem:[%s5 + $0x88] sm:$0xff]
  %v3315 = vld [vmem:[%s5 + $0x90] sm:$0xff]
  %v3316 = vld [vmem:[%s5 + $0x98] sm:$0xff]
  %v3317 = vld [vmem:[%s5 + $0xa0] sm:$0xff]
  %v3318 = vld [vmem:[%s5 + $0xa8] sm:$0xff]
  %v3319 = vld [vmem:[%s5 + $0xb0] sm:$0xff]
  %v3320 = vld [vmem:[%s5 + $0xb8] sm:$0xff]
  %v3321 = vld [vmem:[%s5 + $0xc0] sm:$0xff]
  %v3322 = vld [vmem:[%s5 + $0xc8] sm:$0xff]
  %v3323 = vld [vmem:[%s5 + $0xd0] sm:$0xff]
  %v3324 = vld [vmem:[%s5 + $0xd8] sm:$0xff]
  %v3325 = vld [vmem:[%s5 + $0xe0] sm:$0xff]
  %v3326 = vld [vmem:[%s5 + $0xe8] sm:$0xff]
  %v3327 = vld [vmem:[%s5 + $0xf0] sm:$0xff]
  %v3328 = vld [vmem:[%s5 + $0xf8] sm:$0xff]
  %v3329 = vld [vmem:[%s5 + $0x100] sm:$0xff]
  %v3330 = vld [vmem:[%s5 + $0x108] sm:$0xff]
  %v3331 = vld [vmem:[%s5 + $0x110] sm:$0xff]
  %v3332 = vld [vmem:[%s5 + $0x118] sm:$0xff]
  %v3333 = vld [vmem:[%s5 + $0x120] sm:$0xff]
  %v3334 = vld [vmem:[%s5 + $0x128] sm:$0xff]
  %v3335 = vld [vmem:[%s5 + $0x130] sm:$0xff]
  %v3336 = vld [vmem:[%s5 + $0x138] sm:$0xff]
  %v3337 = vld [vmem:[%s5 + $0x140] sm:$0xff]
  %v3338 = vld [vmem:[%s5 + $0x148] sm:$0xff]
  %v3339 = vld [vmem:[%s5 + $0x150] sm:$0xff]
  %v3340 = vld [vmem:[%s5 + $0x158] sm:$0xff]
  %v3341 = vld [vmem:[%s5 + $0x160] sm:$0xff]
  %v3342 = vld [vmem:[%s5 + $0x168] sm:$0xff]
  %v3343 = vld [vmem:[%s5 + $0x170] sm:$0xff]
  %v3344 = vld [vmem:[%s5 + $0x178] sm:$0xff]
  %v3345 = vld [vmem:[%s5 + $0x180] sm:$0xff]
  %v3346 = vld [vmem:[%s5 + $0x188] sm:$0xff]
  %v3347 = vld [vmem:[%s5 + $0x190] sm:$0xff]
  %v3348 = vld [vmem:[%s5 + $0x198] sm:$0xff]
  %v3349 = vld [vmem:[%s5 + $0x1a0] sm:$0xff]
  %v3350 = vld [vmem:[%s5 + $0x1a8] sm:$0xff]
  %v3351 = vld [vmem:[%s5 + $0x1b0] sm:$0xff]
  %v3352 = vld [vmem:[%s5 + $0x1b8] sm:$0xff]
  %v3353 = vld [vmem:[%s5 + $0x1c0] sm:$0xff]
  %v3354 = vld [vmem:[%s5 + $0x1c8] sm:$0xff]
  %v3355 = vld [vmem:[%s5 + $0x1d0] sm:$0xff]
  %v3356 = vld [vmem:[%s5 + $0x1d8] sm:$0xff]
  %v3357 = vld [vmem:[%s5 + $0x1e0] sm:$0xff]
  %v3358 = vld [vmem:[%s5 + $0x1e8] sm:$0xff]
  %v3359 = vld [vmem:[%s5 + $0x1f0] sm:$0xff]
  %v3360 = vld [vmem:[%s5 + $0x1f8] sm:$0xff]
  %v3361 = vld [vmem:[%s5 + $0x200] sm:$0xff]
  %v3362 = vld [vmem:[%s5 + $0x208] sm:$0xff]
  %v3363 = vld [vmem:[%s5 + $0x210] sm:$0xff]
  %v3364 = vld [vmem:[%s5 + $0x218] sm:$0xff]
  %v3365 = vld [vmem:[%s5 + $0x220] sm:$0xff]
  %v3366 = vld [vmem:[%s5 + $0x228] sm:$0xff]
  %v3367 = vld [vmem:[%s5 + $0x230] sm:$0xff]
  %v3368 = vld [vmem:[%s5 + $0x238] sm:$0xff]
  %v3369 = vld [vmem:[%s5 + $0x240] sm:$0xff]
  %v3370 = vld [vmem:[%s5 + $0x248] sm:$0xff]
  %v3371 = vld [vmem:[%s5 + $0x250] sm:$0xff]
  %v3372 = vld [vmem:[%s5 + $0x258] sm:$0xff]
  %v3373 = vld [vmem:[%s5 + $0x260] sm:$0xff]
  %v3374 = vld [vmem:[%s5 + $0x268] sm:$0xff]
  %v3375 = vld [vmem:[%s5 + $0x270] sm:$0xff]
  %v3376 = vld [vmem:[%s5 + $0x278] sm:$0xff]
  %v3377 = vld [vmem:[%s5 + $0x280] sm:$0xff]
  %v3378 = vld [vmem:[%s5 + $0x288] sm:$0xff]
  %v3379 = vld [vmem:[%s5 + $0x290] sm:$0xff]
  %v3380 = vld [vmem:[%s5 + $0x298] sm:$0xff]
  %v3381 = vld [vmem:[%s5 + $0x2a0] sm:$0xff]
  %v3382 = vld [vmem:[%s5 + $0x2a8] sm:$0xff]
  %v3383 = vld [vmem:[%s5 + $0x2b0] sm:$0xff]
  %v3384 = vld [vmem:[%s5 + $0x2b8] sm:$0xff]
  %v3385 = vld [vmem:[%s5 + $0x2c0] sm:$0xff]
  %v3386 = vld [vmem:[%s5 + $0x2c8] sm:$0xff]
  %v3387 = vld [vmem:[%s5 + $0x2d0] sm:$0xff]
  %v3388 = vld [vmem:[%s5 + $0x2d8] sm:$0xff]
  %v3389 = vld [vmem:[%s5 + $0x2e0] sm:$0xff]
  %v3390 = vld [vmem:[%s5 + $0x2e8] sm:$0xff]
  %v3391 = vld [vmem:[%s5 + $0x2f0] sm:$0xff]
  %v3392 = vld [vmem:[%s5 + $0x2f8] sm:$0xff]
  %v3393 = vld [vmem:[%s5 + $0x300] sm:$0xff]
  %v3394 = vld [vmem:[%s5 + $0x308] sm:$0xff]
  %v3395 = vld [vmem:[%s5 + $0x310] sm:$0xff]
  %v3396 = vld [vmem:[%s5 + $0x318] sm:$0xff]
  %v3397 = vld [vmem:[%s5 + $0x320] sm:$0xff]
  %v3398 = vld [vmem:[%s5 + $0x328] sm:$0xff]
  %v3399 = vld [vmem:[%s5 + $0x330] sm:$0xff]
  %v3400 = vld [vmem:[%s5 + $0x338] sm:$0xff]
  %v3401 = vld [vmem:[%s5 + $0x340] sm:$0xff]
  %v3402 = vld [vmem:[%s5 + $0x348] sm:$0xff]
  %v3403 = vld [vmem:[%s5 + $0x350] sm:$0xff]
  %v3404 = vld [vmem:[%s5 + $0x358] sm:$0xff]
  %v3405 = vld [vmem:[%s5 + $0x360] sm:$0xff]
  %v3406 = vld [vmem:[%s5 + $0x368] sm:$0xff]
  %v3407 = vld [vmem:[%s5 + $0x370] sm:$0xff]
  %v3408 = vld [vmem:[%s5 + $0x378] sm:$0xff]
  %v3409 = vld [vmem:[%s5 + $0x380] sm:$0xff]
  %v3410 = vld [vmem:[%s5 + $0x388] sm:$0xff]
  %v3411 = vld [vmem:[%s5 + $0x390] sm:$0xff]
  %v3412 = vld [vmem:[%s5 + $0x398] sm:$0xff]
  %v3413 = vld [vmem:[%s5 + $0x3a0] sm:$0xff]
  %v3414 = vld [vmem:[%s5 + $0x3a8] sm:$0xff]
  %v3415 = vld [vmem:[%s5 + $0x3b0] sm:$0xff]
  %v3416 = vld [vmem:[%s5 + $0x3b8] sm:$0xff]
  %v3417 = vld [vmem:[%s5 + $0x3c0] sm:$0xff]
  %v3418 = vld [vmem:[%s5 + $0x3c8] sm:$0xff]
  %v3419 = vld [vmem:[%s5 + $0x3d0] sm:$0xff]
  %v3420 = vld [vmem:[%s5 + $0x3d8] sm:$0xff]
  %v3421 = vld [vmem:[%s5 + $0x3e0] sm:$0xff]
  %v3422 = vld [vmem:[%s5 + $0x3e8] sm:$0xff]
  %v3423 = vld [vmem:[%s5 + $0x3f0] sm:$0xff]
  %v3424 = vld [vmem:[%s5 + $0x3f8] sm:$0xff]
  %v3425 = vld [vmem:[%s5 + $0x400] sm:$0xff]
  %v3426 = vld [vmem:[%s5 + $0x408] sm:$0xff]
  %v3427 = vld [vmem:[%s5 + $0x410] sm:$0xff]
  %v3428 = vld [vmem:[%s5 + $0x418] sm:$0xff]
  %v3429 = vld [vmem:[%s5 + $0x420] sm:$0xff]
  %v3430 = vld [vmem:[%s5 + $0x428] sm:$0xff]
  %v3431 = vld [vmem:[%s5 + $0x430] sm:$0xff]
  %v3432 = vld [vmem:[%s5 + $0x438] sm:$0xff]
  %v3433 = vld [vmem:[%s5 + $0x440] sm:$0xff]
  %v3434 = vld [vmem:[%s5 + $0x448] sm:$0xff]
  %v3435 = vld [vmem:[%s5 + $0x450] sm:$0xff]
  %v3436 = vld [vmem:[%s5 + $0x458] sm:$0xff]
  %v3437 = vld [vmem:[%s5 + $0x460] sm:$0xff]
  %v3438 = vld [vmem:[%s5 + $0x468] sm:$0xff]
  %v3439 = vld [vmem:[%s5 + $0x470] sm:$0xff]
  %v3440 = vld [vmem:[%s5 + $0x478] sm:$0xff]
  %v3441 = vld [vmem:[%s5 + $0x480] sm:$0xff]
  %v3442 = vld [vmem:[%s5 + $0x488] sm:$0xff]
  %v3443 = vld [vmem:[%s5 + $0x490] sm:$0xff]
  %v3444 = vld [vmem:[%s5 + $0x498] sm:$0xff]
  %v3445 = vld [vmem:[%s5 + $0x4a0] sm:$0xff]
  %v3446 = vld [vmem:[%s5 + $0x4a8] sm:$0xff]
  %v3447 = vld [vmem:[%s5 + $0x4b0] sm:$0xff]
  %v3448 = vld [vmem:[%s5 + $0x4b8] sm:$0xff]
  %v3449 = vld [vmem:[%s5 + $0x4c0] sm:$0xff]
  %v3450 = vld [vmem:[%s5 + $0x4c8] sm:$0xff]
  %v3451 = vld [vmem:[%s5 + $0x4d0] sm:$0xff]
  %v3452 = vld [vmem:[%s5 + $0x4d8] sm:$0xff]
  %v3453 = vld [vmem:[%s5 + $0x4e0] sm:$0xff]
  %v3454 = vld [vmem:[%s5 + $0x4e8] sm:$0xff]
  %v3455 = vld [vmem:[%s5 + $0x4f0] sm:$0xff]
  %v3456 = vld [vmem:[%s5 + $0x4f8] sm:$0xff]
  %v3457 = vld [vmem:[%s5 + $0x500] sm:$0xff]
  %v3458 = vld [vmem:[%s5 + $0x508] sm:$0xff]
  %v3459 = vld [vmem:[%s5 + $0x510] sm:$0xff]
  %v3460 = vld [vmem:[%s5 + $0x518] sm:$0xff]
  %v3461 = vld [vmem:[%s5 + $0x520] sm:$0xff]
  %v3462 = vld [vmem:[%s5 + $0x528] sm:$0xff]
  %v3463 = vld [vmem:[%s5 + $0x530] sm:$0xff]
  %v3464 = vld [vmem:[%s5 + $0x538] sm:$0xff]
  %v3465 = vld [vmem:[%s5 + $0x540] sm:$0xff]
  %v3466 = vld [vmem:[%s5 + $0x548] sm:$0xff]
  %v3467 = vld [vmem:[%s5 + $0x550] sm:$0xff]
  %v3468 = vld [vmem:[%s5 + $0x558] sm:$0xff]
  %v3469 = vld [vmem:[%s5 + $0x560] sm:$0xff]
  %v3470 = vld [vmem:[%s5 + $0x568] sm:$0xff]
  %v3471 = vld [vmem:[%s5 + $0x570] sm:$0xff]
  %v3472 = vld [vmem:[%s5 + $0x578] sm:$0xff]
  %v3473 = vld [vmem:[%s5 + $0x580] sm:$0xff]
  %v3474 = vld [vmem:[%s5 + $0x588] sm:$0xff]
  %v3475 = vld [vmem:[%s5 + $0x590] sm:$0xff]
  %v3476 = vld [vmem:[%s5 + $0x598] sm:$0xff]
  %v3477 = vld [vmem:[%s5 + $0x5a0] sm:$0xff]
  %v3478 = vld [vmem:[%s5 + $0x5a8] sm:$0xff]
  %v3479 = vld [vmem:[%s5 + $0x5b0] sm:$0xff]
  %v3480 = vld [vmem:[%s5 + $0x5b8] sm:$0xff]
  %v3481 = vld [vmem:[%s5 + $0x5c0] sm:$0xff]
  %v3482 = vld [vmem:[%s5 + $0x5c8] sm:$0xff]
  %v3483 = vld [vmem:[%s5 + $0x5d0] sm:$0xff]
  %v3484 = vld [vmem:[%s5 + $0x5d8] sm:$0xff]
  %v3485 = vld [vmem:[%s5 + $0x5e0] sm:$0xff]
  %v3486 = vld [vmem:[%s5 + $0x5e8] sm:$0xff]
  %v3487 = vld [vmem:[%s5 + $0x5f0] sm:$0xff]
  %v3488 = vld [vmem:[%s5 + $0x5f8] sm:$0xff]
  %v3489 = vld [vmem:[%s5 + $0x600] sm:$0xff]
  %v3490 = vld [vmem:[%s5 + $0x608] sm:$0xff]
  %v3491 = vld [vmem:[%s5 + $0x610] sm:$0xff]
  %v3492 = vld [vmem:[%s5 + $0x618] sm:$0xff]
  %v3493 = vld [vmem:[%s5 + $0x620] sm:$0xff]
  %v3494 = vld [vmem:[%s5 + $0x628] sm:$0xff]
  %v3495 = vld [vmem:[%s5 + $0x630] sm:$0xff]
  %v3496 = vld [vmem:[%s5 + $0x638] sm:$0xff]
  %v3497 = vld [vmem:[%s5 + $0x640] sm:$0xff]
  %v3498 = vld [vmem:[%s5 + $0x648] sm:$0xff]
  %v3499 = vld [vmem:[%s5 + $0x650] sm:$0xff]
  %v3500 = vld [vmem:[%s5 + $0x658] sm:$0xff]
  %v3501 = vld [vmem:[%s5 + $0x660] sm:$0xff]
  %v3502 = vld [vmem:[%s5 + $0x668] sm:$0xff]
  %v3503 = vld [vmem:[%s5 + $0x670] sm:$0xff]
  %v3504 = vld [vmem:[%s5 + $0x678] sm:$0xff]
  %v3505 = vld [vmem:[%s5 + $0x680] sm:$0xff]
  %v3506 = vld [vmem:[%s5 + $0x688] sm:$0xff]
  %v3507 = vld [vmem:[%s5 + $0x690] sm:$0xff]
  %v3508 = vld [vmem:[%s5 + $0x698] sm:$0xff]
  %v3509 = vld [vmem:[%s5 + $0x6a0] sm:$0xff]
  %v3510 = vld [vmem:[%s5 + $0x6a8] sm:$0xff]
  %v3511 = vld [vmem:[%s5 + $0x6b0] sm:$0xff]
  %v3512 = vld [vmem:[%s5 + $0x6b8] sm:$0xff]
  %v3513 = vld [vmem:[%s5 + $0x6c0] sm:$0xff]
  %v3514 = vld [vmem:[%s5 + $0x6c8] sm:$0xff]
  %v3515 = vld [vmem:[%s5 + $0x6d0] sm:$0xff]
  %v3516 = vld [vmem:[%s5 + $0x6d8] sm:$0xff]
  %v3517 = vld [vmem:[%s5 + $0x6e0] sm:$0xff]
  %v3518 = vld [vmem:[%s5 + $0x6e8] sm:$0xff]
  %v3519 = vld [vmem:[%s5 + $0x6f0] sm:$0xff]
  %v3520 = vld [vmem:[%s5 + $0x6f8] sm:$0xff]
  %v3521 = vld [vmem:[%s5 + $0x700] sm:$0xff]
  %v3522 = vld [vmem:[%s5 + $0x708] sm:$0xff]
  %v3523 = vld [vmem:[%s5 + $0x710] sm:$0xff]
  %v3524 = vld [vmem:[%s5 + $0x718] sm:$0xff]
  %v3525 = vld [vmem:[%s5 + $0x720] sm:$0xff]
  %v3526 = vld [vmem:[%s5 + $0x728] sm:$0xff]
  %v3527 = vld [vmem:[%s5 + $0x730] sm:$0xff]
  %v3528 = vld [vmem:[%s5 + $0x738] sm:$0xff]
  %v3529 = vld [vmem:[%s5 + $0x740] sm:$0xff]
  %v3530 = vld [vmem:[%s5 + $0x748] sm:$0xff]
  %v3531 = vld [vmem:[%s5 + $0x750] sm:$0xff]
  %v3532 = vld [vmem:[%s5 + $0x758] sm:$0xff]
  %v3533 = vld [vmem:[%s5 + $0x760] sm:$0xff]
  %v3534 = vld [vmem:[%s5 + $0x768] sm:$0xff]
  %v3535 = vld [vmem:[%s5 + $0x770] sm:$0xff]
  %v3536 = vld [vmem:[%s5 + $0x778] sm:$0xff]
  %v3537 = vld [vmem:[%s5 + $0x780] sm:$0xff]
  %v3538 = vld [vmem:[%s5 + $0x788] sm:$0xff]
  %v3539 = vld [vmem:[%s5 + $0x790] sm:$0xff]
  %v3540 = vld [vmem:[%s5 + $0x798] sm:$0xff]
  %v3541 = vld [vmem:[%s5 + $0x7a0] sm:$0xff]
  %v3542 = vld [vmem:[%s5 + $0x7a8] sm:$0xff]
  %v3543 = vld [vmem:[%s5 + $0x7b0] sm:$0xff]
  %v3544 = vld [vmem:[%s5 + $0x7b8] sm:$0xff]
  %v3545 = vld [vmem:[%s5 + $0x7c0] sm:$0xff]
  %v3546 = vld [vmem:[%s5 + $0x7c8] sm:$0xff]
  %v3547 = vld [vmem:[%s5 + $0x7d0] sm:$0xff]
  %v3548 = vld [vmem:[%s5 + $0x7d8] sm:$0xff]
  %v3549 = vld [vmem:[%s5 + $0x7e0] sm:$0xff]
  %v3550 = vld [vmem:[%s5 + $0x7e8] sm:$0xff]
  %v3551 = vld [vmem:[%s5 + $0x7f0] sm:$0xff]
  %v3552 = vld [vmem:[%s5 + $0x7f8] sm:$0xff]
  %v3553 = vld [vmem:[%s6] sm:$0xf]
  %v3555 = vperm.slane %v3553, 0
  %v3556 = vperm.slane %v3553, 1
  %v3557 = vperm.slane %v3553, 2
  %v3558 = vperm.slane %v3553, 3
  %v3819 = vunpack.c.l.b16 %v3297
  %v3820 = vunpack.c.h.b16 %v3297
  %v3821 = vunpack.c.l.b16 %v3298
  %v3822 = vunpack.c.h.b16 %v3298
  %v3823 = vunpack.c.l.b16 %v3299
  %v3824 = vunpack.c.h.b16 %v3299
  %v3825 = vunpack.c.l.b16 %v3300
  %v3826 = vunpack.c.h.b16 %v3300
  %v3827 = vunpack.c.l.b16 %v3301
  %v3828 = vunpack.c.h.b16 %v3301
  %v3829 = vunpack.c.l.b16 %v3302
  %v3830 = vunpack.c.h.b16 %v3302
  %v3831 = vunpack.c.l.b16 %v3303
  %v3832 = vunpack.c.h.b16 %v3303
  %v3833 = vunpack.c.l.b16 %v3304
  %v3834 = vunpack.c.h.b16 %v3304
  %v3835 = vunpack.c.l.b16 %v3305
  %v3836 = vunpack.c.h.b16 %v3305
  %v3837 = vunpack.c.l.b16 %v3306
  %v3838 = vunpack.c.h.b16 %v3306
  %v3839 = vunpack.c.l.b16 %v3307
  %v3840 = vunpack.c.h.b16 %v3307
  %v3841 = vunpack.c.l.b16 %v3308
  %v3842 = vunpack.c.h.b16 %v3308
  %v3843 = vunpack.c.l.b16 %v3309
  %v3844 = vunpack.c.h.b16 %v3309
  %v3845 = vunpack.c.l.b16 %v3310
  %v3846 = vunpack.c.h.b16 %v3310
  %v3847 = vunpack.c.l.b16 %v3311
  %v3848 = vunpack.c.h.b16 %v3311
  %v3849 = vunpack.c.l.b16 %v3312
  %v3850 = vunpack.c.h.b16 %v3312
  %v3851 = vunpack.c.l.b16 %v3313
  %v3852 = vunpack.c.h.b16 %v3313
  %v3853 = vunpack.c.l.b16 %v3314
  %v3854 = vunpack.c.h.b16 %v3314
  %v3855 = vunpack.c.l.b16 %v3315
  %v3856 = vunpack.c.h.b16 %v3315
  %v3857 = vunpack.c.l.b16 %v3316
  %v3858 = vunpack.c.h.b16 %v3316
  %v3859 = vunpack.c.l.b16 %v3317
  %v3860 = vunpack.c.h.b16 %v3317
  %v3861 = vunpack.c.l.b16 %v3318
  %v3862 = vunpack.c.h.b16 %v3318
  %v3863 = vunpack.c.l.b16 %v3319
  %v3864 = vunpack.c.h.b16 %v3319
  %v3865 = vunpack.c.l.b16 %v3320
  %v3866 = vunpack.c.h.b16 %v3320
  %v3867 = vunpack.c.l.b16 %v3321
  %v3868 = vunpack.c.h.b16 %v3321
  %v3869 = vunpack.c.l.b16 %v3322
  %v3870 = vunpack.c.h.b16 %v3322
  %v3871 = vunpack.c.l.b16 %v3323
  %v3872 = vunpack.c.h.b16 %v3323
  %v3873 = vunpack.c.l.b16 %v3324
  %v3874 = vunpack.c.h.b16 %v3324
  %v3875 = vunpack.c.l.b16 %v3325
  %v3876 = vunpack.c.h.b16 %v3325
  %v3877 = vunpack.c.l.b16 %v3326
  %v3878 = vunpack.c.h.b16 %v3326
  %v3879 = vunpack.c.l.b16 %v3327
  %v3880 = vunpack.c.h.b16 %v3327
  %v3881 = vunpack.c.l.b16 %v3328
  %v3882 = vunpack.c.h.b16 %v3328
  %v3883 = vunpack.c.l.b16 %v3329
  %v3884 = vunpack.c.h.b16 %v3329
  %v3885 = vunpack.c.l.b16 %v3330
  %v3886 = vunpack.c.h.b16 %v3330
  %v3887 = vunpack.c.l.b16 %v3331
  %v3888 = vunpack.c.h.b16 %v3331
  %v3889 = vunpack.c.l.b16 %v3332
  %v3890 = vunpack.c.h.b16 %v3332
  %v3891 = vunpack.c.l.b16 %v3333
  %v3892 = vunpack.c.h.b16 %v3333
  %v3893 = vunpack.c.l.b16 %v3334
  %v3894 = vunpack.c.h.b16 %v3334
  %v3895 = vunpack.c.l.b16 %v3335
  %v3896 = vunpack.c.h.b16 %v3335
  %v3897 = vunpack.c.l.b16 %v3336
  %v3898 = vunpack.c.h.b16 %v3336
  %v3899 = vunpack.c.l.b16 %v3337
  %v3900 = vunpack.c.h.b16 %v3337
  %v3901 = vunpack.c.l.b16 %v3338
  %v3902 = vunpack.c.h.b16 %v3338
  %v3903 = vunpack.c.l.b16 %v3339
  %v3904 = vunpack.c.h.b16 %v3339
  %v3905 = vunpack.c.l.b16 %v3340
  %v3906 = vunpack.c.h.b16 %v3340
  %v3907 = vunpack.c.l.b16 %v3341
  %v3908 = vunpack.c.h.b16 %v3341
  %v3909 = vunpack.c.l.b16 %v3342
  %v3910 = vunpack.c.h.b16 %v3342
  %v3911 = vunpack.c.l.b16 %v3343
  %v3912 = vunpack.c.h.b16 %v3343
  %v3913 = vunpack.c.l.b16 %v3344
  %v3914 = vunpack.c.h.b16 %v3344
  %v3915 = vunpack.c.l.b16 %v3345
  %v3916 = vunpack.c.h.b16 %v3345
  %v3917 = vunpack.c.l.b16 %v3346
  %v3918 = vunpack.c.h.b16 %v3346
  %v3919 = vunpack.c.l.b16 %v3347
  %v3920 = vunpack.c.h.b16 %v3347
  %v3921 = vunpack.c.l.b16 %v3348
  %v3922 = vunpack.c.h.b16 %v3348
  %v3923 = vunpack.c.l.b16 %v3349
  %v3924 = vunpack.c.h.b16 %v3349
  %v3925 = vunpack.c.l.b16 %v3350
  %v3926 = vunpack.c.h.b16 %v3350
  %v3927 = vunpack.c.l.b16 %v3351
  %v3928 = vunpack.c.h.b16 %v3351
  %v3929 = vunpack.c.l.b16 %v3352
  %v3930 = vunpack.c.h.b16 %v3352
  %v3931 = vunpack.c.l.b16 %v3353
  %v3932 = vunpack.c.h.b16 %v3353
  %v3933 = vunpack.c.l.b16 %v3354
  %v3934 = vunpack.c.h.b16 %v3354
  %v3935 = vunpack.c.l.b16 %v3355
  %v3936 = vunpack.c.h.b16 %v3355
  %v3937 = vunpack.c.l.b16 %v3356
  %v3938 = vunpack.c.h.b16 %v3356
  %v3939 = vunpack.c.l.b16 %v3357
  %v3940 = vunpack.c.h.b16 %v3357
  %v3941 = vunpack.c.l.b16 %v3358
  %v3942 = vunpack.c.h.b16 %v3358
  %v3943 = vunpack.c.l.b16 %v3359
  %v3944 = vunpack.c.h.b16 %v3359
  %v3945 = vunpack.c.l.b16 %v3360
  %v3946 = vunpack.c.h.b16 %v3360
  %v3947 = vunpack.c.l.b16 %v3361
  %v3948 = vunpack.c.h.b16 %v3361
  %v3949 = vunpack.c.l.b16 %v3362
  %v3950 = vunpack.c.h.b16 %v3362
  %v3951 = vunpack.c.l.b16 %v3363
  %v3952 = vunpack.c.h.b16 %v3363
  %v3953 = vunpack.c.l.b16 %v3364
  %v3954 = vunpack.c.h.b16 %v3364
  %v3955 = vunpack.c.l.b16 %v3365
  %v3956 = vunpack.c.h.b16 %v3365
  %v3957 = vunpack.c.l.b16 %v3366
  %v3958 = vunpack.c.h.b16 %v3366
  %v3959 = vunpack.c.l.b16 %v3367
  %v3960 = vunpack.c.h.b16 %v3367
  %v3961 = vunpack.c.l.b16 %v3368
  %v3962 = vunpack.c.h.b16 %v3368
  %v3963 = vunpack.c.l.b16 %v3369
  %v3964 = vunpack.c.h.b16 %v3369
  %v3965 = vunpack.c.l.b16 %v3370
  %v3966 = vunpack.c.h.b16 %v3370
  %v3967 = vunpack.c.l.b16 %v3371
  %v3968 = vunpack.c.h.b16 %v3371
  %v3969 = vunpack.c.l.b16 %v3372
  %v3970 = vunpack.c.h.b16 %v3372
  %v3971 = vunpack.c.l.b16 %v3373
  %v3972 = vunpack.c.h.b16 %v3373
  %v3973 = vunpack.c.l.b16 %v3374
  %v3974 = vunpack.c.h.b16 %v3374
  %v3975 = vunpack.c.l.b16 %v3375
  %v3976 = vunpack.c.h.b16 %v3375
  %v3977 = vunpack.c.l.b16 %v3376
  %v3978 = vunpack.c.h.b16 %v3376
  %v3979 = vunpack.c.l.b16 %v3377
  %v3980 = vunpack.c.h.b16 %v3377
  %v3981 = vunpack.c.l.b16 %v3378
  %v3982 = vunpack.c.h.b16 %v3378
  %v3983 = vunpack.c.l.b16 %v3379
  %v3984 = vunpack.c.h.b16 %v3379
  %v3985 = vunpack.c.l.b16 %v3380
  %v3986 = vunpack.c.h.b16 %v3380
  %v3987 = vunpack.c.l.b16 %v3381
  %v3988 = vunpack.c.h.b16 %v3381
  %v3989 = vunpack.c.l.b16 %v3382
  %v3990 = vunpack.c.h.b16 %v3382
  %v3991 = vunpack.c.l.b16 %v3383
  %v3992 = vunpack.c.h.b16 %v3383
  %v3993 = vunpack.c.l.b16 %v3384
  %v3994 = vunpack.c.h.b16 %v3384
  %v3995 = vunpack.c.l.b16 %v3385
  %v3996 = vunpack.c.h.b16 %v3385
  %v3997 = vunpack.c.l.b16 %v3386
  %v3998 = vunpack.c.h.b16 %v3386
  %v3999 = vunpack.c.l.b16 %v3387
  %v4000 = vunpack.c.h.b16 %v3387
  %v4001 = vunpack.c.l.b16 %v3388
  %v4002 = vunpack.c.h.b16 %v3388
  %v4003 = vunpack.c.l.b16 %v3389
  %v4004 = vunpack.c.h.b16 %v3389
  %v4005 = vunpack.c.l.b16 %v3390
  %v4006 = vunpack.c.h.b16 %v3390
  %v4007 = vunpack.c.l.b16 %v3391
  %v4008 = vunpack.c.h.b16 %v3391
  %v4009 = vunpack.c.l.b16 %v3392
  %v4010 = vunpack.c.h.b16 %v3392
  %v4011 = vunpack.c.l.b16 %v3393
  %v4012 = vunpack.c.h.b16 %v3393
  %v4013 = vunpack.c.l.b16 %v3394
  %v4014 = vunpack.c.h.b16 %v3394
  %v4015 = vunpack.c.l.b16 %v3395
  %v4016 = vunpack.c.h.b16 %v3395
  %v4017 = vunpack.c.l.b16 %v3396
  %v4018 = vunpack.c.h.b16 %v3396
  %v4019 = vunpack.c.l.b16 %v3397
  %v4020 = vunpack.c.h.b16 %v3397
  %v4021 = vunpack.c.l.b16 %v3398
  %v4022 = vunpack.c.h.b16 %v3398
  %v4023 = vunpack.c.l.b16 %v3399
  %v4024 = vunpack.c.h.b16 %v3399
  %v4025 = vunpack.c.l.b16 %v3400
  %v4026 = vunpack.c.h.b16 %v3400
  %v4027 = vunpack.c.l.b16 %v3401
  %v4028 = vunpack.c.h.b16 %v3401
  %v4029 = vunpack.c.l.b16 %v3402
  %v4030 = vunpack.c.h.b16 %v3402
  %v4031 = vunpack.c.l.b16 %v3403
  %v4032 = vunpack.c.h.b16 %v3403
  %v4033 = vunpack.c.l.b16 %v3404
  %v4034 = vunpack.c.h.b16 %v3404
  %v4035 = vunpack.c.l.b16 %v3405
  %v4036 = vunpack.c.h.b16 %v3405
  %v4037 = vunpack.c.l.b16 %v3406
  %v4038 = vunpack.c.h.b16 %v3406
  %v4039 = vunpack.c.l.b16 %v3407
  %v4040 = vunpack.c.h.b16 %v3407
  %v4041 = vunpack.c.l.b16 %v3408
  %v4042 = vunpack.c.h.b16 %v3408
  %v4043 = vunpack.c.l.b16 %v3409
  %v4044 = vunpack.c.h.b16 %v3409
  %v4045 = vunpack.c.l.b16 %v3410
  %v4046 = vunpack.c.h.b16 %v3410
  %v4047 = vunpack.c.l.b16 %v3411
  %v4048 = vunpack.c.h.b16 %v3411
  %v4049 = vunpack.c.l.b16 %v3412
  %v4050 = vunpack.c.h.b16 %v3412
  %v4051 = vunpack.c.l.b16 %v3413
  %v4052 = vunpack.c.h.b16 %v3413
  %v4053 = vunpack.c.l.b16 %v3414
  %v4054 = vunpack.c.h.b16 %v3414
  %v4055 = vunpack.c.l.b16 %v3415
  %v4056 = vunpack.c.h.b16 %v3415
  %v4057 = vunpack.c.l.b16 %v3416
  %v4058 = vunpack.c.h.b16 %v3416
  %v4059 = vunpack.c.l.b16 %v3417
  %v4060 = vunpack.c.h.b16 %v3417
  %v4061 = vunpack.c.l.b16 %v3418
  %v4062 = vunpack.c.h.b16 %v3418
  %v4063 = vunpack.c.l.b16 %v3419
  %v4064 = vunpack.c.h.b16 %v3419
  %v4065 = vunpack.c.l.b16 %v3420
  %v4066 = vunpack.c.h.b16 %v3420
  %v4067 = vunpack.c.l.b16 %v3421
  %v4068 = vunpack.c.h.b16 %v3421
  %v4069 = vunpack.c.l.b16 %v3422
  %v4070 = vunpack.c.h.b16 %v3422
  %v4071 = vunpack.c.l.b16 %v3423
  %v4072 = vunpack.c.h.b16 %v3423
  %v4073 = vunpack.c.l.b16 %v3424
  %v4074 = vunpack.c.h.b16 %v3424
  %v4075 = vunpack.c.l.b16 %v3425
  %v4076 = vunpack.c.h.b16 %v3425
  %v4077 = vunpack.c.l.b16 %v3426
  %v4078 = vunpack.c.h.b16 %v3426
  %v4079 = vunpack.c.l.b16 %v3427
  %v4080 = vunpack.c.h.b16 %v3427
  %v4081 = vunpack.c.l.b16 %v3428
  %v4082 = vunpack.c.h.b16 %v3428
  %v4083 = vunpack.c.l.b16 %v3429
  %v4084 = vunpack.c.h.b16 %v3429
  %v4085 = vunpack.c.l.b16 %v3430
  %v4086 = vunpack.c.h.b16 %v3430
  %v4087 = vunpack.c.l.b16 %v3431
  %v4088 = vunpack.c.h.b16 %v3431
  %v4089 = vunpack.c.l.b16 %v3432
  %v4090 = vunpack.c.h.b16 %v3432
  %v4091 = vunpack.c.l.b16 %v3433
  %v4092 = vunpack.c.h.b16 %v3433
  %v4093 = vunpack.c.l.b16 %v3434
  %v4094 = vunpack.c.h.b16 %v3434
  %v4095 = vunpack.c.l.b16 %v3435
  %v4096 = vunpack.c.h.b16 %v3435
  %v4097 = vunpack.c.l.b16 %v3436
  %v4098 = vunpack.c.h.b16 %v3436
  %v4099 = vunpack.c.l.b16 %v3437
  %v4100 = vunpack.c.h.b16 %v3437
  %v4101 = vunpack.c.l.b16 %v3438
  %v4102 = vunpack.c.h.b16 %v3438
  %v4103 = vunpack.c.l.b16 %v3439
  %v4104 = vunpack.c.h.b16 %v3439
  %v4105 = vunpack.c.l.b16 %v3440
  %v4106 = vunpack.c.h.b16 %v3440
  %v4107 = vunpack.c.l.b16 %v3441
  %v4108 = vunpack.c.h.b16 %v3441
  %v4109 = vunpack.c.l.b16 %v3442
  %v4110 = vunpack.c.h.b16 %v3442
  %v4111 = vunpack.c.l.b16 %v3443
  %v4112 = vunpack.c.h.b16 %v3443
  %v4113 = vunpack.c.l.b16 %v3444
  %v4114 = vunpack.c.h.b16 %v3444
  %v4115 = vunpack.c.l.b16 %v3445
  %v4116 = vunpack.c.h.b16 %v3445
  %v4117 = vunpack.c.l.b16 %v3446
  %v4118 = vunpack.c.h.b16 %v3446
  %v4119 = vunpack.c.l.b16 %v3447
  %v4120 = vunpack.c.h.b16 %v3447
  %v4121 = vunpack.c.l.b16 %v3448
  %v4122 = vunpack.c.h.b16 %v3448
  %v4123 = vunpack.c.l.b16 %v3449
  %v4124 = vunpack.c.h.b16 %v3449
  %v4125 = vunpack.c.l.b16 %v3450
  %v4126 = vunpack.c.h.b16 %v3450
  %v4127 = vunpack.c.l.b16 %v3451
  %v4128 = vunpack.c.h.b16 %v3451
  %v4129 = vunpack.c.l.b16 %v3452
  %v4130 = vunpack.c.h.b16 %v3452
  %v4131 = vunpack.c.l.b16 %v3453
  %v4132 = vunpack.c.h.b16 %v3453
  %v4133 = vunpack.c.l.b16 %v3454
  %v4134 = vunpack.c.h.b16 %v3454
  %v4135 = vunpack.c.l.b16 %v3455
  %v4136 = vunpack.c.h.b16 %v3455
  %v4137 = vunpack.c.l.b16 %v3456
  %v4138 = vunpack.c.h.b16 %v3456
  %v4139 = vunpack.c.l.b16 %v3457
  %v4140 = vunpack.c.h.b16 %v3457
  %v4141 = vunpack.c.l.b16 %v3458
  %v4142 = vunpack.c.h.b16 %v3458
  %v4143 = vunpack.c.l.b16 %v3459
  %v4144 = vunpack.c.h.b16 %v3459
  %v4145 = vunpack.c.l.b16 %v3460
  %v4146 = vunpack.c.h.b16 %v3460
  %v4147 = vunpack.c.l.b16 %v3461
  %v4148 = vunpack.c.h.b16 %v3461
  %v4149 = vunpack.c.l.b16 %v3462
  %v4150 = vunpack.c.h.b16 %v3462
  %v4151 = vunpack.c.l.b16 %v3463
  %v4152 = vunpack.c.h.b16 %v3463
  %v4153 = vunpack.c.l.b16 %v3464
  %v4154 = vunpack.c.h.b16 %v3464
  %v4155 = vunpack.c.l.b16 %v3465
  %v4156 = vunpack.c.h.b16 %v3465
  %v4157 = vunpack.c.l.b16 %v3466
  %v4158 = vunpack.c.h.b16 %v3466
  %v4159 = vunpack.c.l.b16 %v3467
  %v4160 = vunpack.c.h.b16 %v3467
  %v4161 = vunpack.c.l.b16 %v3468
  %v4162 = vunpack.c.h.b16 %v3468
  %v4163 = vunpack.c.l.b16 %v3469
  %v4164 = vunpack.c.h.b16 %v3469
  %v4165 = vunpack.c.l.b16 %v3470
  %v4166 = vunpack.c.h.b16 %v3470
  %v4167 = vunpack.c.l.b16 %v3471
  %v4168 = vunpack.c.h.b16 %v3471
  %v4169 = vunpack.c.l.b16 %v3472
  %v4170 = vunpack.c.h.b16 %v3472
  %v4171 = vunpack.c.l.b16 %v3473
  %v4172 = vunpack.c.h.b16 %v3473
  %v4173 = vunpack.c.l.b16 %v3474
  %v4174 = vunpack.c.h.b16 %v3474
  %v4175 = vunpack.c.l.b16 %v3475
  %v4176 = vunpack.c.h.b16 %v3475
  %v4177 = vunpack.c.l.b16 %v3476
  %v4178 = vunpack.c.h.b16 %v3476
  %v4179 = vunpack.c.l.b16 %v3477
  %v4180 = vunpack.c.h.b16 %v3477
  %v4181 = vunpack.c.l.b16 %v3478
  %v4182 = vunpack.c.h.b16 %v3478
  %v4183 = vunpack.c.l.b16 %v3479
  %v4184 = vunpack.c.h.b16 %v3479
  %v4185 = vunpack.c.l.b16 %v3480
  %v4186 = vunpack.c.h.b16 %v3480
  %v4187 = vunpack.c.l.b16 %v3481
  %v4188 = vunpack.c.h.b16 %v3481
  %v4189 = vunpack.c.l.b16 %v3482
  %v4190 = vunpack.c.h.b16 %v3482
  %v4191 = vunpack.c.l.b16 %v3483
  %v4192 = vunpack.c.h.b16 %v3483
  %v4193 = vunpack.c.l.b16 %v3484
  %v4194 = vunpack.c.h.b16 %v3484
  %v4195 = vunpack.c.l.b16 %v3485
  %v4196 = vunpack.c.h.b16 %v3485
  %v4197 = vunpack.c.l.b16 %v3486
  %v4198 = vunpack.c.h.b16 %v3486
  %v4199 = vunpack.c.l.b16 %v3487
  %v4200 = vunpack.c.h.b16 %v3487
  %v4201 = vunpack.c.l.b16 %v3488
  %v4202 = vunpack.c.h.b16 %v3488
  %v4203 = vunpack.c.l.b16 %v3489
  %v4204 = vunpack.c.h.b16 %v3489
  %v4205 = vunpack.c.l.b16 %v3490
  %v4206 = vunpack.c.h.b16 %v3490
  %v4207 = vunpack.c.l.b16 %v3491
  %v4208 = vunpack.c.h.b16 %v3491
  %v4209 = vunpack.c.l.b16 %v3492
  %v4210 = vunpack.c.h.b16 %v3492
  %v4211 = vunpack.c.l.b16 %v3493
  %v4212 = vunpack.c.h.b16 %v3493
  %v4213 = vunpack.c.l.b16 %v3494
  %v4214 = vunpack.c.h.b16 %v3494
  %v4215 = vunpack.c.l.b16 %v3495
  %v4216 = vunpack.c.h.b16 %v3495
  %v4217 = vunpack.c.l.b16 %v3496
  %v4218 = vunpack.c.h.b16 %v3496
  %v4219 = vunpack.c.l.b16 %v3497
  %v4220 = vunpack.c.h.b16 %v3497
  %v4221 = vunpack.c.l.b16 %v3498
  %v4222 = vunpack.c.h.b16 %v3498
  %v4223 = vunpack.c.l.b16 %v3499
  %v4224 = vunpack.c.h.b16 %v3499
  %v4225 = vunpack.c.l.b16 %v3500
  %v4226 = vunpack.c.h.b16 %v3500
  %v4227 = vunpack.c.l.b16 %v3501
  %v4228 = vunpack.c.h.b16 %v3501
  %v4229 = vunpack.c.l.b16 %v3502
  %v4230 = vunpack.c.h.b16 %v3502
  %v4231 = vunpack.c.l.b16 %v3503
  %v4232 = vunpack.c.h.b16 %v3503
  %v4233 = vunpack.c.l.b16 %v3504
  %v4234 = vunpack.c.h.b16 %v3504
  %v4235 = vunpack.c.l.b16 %v3505
  %v4236 = vunpack.c.h.b16 %v3505
  %v4237 = vunpack.c.l.b16 %v3506
  %v4238 = vunpack.c.h.b16 %v3506
  %v4239 = vunpack.c.l.b16 %v3507
  %v4240 = vunpack.c.h.b16 %v3507
  %v4241 = vunpack.c.l.b16 %v3508
  %v4242 = vunpack.c.h.b16 %v3508
  %v4243 = vunpack.c.l.b16 %v3509
  %v4244 = vunpack.c.h.b16 %v3509
  %v4245 = vunpack.c.l.b16 %v3510
  %v4246 = vunpack.c.h.b16 %v3510
  %v4247 = vunpack.c.l.b16 %v3511
  %v4248 = vunpack.c.h.b16 %v3511
  %v4249 = vunpack.c.l.b16 %v3512
  %v4250 = vunpack.c.h.b16 %v3512
  %v4251 = vunpack.c.l.b16 %v3513
  %v4252 = vunpack.c.h.b16 %v3513
  %v4253 = vunpack.c.l.b16 %v3514
  %v4254 = vunpack.c.h.b16 %v3514
  %v4255 = vunpack.c.l.b16 %v3515
  %v4256 = vunpack.c.h.b16 %v3515
  %v4257 = vunpack.c.l.b16 %v3516
  %v4258 = vunpack.c.h.b16 %v3516
  %v4259 = vunpack.c.l.b16 %v3517
  %v4260 = vunpack.c.h.b16 %v3517
  %v4261 = vunpack.c.l.b16 %v3518
  %v4262 = vunpack.c.h.b16 %v3518
  %v4263 = vunpack.c.l.b16 %v3519
  %v4264 = vunpack.c.h.b16 %v3519
  %v4265 = vunpack.c.l.b16 %v3520
  %v4266 = vunpack.c.h.b16 %v3520
  %v4267 = vunpack.c.l.b16 %v3521
  %v4268 = vunpack.c.h.b16 %v3521
  %v4269 = vunpack.c.l.b16 %v3522
  %v4270 = vunpack.c.h.b16 %v3522
  %v4271 = vunpack.c.l.b16 %v3523
  %v4272 = vunpack.c.h.b16 %v3523
  %v4273 = vunpack.c.l.b16 %v3524
  %v4274 = vunpack.c.h.b16 %v3524
  %v4275 = vunpack.c.l.b16 %v3525
  %v4276 = vunpack.c.h.b16 %v3525
  %v4277 = vunpack.c.l.b16 %v3526
  %v4278 = vunpack.c.h.b16 %v3526
  %v4279 = vunpack.c.l.b16 %v3527
  %v4280 = vunpack.c.h.b16 %v3527
  %v4281 = vunpack.c.l.b16 %v3528
  %v4282 = vunpack.c.h.b16 %v3528
  %v4283 = vunpack.c.l.b16 %v3529
  %v4284 = vunpack.c.h.b16 %v3529
  %v4285 = vunpack.c.l.b16 %v3530
  %v4286 = vunpack.c.h.b16 %v3530
  %v4287 = vunpack.c.l.b16 %v3531
  %v4288 = vunpack.c.h.b16 %v3531
  %v4289 = vunpack.c.l.b16 %v3532
  %v4290 = vunpack.c.h.b16 %v3532
  %v4291 = vunpack.c.l.b16 %v3533
  %v4292 = vunpack.c.h.b16 %v3533
  %v4293 = vunpack.c.l.b16 %v3534
  %v4294 = vunpack.c.h.b16 %v3534
  %v4295 = vunpack.c.l.b16 %v3535
  %v4296 = vunpack.c.h.b16 %v3535
  %v4297 = vunpack.c.l.b16 %v3536
  %v4298 = vunpack.c.h.b16 %v3536
  %v4299 = vunpack.c.l.b16 %v3537
  %v4300 = vunpack.c.h.b16 %v3537
  %v4301 = vunpack.c.l.b16 %v3538
  %v4302 = vunpack.c.h.b16 %v3538
  %v4303 = vunpack.c.l.b16 %v3539
  %v4304 = vunpack.c.h.b16 %v3539
  %v4305 = vunpack.c.l.b16 %v3540
  %v4306 = vunpack.c.h.b16 %v3540
  %v4307 = vunpack.c.l.b16 %v3541
  %v4308 = vunpack.c.h.b16 %v3541
  %v4309 = vunpack.c.l.b16 %v3542
  %v4310 = vunpack.c.h.b16 %v3542
  %v4311 = vunpack.c.l.b16 %v3543
  %v4312 = vunpack.c.h.b16 %v3543
  %v4313 = vunpack.c.l.b16 %v3544
  %v4314 = vunpack.c.h.b16 %v3544
  %v4315 = vunpack.c.l.b16 %v3545
  %v4316 = vunpack.c.h.b16 %v3545
  %v4317 = vunpack.c.l.b16 %v3546
  %v4318 = vunpack.c.h.b16 %v3546
  %v4319 = vunpack.c.l.b16 %v3547
  %v4320 = vunpack.c.h.b16 %v3547
  %v4321 = vunpack.c.l.b16 %v3548
  %v4322 = vunpack.c.h.b16 %v3548
  %v4323 = vunpack.c.l.b16 %v3549
  %v4324 = vunpack.c.h.b16 %v3549
  %v4325 = vunpack.c.l.b16 %v3550
  %v4326 = vunpack.c.h.b16 %v3550
  %v4327 = vunpack.c.l.b16 %v3551
  %v4328 = vunpack.c.h.b16 %v3551
  %v4329 = vunpack.c.l.b16 %v3552
  %v4330 = vunpack.c.h.b16 %v3552
  %v4331 = vpack.c.b16 %v3823, %v3819
  %v4332 = vpack.c.b16 %v3824, %v3820
  %v4333 = vpack.c.b16 %v3825, %v3821
  %v4334 = vpack.c.b16 %v3826, %v3822
  %v4335 = vpack.c.b16 %v3831, %v3827
  %v4336 = vpack.c.b16 %v3832, %v3828
  %v4337 = vpack.c.b16 %v3833, %v3829
  %v4338 = vpack.c.b16 %v3834, %v3830
  %v4339 = vpack.c.b16 %v3839, %v3835
  %v4340 = vpack.c.b16 %v3840, %v3836
  %v4341 = vpack.c.b16 %v3841, %v3837
  %v4342 = vpack.c.b16 %v3842, %v3838
  %v4343 = vpack.c.b16 %v3847, %v3843
  %v4344 = vpack.c.b16 %v3848, %v3844
  %v4345 = vpack.c.b16 %v3849, %v3845
  %v4346 = vpack.c.b16 %v3850, %v3846
  %v4347 = vpack.c.b16 %v3855, %v3851
  %v4348 = vpack.c.b16 %v3856, %v3852
  %v4349 = vpack.c.b16 %v3857, %v3853
  %v4350 = vpack.c.b16 %v3858, %v3854
  %v4351 = vpack.c.b16 %v3863, %v3859
  %v4352 = vpack.c.b16 %v3864, %v3860
  %v4353 = vpack.c.b16 %v3865, %v3861
  %v4354 = vpack.c.b16 %v3866, %v3862
  %v4355 = vpack.c.b16 %v3871, %v3867
  %v4356 = vpack.c.b16 %v3872, %v3868
  %v4357 = vpack.c.b16 %v3873, %v3869
  %v4358 = vpack.c.b16 %v3874, %v3870
  %v4359 = vpack.c.b16 %v3879, %v3875
  %v4360 = vpack.c.b16 %v3880, %v3876
  %v4361 = vpack.c.b16 %v3881, %v3877
  %v4362 = vpack.c.b16 %v3882, %v3878
  %v4363 = vpack.c.b16 %v3887, %v3883
  %v4364 = vpack.c.b16 %v3888, %v3884
  %v4365 = vpack.c.b16 %v3889, %v3885
  %v4366 = vpack.c.b16 %v3890, %v3886
  %v4367 = vpack.c.b16 %v3895, %v3891
  %v4368 = vpack.c.b16 %v3896, %v3892
  %v4369 = vpack.c.b16 %v3897, %v3893
  %v4370 = vpack.c.b16 %v3898, %v3894
  %v4371 = vpack.c.b16 %v3903, %v3899
  %v4372 = vpack.c.b16 %v3904, %v3900
  %v4373 = vpack.c.b16 %v3905, %v3901
  %v4374 = vpack.c.b16 %v3906, %v3902
  %v4375 = vpack.c.b16 %v3911, %v3907
  %v4376 = vpack.c.b16 %v3912, %v3908
  %v4377 = vpack.c.b16 %v3913, %v3909
  %v4378 = vpack.c.b16 %v3914, %v3910
  %v4379 = vpack.c.b16 %v3919, %v3915
  %v4380 = vpack.c.b16 %v3920, %v3916
  %v4381 = vpack.c.b16 %v3921, %v3917
  %v4382 = vpack.c.b16 %v3922, %v3918
  %v4383 = vpack.c.b16 %v3927, %v3923
  %v4384 = vpack.c.b16 %v3928, %v3924
  %v4385 = vpack.c.b16 %v3929, %v3925
  %v4386 = vpack.c.b16 %v3930, %v3926
  %v4387 = vpack.c.b16 %v3935, %v3931
  %v4388 = vpack.c.b16 %v3936, %v3932
  %v4389 = vpack.c.b16 %v3937, %v3933
  %v4390 = vpack.c.b16 %v3938, %v3934
  %v4391 = vpack.c.b16 %v3943, %v3939
  %v4392 = vpack.c.b16 %v3944, %v3940
  %v4393 = vpack.c.b16 %v3945, %v3941
  %v4394 = vpack.c.b16 %v3946, %v3942
  %v4395 = vpack.c.b16 %v3951, %v3947
  %v4396 = vpack.c.b16 %v3952, %v3948
  %v4397 = vpack.c.b16 %v3953, %v3949
  %v4398 = vpack.c.b16 %v3954, %v3950
  %v4399 = vpack.c.b16 %v3959, %v3955
  %v4400 = vpack.c.b16 %v3960, %v3956
  %v4401 = vpack.c.b16 %v3961, %v3957
  %v4402 = vpack.c.b16 %v3962, %v3958
  %v4403 = vpack.c.b16 %v3967, %v3963
  %v4404 = vpack.c.b16 %v3968, %v3964
  %v4405 = vpack.c.b16 %v3969, %v3965
  %v4406 = vpack.c.b16 %v3970, %v3966
  %v4407 = vpack.c.b16 %v3975, %v3971
  %v4408 = vpack.c.b16 %v3976, %v3972
  %v4409 = vpack.c.b16 %v3977, %v3973
  %v4410 = vpack.c.b16 %v3978, %v3974
  %v4411 = vpack.c.b16 %v3983, %v3979
  %v4412 = vpack.c.b16 %v3984, %v3980
  %v4413 = vpack.c.b16 %v3985, %v3981
  %v4414 = vpack.c.b16 %v3986, %v3982
  %v4415 = vpack.c.b16 %v3991, %v3987
  %v4416 = vpack.c.b16 %v3992, %v3988
  %v4417 = vpack.c.b16 %v3993, %v3989
  %v4418 = vpack.c.b16 %v3994, %v3990
  %v4419 = vpack.c.b16 %v3999, %v3995
  %v4420 = vpack.c.b16 %v4000, %v3996
  %v4421 = vpack.c.b16 %v4001, %v3997
  %v4422 = vpack.c.b16 %v4002, %v3998
  %v4423 = vpack.c.b16 %v4007, %v4003
  %v4424 = vpack.c.b16 %v4008, %v4004
  %v4425 = vpack.c.b16 %v4009, %v4005
  %v4426 = vpack.c.b16 %v4010, %v4006
  %v4427 = vpack.c.b16 %v4015, %v4011
  %v4428 = vpack.c.b16 %v4016, %v4012
  %v4429 = vpack.c.b16 %v4017, %v4013
  %v4430 = vpack.c.b16 %v4018, %v4014
  %v4431 = vpack.c.b16 %v4023, %v4019
  %v4432 = vpack.c.b16 %v4024, %v4020
  %v4433 = vpack.c.b16 %v4025, %v4021
  %v4434 = vpack.c.b16 %v4026, %v4022
  %v4435 = vpack.c.b16 %v4031, %v4027
  %v4436 = vpack.c.b16 %v4032, %v4028
  %v4437 = vpack.c.b16 %v4033, %v4029
  %v4438 = vpack.c.b16 %v4034, %v4030
  %v4439 = vpack.c.b16 %v4039, %v4035
  %v4440 = vpack.c.b16 %v4040, %v4036
  %v4441 = vpack.c.b16 %v4041, %v4037
  %v4442 = vpack.c.b16 %v4042, %v4038
  %v4443 = vpack.c.b16 %v4047, %v4043
  %v4444 = vpack.c.b16 %v4048, %v4044
  %v4445 = vpack.c.b16 %v4049, %v4045
  %v4446 = vpack.c.b16 %v4050, %v4046
  %v4447 = vpack.c.b16 %v4055, %v4051
  %v4448 = vpack.c.b16 %v4056, %v4052
  %v4449 = vpack.c.b16 %v4057, %v4053
  %v4450 = vpack.c.b16 %v4058, %v4054
  %v4451 = vpack.c.b16 %v4063, %v4059
  %v4452 = vpack.c.b16 %v4064, %v4060
  %v4453 = vpack.c.b16 %v4065, %v4061
  %v4454 = vpack.c.b16 %v4066, %v4062
  %v4455 = vpack.c.b16 %v4071, %v4067
  %v4456 = vpack.c.b16 %v4072, %v4068
  %v4457 = vpack.c.b16 %v4073, %v4069
  %v4458 = vpack.c.b16 %v4074, %v4070
  %v4459 = vpack.c.b16 %v4079, %v4075
  %v4460 = vpack.c.b16 %v4080, %v4076
  %v4461 = vpack.c.b16 %v4081, %v4077
  %v4462 = vpack.c.b16 %v4082, %v4078
  %v4463 = vpack.c.b16 %v4087, %v4083
  %v4464 = vpack.c.b16 %v4088, %v4084
  %v4465 = vpack.c.b16 %v4089, %v4085
  %v4466 = vpack.c.b16 %v4090, %v4086
  %v4467 = vpack.c.b16 %v4095, %v4091
  %v4468 = vpack.c.b16 %v4096, %v4092
  %v4469 = vpack.c.b16 %v4097, %v4093
  %v4470 = vpack.c.b16 %v4098, %v4094
  %v4471 = vpack.c.b16 %v4103, %v4099
  %v4472 = vpack.c.b16 %v4104, %v4100
  %v4473 = vpack.c.b16 %v4105, %v4101
  %v4474 = vpack.c.b16 %v4106, %v4102
  %v4475 = vpack.c.b16 %v4111, %v4107
  %v4476 = vpack.c.b16 %v4112, %v4108
  %v4477 = vpack.c.b16 %v4113, %v4109
  %v4478 = vpack.c.b16 %v4114, %v4110
  %v4479 = vpack.c.b16 %v4119, %v4115
  %v4480 = vpack.c.b16 %v4120, %v4116
  %v4481 = vpack.c.b16 %v4121, %v4117
  %v4482 = vpack.c.b16 %v4122, %v4118
  %v4483 = vpack.c.b16 %v4127, %v4123
  %v4484 = vpack.c.b16 %v4128, %v4124
  %v4485 = vpack.c.b16 %v4129, %v4125
  %v4486 = vpack.c.b16 %v4130, %v4126
  %v4487 = vpack.c.b16 %v4135, %v4131
  %v4488 = vpack.c.b16 %v4136, %v4132
  %v4489 = vpack.c.b16 %v4137, %v4133
  %v4490 = vpack.c.b16 %v4138, %v4134
  %v4491 = vpack.c.b16 %v4143, %v4139
  %v4492 = vpack.c.b16 %v4144, %v4140
  %v4493 = vpack.c.b16 %v4145, %v4141
  %v4494 = vpack.c.b16 %v4146, %v4142
  %v4495 = vpack.c.b16 %v4151, %v4147
  %v4496 = vpack.c.b16 %v4152, %v4148
  %v4497 = vpack.c.b16 %v4153, %v4149
  %v4498 = vpack.c.b16 %v4154, %v4150
  %v4499 = vpack.c.b16 %v4159, %v4155
  %v4500 = vpack.c.b16 %v4160, %v4156
  %v4501 = vpack.c.b16 %v4161, %v4157
  %v4502 = vpack.c.b16 %v4162, %v4158
  %v4503 = vpack.c.b16 %v4167, %v4163
  %v4504 = vpack.c.b16 %v4168, %v4164
  %v4505 = vpack.c.b16 %v4169, %v4165
  %v4506 = vpack.c.b16 %v4170, %v4166
  %v4507 = vpack.c.b16 %v4175, %v4171
  %v4508 = vpack.c.b16 %v4176, %v4172
  %v4509 = vpack.c.b16 %v4177, %v4173
  %v4510 = vpack.c.b16 %v4178, %v4174
  %v4511 = vpack.c.b16 %v4183, %v4179
  %v4512 = vpack.c.b16 %v4184, %v4180
  %v4513 = vpack.c.b16 %v4185, %v4181
  %v4514 = vpack.c.b16 %v4186, %v4182
  %v4515 = vpack.c.b16 %v4191, %v4187
  %v4516 = vpack.c.b16 %v4192, %v4188
  %v4517 = vpack.c.b16 %v4193, %v4189
  %v4518 = vpack.c.b16 %v4194, %v4190
  %v4519 = vpack.c.b16 %v4199, %v4195
  %v4520 = vpack.c.b16 %v4200, %v4196
  %v4521 = vpack.c.b16 %v4201, %v4197
  %v4522 = vpack.c.b16 %v4202, %v4198
  %v4523 = vpack.c.b16 %v4207, %v4203
  %v4524 = vpack.c.b16 %v4208, %v4204
  %v4525 = vpack.c.b16 %v4209, %v4205
  %v4526 = vpack.c.b16 %v4210, %v4206
  %v4527 = vpack.c.b16 %v4215, %v4211
  %v4528 = vpack.c.b16 %v4216, %v4212
  %v4529 = vpack.c.b16 %v4217, %v4213
  %v4530 = vpack.c.b16 %v4218, %v4214
  %v4531 = vpack.c.b16 %v4223, %v4219
  %v4532 = vpack.c.b16 %v4224, %v4220
  %v4533 = vpack.c.b16 %v4225, %v4221
  %v4534 = vpack.c.b16 %v4226, %v4222
  %v4535 = vpack.c.b16 %v4231, %v4227
  %v4536 = vpack.c.b16 %v4232, %v4228
  %v4537 = vpack.c.b16 %v4233, %v4229
  %v4538 = vpack.c.b16 %v4234, %v4230
  %v4539 = vpack.c.b16 %v4239, %v4235
  %v4540 = vpack.c.b16 %v4240, %v4236
  %v4541 = vpack.c.b16 %v4241, %v4237
  %v4542 = vpack.c.b16 %v4242, %v4238
  %v4543 = vpack.c.b16 %v4247, %v4243
  %v4544 = vpack.c.b16 %v4248, %v4244
  %v4545 = vpack.c.b16 %v4249, %v4245
  %v4546 = vpack.c.b16 %v4250, %v4246
  %v4547 = vpack.c.b16 %v4255, %v4251
  %v4548 = vpack.c.b16 %v4256, %v4252
  %v4549 = vpack.c.b16 %v4257, %v4253
  %v4550 = vpack.c.b16 %v4258, %v4254
  %v4551 = vpack.c.b16 %v4263, %v4259
  %v4552 = vpack.c.b16 %v4264, %v4260
  %v4553 = vpack.c.b16 %v4265, %v4261
  %v4554 = vpack.c.b16 %v4266, %v4262
  %v4555 = vpack.c.b16 %v4271, %v4267
  %v4556 = vpack.c.b16 %v4272, %v4268
  %v4557 = vpack.c.b16 %v4273, %v4269
  %v4558 = vpack.c.b16 %v4274, %v4270
  %v4559 = vpack.c.b16 %v4279, %v4275
  %v4560 = vpack.c.b16 %v4280, %v4276
  %v4561 = vpack.c.b16 %v4281, %v4277
  %v4562 = vpack.c.b16 %v4282, %v4278
  %v4563 = vpack.c.b16 %v4287, %v4283
  %v4564 = vpack.c.b16 %v4288, %v4284
  %v4565 = vpack.c.b16 %v4289, %v4285
  %v4566 = vpack.c.b16 %v4290, %v4286
  %v4567 = vpack.c.b16 %v4295, %v4291
  %v4568 = vpack.c.b16 %v4296, %v4292
  %v4569 = vpack.c.b16 %v4297, %v4293
  %v4570 = vpack.c.b16 %v4298, %v4294
  %v4571 = vpack.c.b16 %v4303, %v4299
  %v4572 = vpack.c.b16 %v4304, %v4300
  %v4573 = vpack.c.b16 %v4305, %v4301
  %v4574 = vpack.c.b16 %v4306, %v4302
  %v4575 = vpack.c.b16 %v4311, %v4307
  %v4576 = vpack.c.b16 %v4312, %v4308
  %v4577 = vpack.c.b16 %v4313, %v4309
  %v4578 = vpack.c.b16 %v4314, %v4310
  %v4579 = vpack.c.b16 %v4319, %v4315
  %v4580 = vpack.c.b16 %v4320, %v4316
  %v4581 = vpack.c.b16 %v4321, %v4317
  %v4582 = vpack.c.b16 %v4322, %v4318
  %v4583 = vpack.c.b16 %v4327, %v4323
  %v4584 = vpack.c.b16 %v4328, %v4324
  %v4585 = vpack.c.b16 %v4329, %v4325
  %v4586 = vpack.c.b16 %v4330, %v4326
  %4843 = vmatpush.bf16.msra.mxu0 %v4359
  %4844 = vmatpush.bf16.msra.mxu0 %v4355
  %4845 = vmatpush.bf16.msra.mxu0 %v4351
  %4846 = vmatpush.bf16.msra.mxu0 %v4347
  %4847 = vmatpush.bf16.msra.mxu0 %v4343
  %4848 = vmatpush.bf16.msra.mxu0 %v4339
  %4849 = vmatpush.bf16.msra.mxu0 %v4335
  %4850 = vmatpush.bf16.msra.mxu0 %v4331
  %4851 = vmatmul.bf16.gmra.mxu0 %v3289
  %v4852 = vpop.f32.mrf.mxu0
  %v4853 = vadd.f32 %v3555, %v4852
  %v4854 = vpop.f32.mrf.mxu0
  %v4855 = vadd.f32 %v3555, %v4854
  %4856 = vdwg.mxu0
  %4857 = vmatpush.bf16.msra.mxu0 %v4391
  %4858 = vmatpush.bf16.msra.mxu0 %v4387
  %4859 = vmatpush.bf16.msra.mxu0 %v4383
  %4860 = vmatpush.bf16.msra.mxu0 %v4379
  %4861 = vmatpush.bf16.msra.mxu0 %v4375
  %4862 = vmatpush.bf16.msra.mxu0 %v4371
  %4863 = vmatpush.bf16.msra.mxu0 %v4367
  %4864 = vmatpush.bf16.msra.mxu0 %v4363
  %4865 = vmatmul.bf16.gmra.mxu0 %v3290
  %v4866 = vpop.f32.mrf.mxu0
  %v4867 = vadd.f32 %v4853, %v4866
  %v4868 = vpop.f32.mrf.mxu0
  %v4869 = vadd.f32 %v4855, %v4868
  %4870 = vdwg.mxu0
  %4871 = vmatpush.bf16.msra.mxu0 %v4423
  %4872 = vmatpush.bf16.msra.mxu0 %v4419
  %4873 = vmatpush.bf16.msra.mxu0 %v4415
  %4874 = vmatpush.bf16.msra.mxu0 %v4411
  %4875 = vmatpush.bf16.msra.mxu0 %v4407
  %4876 = vmatpush.bf16.msra.mxu0 %v4403
  %4877 = vmatpush.bf16.msra.mxu0 %v4399
  %4878 = vmatpush.bf16.msra.mxu0 %v4395
  %4879 = vmatmul.bf16.gmra.mxu0 %v3291
  %v4880 = vpop.f32.mrf.mxu0
  %v4881 = vadd.f32 %v4867, %v4880
  %v4882 = vpop.f32.mrf.mxu0
  %v4883 = vadd.f32 %v4869, %v4882
  %4884 = vdwg.mxu0
  %4885 = vmatpush.bf16.msra.mxu0 %v4455
  %4886 = vmatpush.bf16.msra.mxu0 %v4451
  %4887 = vmatpush.bf16.msra.mxu0 %v4447
  %4888 = vmatpush.bf16.msra.mxu0 %v4443
  %4889 = vmatpush.bf16.msra.mxu0 %v4439
  %4890 = vmatpush.bf16.msra.mxu0 %v4435
  %4891 = vmatpush.bf16.msra.mxu0 %v4431
  %4892 = vmatpush.bf16.msra.mxu0 %v4427
  %4893 = vmatmul.bf16.gmra.mxu0 %v3292
  %v4894 = vpop.f32.mrf.mxu0
  %v4895 = vadd.f32 %v4881, %v4894
  %v4896 = vpop.f32.mrf.mxu0
  %v4897 = vadd.f32 %v4883, %v4896
  %4898 = vdwg.mxu0
  %4899 = vmatpush.bf16.msra.mxu0 %v4487
  %4900 = vmatpush.bf16.msra.mxu0 %v4483
  %4901 = vmatpush.bf16.msra.mxu0 %v4479
  %4902 = vmatpush.bf16.msra.mxu0 %v4475
  %4903 = vmatpush.bf16.msra.mxu0 %v4471
  %4904 = vmatpush.bf16.msra.mxu0 %v4467
  %4905 = vmatpush.bf16.msra.mxu0 %v4463
  %4906 = vmatpush.bf16.msra.mxu0 %v4459
  %4907 = vmatmul.bf16.gmra.mxu0 %v3293
  %v4908 = vpop.f32.mrf.mxu0
  %v4909 = vadd.f32 %v4895, %v4908
  %v4910 = vpop.f32.mrf.mxu0
  %v4911 = vadd.f32 %v4897, %v4910
  %4912 = vdwg.mxu0
  %4913 = vmatpush.bf16.msra.mxu0 %v4519
  %4914 = vmatpush.bf16.msra.mxu0 %v4515
  %4915 = vmatpush.bf16.msra.mxu0 %v4511
  %4916 = vmatpush.bf16.msra.mxu0 %v4507
  %4917 = vmatpush.bf16.msra.mxu0 %v4503
  %4918 = vmatpush.bf16.msra.mxu0 %v4499
  %4919 = vmatpush.bf16.msra.mxu0 %v4495
  %4920 = vmatpush.bf16.msra.mxu0 %v4491
  %4921 = vmatmul.bf16.gmra.mxu0 %v3294
  %v4922 = vpop.f32.mrf.mxu0
  %v4923 = vadd.f32 %v4909, %v4922
  %v4924 = vpop.f32.mrf.mxu0
  %v4925 = vadd.f32 %v4911, %v4924
  %4926 = vdwg.mxu0
  %4927 = vmatpush.bf16.msra.mxu0 %v4551
  %4928 = vmatpush.bf16.msra.mxu0 %v4547
  %4929 = vmatpush.bf16.msra.mxu0 %v4543
  %4930 = vmatpush.bf16.msra.mxu0 %v4539
  %4931 = vmatpush.bf16.msra.mxu0 %v4535
  %4932 = vmatpush.bf16.msra.mxu0 %v4531
  %4933 = vmatpush.bf16.msra.mxu0 %v4527
  %4934 = vmatpush.bf16.msra.mxu0 %v4523
  %4935 = vmatmul.bf16.gmra.mxu0 %v3295
  %v4936 = vpop.f32.mrf.mxu0
  %v4937 = vadd.f32 %v4923, %v4936
  %v4938 = vpop.f32.mrf.mxu0
  %v4939 = vadd.f32 %v4925, %v4938
  %4940 = vdwg.mxu0
  %4941 = vmatpush.bf16.msra.mxu0 %v4583
  %4942 = vmatpush.bf16.msra.mxu0 %v4579
  %4943 = vmatpush.bf16.msra.mxu0 %v4575
  %4944 = vmatpush.bf16.msra.mxu0 %v4571
  %4945 = vmatpush.bf16.msra.mxu0 %v4567
  %4946 = vmatpush.bf16.msra.mxu0 %v4563
  %4947 = vmatpush.bf16.msra.mxu0 %v4559
  %4948 = vmatpush.bf16.msra.mxu0 %v4555
  %4949 = vmatmul.bf16.gmra.mxu0 %v3296
  %v4950 = vpop.f32.mrf.mxu0
  %v4951 = vadd.f32 %v4937, %v4950
  %v4952 = vpop.f32.mrf.mxu0
  %v4953 = vadd.f32 %v4939, %v4952
  %4954 = vdwg.mxu0
  %4955 = vmatpush.bf16.msra.mxu0 %v4360
  %4956 = vmatpush.bf16.msra.mxu0 %v4356
  %4957 = vmatpush.bf16.msra.mxu0 %v4352
  %4958 = vmatpush.bf16.msra.mxu0 %v4348
  %4959 = vmatpush.bf16.msra.mxu0 %v4344
  %4960 = vmatpush.bf16.msra.mxu0 %v4340
  %4961 = vmatpush.bf16.msra.mxu0 %v4336
  %4962 = vmatpush.bf16.msra.mxu0 %v4332
  %4963 = vmatmul.bf16.gmra.mxu0 %v3289
  %v4964 = vpop.f32.mrf.mxu0
  %v4965 = vadd.f32 %v3556, %v4964
  %v4966 = vpop.f32.mrf.mxu0
  %v4967 = vadd.f32 %v3556, %v4966
  %4968 = vdwg.mxu0
  %4969 = vmatpush.bf16.msra.mxu0 %v4392
  %4970 = vmatpush.bf16.msra.mxu0 %v4388
  %4971 = vmatpush.bf16.msra.mxu0 %v4384
  %4972 = vmatpush.bf16.msra.mxu0 %v4380
  %4973 = vmatpush.bf16.msra.mxu0 %v4376
  %4974 = vmatpush.bf16.msra.mxu0 %v4372
  %4975 = vmatpush.bf16.msra.mxu0 %v4368
  %4976 = vmatpush.bf16.msra.mxu0 %v4364
  %4977 = vmatmul.bf16.gmra.mxu0 %v3290
  %v4978 = vpop.f32.mrf.mxu0
  %v4979 = vadd.f32 %v4965, %v4978
  %v4980 = vpop.f32.mrf.mxu0
  %v4981 = vadd.f32 %v4967, %v4980
  %4982 = vdwg.mxu0
  %4983 = vmatpush.bf16.msra.mxu0 %v4424
  %4984 = vmatpush.bf16.msra.mxu0 %v4420
  %4985 = vmatpush.bf16.msra.mxu0 %v4416
  %4986 = vmatpush.bf16.msra.mxu0 %v4412
  %4987 = vmatpush.bf16.msra.mxu0 %v4408
  %4988 = vmatpush.bf16.msra.mxu0 %v4404
  %4989 = vmatpush.bf16.msra.mxu0 %v4400
  %4990 = vmatpush.bf16.msra.mxu0 %v4396
  %4991 = vmatmul.bf16.gmra.mxu0 %v3291
  %v4992 = vpop.f32.mrf.mxu0
  %v4993 = vadd.f32 %v4979, %v4992
  %v4994 = vpop.f32.mrf.mxu0
  %v4995 = vadd.f32 %v4981, %v4994
  %4996 = vdwg.mxu0
  %4997 = vmatpush.bf16.msra.mxu0 %v4456
  %4998 = vmatpush.bf16.msra.mxu0 %v4452
  %4999 = vmatpush.bf16.msra.mxu0 %v4448
  %5000 = vmatpush.bf16.msra.mxu0 %v4444
  %5001 = vmatpush.bf16.msra.mxu0 %v4440
  %5002 = vmatpush.bf16.msra.mxu0 %v4436
  %5003 = vmatpush.bf16.msra.mxu0 %v4432
  %5004 = vmatpush.bf16.msra.mxu0 %v4428
  %5005 = vmatmul.bf16.gmra.mxu0 %v3292
  %v5006 = vpop.f32.mrf.mxu0
  %v5007 = vadd.f32 %v4993, %v5006
  %v5008 = vpop.f32.mrf.mxu0
  %v5009 = vadd.f32 %v4995, %v5008
  %5010 = vdwg.mxu0
  %5011 = vmatpush.bf16.msra.mxu0 %v4488
  %5012 = vmatpush.bf16.msra.mxu0 %v4484
  %5013 = vmatpush.bf16.msra.mxu0 %v4480
  %5014 = vmatpush.bf16.msra.mxu0 %v4476
  %5015 = vmatpush.bf16.msra.mxu0 %v4472
  %5016 = vmatpush.bf16.msra.mxu0 %v4468
  %5017 = vmatpush.bf16.msra.mxu0 %v4464
  %5018 = vmatpush.bf16.msra.mxu0 %v4460
  %5019 = vmatmul.bf16.gmra.mxu0 %v3293
  %v5020 = vpop.f32.mrf.mxu0
  %v5021 = vadd.f32 %v5007, %v5020
  %v5022 = vpop.f32.mrf.mxu0
  %v5023 = vadd.f32 %v5009, %v5022
  %5024 = vdwg.mxu0
  %5025 = vmatpush.bf16.msra.mxu0 %v4520
  %5026 = vmatpush.bf16.msra.mxu0 %v4516
  %5027 = vmatpush.bf16.msra.mxu0 %v4512
  %5028 = vmatpush.bf16.msra.mxu0 %v4508
  %5029 = vmatpush.bf16.msra.mxu0 %v4504
  %5030 = vmatpush.bf16.msra.mxu0 %v4500
  %5031 = vmatpush.bf16.msra.mxu0 %v4496
  %5032 = vmatpush.bf16.msra.mxu0 %v4492
  %5033 = vmatmul.bf16.gmra.mxu0 %v3294
  %v5034 = vpop.f32.mrf.mxu0
  %v5035 = vadd.f32 %v5021, %v5034
  %v5036 = vpop.f32.mrf.mxu0
  %v5037 = vadd.f32 %v5023, %v5036
  %5038 = vdwg.mxu0
  %5039 = vmatpush.bf16.msra.mxu0 %v4552
  %5040 = vmatpush.bf16.msra.mxu0 %v4548
  %5041 = vmatpush.bf16.msra.mxu0 %v4544
  %5042 = vmatpush.bf16.msra.mxu0 %v4540
  %5043 = vmatpush.bf16.msra.mxu0 %v4536
  %5044 = vmatpush.bf16.msra.mxu0 %v4532
  %5045 = vmatpush.bf16.msra.mxu0 %v4528
  %5046 = vmatpush.bf16.msra.mxu0 %v4524
  %5047 = vmatmul.bf16.gmra.mxu0 %v3295
  %v5048 = vpop.f32.mrf.mxu0
  %v5049 = vadd.f32 %v5035, %v5048
  %v5050 = vpop.f32.mrf.mxu0
  %v5051 = vadd.f32 %v5037, %v5050
  %5052 = vdwg.mxu0
  %5053 = vmatpush.bf16.msra.mxu0 %v4584
  %5054 = vmatpush.bf16.msra.mxu0 %v4580
  %5055 = vmatpush.bf16.msra.mxu0 %v4576
  %5056 = vmatpush.bf16.msra.mxu0 %v4572
  %5057 = vmatpush.bf16.msra.mxu0 %v4568
  %5058 = vmatpush.bf16.msra.mxu0 %v4564
  %5059 = vmatpush.bf16.msra.mxu0 %v4560
  %5060 = vmatpush.bf16.msra.mxu0 %v4556
  %5061 = vmatmul.bf16.gmra.mxu0 %v3296
  %v5062 = vpop.f32.mrf.mxu0
  %v5063 = vadd.f32 %v5049, %v5062
  %v5064 = vpop.f32.mrf.mxu0
  %v5065 = vadd.f32 %v5051, %v5064
  %5066 = vdwg.mxu0
  %5067 = vmatpush.bf16.msra.mxu0 %v4361
  %5068 = vmatpush.bf16.msra.mxu0 %v4357
  %5069 = vmatpush.bf16.msra.mxu0 %v4353
  %5070 = vmatpush.bf16.msra.mxu0 %v4349
  %5071 = vmatpush.bf16.msra.mxu0 %v4345
  %5072 = vmatpush.bf16.msra.mxu0 %v4341
  %5073 = vmatpush.bf16.msra.mxu0 %v4337
  %5074 = vmatpush.bf16.msra.mxu0 %v4333
  %5075 = vmatmul.bf16.gmra.mxu0 %v3289
  %v5076 = vpop.f32.mrf.mxu0
  %v5077 = vadd.f32 %v3557, %v5076
  %v5078 = vpop.f32.mrf.mxu0
  %v5079 = vadd.f32 %v3557, %v5078
  %5080 = vdwg.mxu0
  %5081 = vmatpush.bf16.msra.mxu0 %v4393
  %5082 = vmatpush.bf16.msra.mxu0 %v4389
  %5083 = vmatpush.bf16.msra.mxu0 %v4385
  %5084 = vmatpush.bf16.msra.mxu0 %v4381
  %5085 = vmatpush.bf16.msra.mxu0 %v4377
  %5086 = vmatpush.bf16.msra.mxu0 %v4373
  %5087 = vmatpush.bf16.msra.mxu0 %v4369
  %5088 = vmatpush.bf16.msra.mxu0 %v4365
  %5089 = vmatmul.bf16.gmra.mxu0 %v3290
  %v5090 = vpop.f32.mrf.mxu0
  %v5091 = vadd.f32 %v5077, %v5090
  %v5092 = vpop.f32.mrf.mxu0
  %v5093 = vadd.f32 %v5079, %v5092
  %5094 = vdwg.mxu0
  %5095 = vmatpush.bf16.msra.mxu0 %v4425
  %5096 = vmatpush.bf16.msra.mxu0 %v4421
  %5097 = vmatpush.bf16.msra.mxu0 %v4417
  %5098 = vmatpush.bf16.msra.mxu0 %v4413
  %5099 = vmatpush.bf16.msra.mxu0 %v4409
  %5100 = vmatpush.bf16.msra.mxu0 %v4405
  %5101 = vmatpush.bf16.msra.mxu0 %v4401
  %5102 = vmatpush.bf16.msra.mxu0 %v4397
  %5103 = vmatmul.bf16.gmra.mxu0 %v3291
  %v5104 = vpop.f32.mrf.mxu0
  %v5105 = vadd.f32 %v5091, %v5104
  %v5106 = vpop.f32.mrf.mxu0
  %v5107 = vadd.f32 %v5093, %v5106
  %5108 = vdwg.mxu0
  %5109 = vmatpush.bf16.msra.mxu0 %v4457
  %5110 = vmatpush.bf16.msra.mxu0 %v4453
  %5111 = vmatpush.bf16.msra.mxu0 %v4449
  %5112 = vmatpush.bf16.msra.mxu0 %v4445
  %5113 = vmatpush.bf16.msra.mxu0 %v4441
  %5114 = vmatpush.bf16.msra.mxu0 %v4437
  %5115 = vmatpush.bf16.msra.mxu0 %v4433
  %5116 = vmatpush.bf16.msra.mxu0 %v4429
  %5117 = vmatmul.bf16.gmra.mxu0 %v3292
  %v5118 = vpop.f32.mrf.mxu0
  %v5119 = vadd.f32 %v5105, %v5118
  %v5120 = vpop.f32.mrf.mxu0
  %v5121 = vadd.f32 %v5107, %v5120
  %5122 = vdwg.mxu0
  %5123 = vmatpush.bf16.msra.mxu0 %v4489
  %5124 = vmatpush.bf16.msra.mxu0 %v4485
  %5125 = vmatpush.bf16.msra.mxu0 %v4481
  %5126 = vmatpush.bf16.msra.mxu0 %v4477
  %5127 = vmatpush.bf16.msra.mxu0 %v4473
  %5128 = vmatpush.bf16.msra.mxu0 %v4469
  %5129 = vmatpush.bf16.msra.mxu0 %v4465
  %5130 = vmatpush.bf16.msra.mxu0 %v4461
  %5131 = vmatmul.bf16.gmra.mxu0 %v3293
  %v5132 = vpop.f32.mrf.mxu0
  %v5133 = vadd.f32 %v5119, %v5132
  %v5134 = vpop.f32.mrf.mxu0
  %v5135 = vadd.f32 %v5121, %v5134
  %5136 = vdwg.mxu0
  %5137 = vmatpush.bf16.msra.mxu0 %v4521
  %5138 = vmatpush.bf16.msra.mxu0 %v4517
  %5139 = vmatpush.bf16.msra.mxu0 %v4513
  %5140 = vmatpush.bf16.msra.mxu0 %v4509
  %5141 = vmatpush.bf16.msra.mxu0 %v4505
  %5142 = vmatpush.bf16.msra.mxu0 %v4501
  %5143 = vmatpush.bf16.msra.mxu0 %v4497
  %5144 = vmatpush.bf16.msra.mxu0 %v4493
  %5145 = vmatmul.bf16.gmra.mxu0 %v3294
  %v5146 = vpop.f32.mrf.mxu0
  %v5147 = vadd.f32 %v5133, %v5146
  %v5148 = vpop.f32.mrf.mxu0
  %v5149 = vadd.f32 %v5135, %v5148
  %5150 = vdwg.mxu0
  %5151 = vmatpush.bf16.msra.mxu0 %v4553
  %5152 = vmatpush.bf16.msra.mxu0 %v4549
  %5153 = vmatpush.bf16.msra.mxu0 %v4545
  %5154 = vmatpush.bf16.msra.mxu0 %v4541
  %5155 = vmatpush.bf16.msra.mxu0 %v4537
  %5156 = vmatpush.bf16.msra.mxu0 %v4533
  %5157 = vmatpush.bf16.msra.mxu0 %v4529
  %5158 = vmatpush.bf16.msra.mxu0 %v4525
  %5159 = vmatmul.bf16.gmra.mxu0 %v3295
  %v5160 = vpop.f32.mrf.mxu0
  %v5161 = vadd.f32 %v5147, %v5160
  %v5162 = vpop.f32.mrf.mxu0
  %v5163 = vadd.f32 %v5149, %v5162
  %5164 = vdwg.mxu0
  %5165 = vmatpush.bf16.msra.mxu0 %v4585
  %5166 = vmatpush.bf16.msra.mxu0 %v4581
  %5167 = vmatpush.bf16.msra.mxu0 %v4577
  %5168 = vmatpush.bf16.msra.mxu0 %v4573
  %5169 = vmatpush.bf16.msra.mxu0 %v4569
  %5170 = vmatpush.bf16.msra.mxu0 %v4565
  %5171 = vmatpush.bf16.msra.mxu0 %v4561
  %5172 = vmatpush.bf16.msra.mxu0 %v4557
  %5173 = vmatmul.bf16.gmra.mxu0 %v3296
  %v5174 = vpop.f32.mrf.mxu0
  %v5175 = vadd.f32 %v5161, %v5174
  %v5176 = vpop.f32.mrf.mxu0
  %v5177 = vadd.f32 %v5163, %v5176
  %5178 = vdwg.mxu0
  %5179 = vmatpush.bf16.msra.mxu0 %v4362
  %5180 = vmatpush.bf16.msra.mxu0 %v4358
  %5181 = vmatpush.bf16.msra.mxu0 %v4354
  %5182 = vmatpush.bf16.msra.mxu0 %v4350
  %5183 = vmatpush.bf16.msra.mxu0 %v4346
  %5184 = vmatpush.bf16.msra.mxu0 %v4342
  %5185 = vmatpush.bf16.msra.mxu0 %v4338
  %5186 = vmatpush.bf16.msra.mxu0 %v4334
  %5187 = vmatmul.bf16.gmra.mxu0 %v3289
  %v5188 = vpop.f32.mrf.mxu0
  %v5189 = vadd.f32 %v3558, %v5188
  %v5190 = vpop.f32.mrf.mxu0
  %v5191 = vadd.f32 %v3558, %v5190
  %5192 = vdwg.mxu0
  %5193 = vmatpush.bf16.msra.mxu0 %v4394
  %5194 = vmatpush.bf16.msra.mxu0 %v4390
  %5195 = vmatpush.bf16.msra.mxu0 %v4386
  %5196 = vmatpush.bf16.msra.mxu0 %v4382
  %5197 = vmatpush.bf16.msra.mxu0 %v4378
  %5198 = vmatpush.bf16.msra.mxu0 %v4374
  %5199 = vmatpush.bf16.msra.mxu0 %v4370
  %5200 = vmatpush.bf16.msra.mxu0 %v4366
  %5201 = vmatmul.bf16.gmra.mxu0 %v3290
  %v5202 = vpop.f32.mrf.mxu0
  %v5203 = vadd.f32 %v5189, %v5202
  %v5204 = vpop.f32.mrf.mxu0
  %v5205 = vadd.f32 %v5191, %v5204
  %5206 = vdwg.mxu0
  %5207 = vmatpush.bf16.msra.mxu0 %v4426
  %5208 = vmatpush.bf16.msra.mxu0 %v4422
  %5209 = vmatpush.bf16.msra.mxu0 %v4418
  %5210 = vmatpush.bf16.msra.mxu0 %v4414
  %5211 = vmatpush.bf16.msra.mxu0 %v4410
  %5212 = vmatpush.bf16.msra.mxu0 %v4406
  %5213 = vmatpush.bf16.msra.mxu0 %v4402
  %5214 = vmatpush.bf16.msra.mxu0 %v4398
  %5215 = vmatmul.bf16.gmra.mxu0 %v3291
  %v5216 = vpop.f32.mrf.mxu0
  %v5217 = vadd.f32 %v5203, %v5216
  %v5218 = vpop.f32.mrf.mxu0
  %v5219 = vadd.f32 %v5205, %v5218
  %5220 = vdwg.mxu0
  %5221 = vmatpush.bf16.msra.mxu0 %v4458
  %5222 = vmatpush.bf16.msra.mxu0 %v4454
  %5223 = vmatpush.bf16.msra.mxu0 %v4450
  %5224 = vmatpush.bf16.msra.mxu0 %v4446
  %5225 = vmatpush.bf16.msra.mxu0 %v4442
  %5226 = vmatpush.bf16.msra.mxu0 %v4438
  %5227 = vmatpush.bf16.msra.mxu0 %v4434
  %5228 = vmatpush.bf16.msra.mxu0 %v4430
  %5229 = vmatmul.bf16.gmra.mxu0 %v3292
  %v5230 = vpop.f32.mrf.mxu0
  %v5231 = vadd.f32 %v5217, %v5230
  %v5232 = vpop.f32.mrf.mxu0
  %v5233 = vadd.f32 %v5219, %v5232
  %5234 = vdwg.mxu0
  %5235 = vmatpush.bf16.msra.mxu0 %v4490
  %5236 = vmatpush.bf16.msra.mxu0 %v4486
  %5237 = vmatpush.bf16.msra.mxu0 %v4482
  %5238 = vmatpush.bf16.msra.mxu0 %v4478
  %5239 = vmatpush.bf16.msra.mxu0 %v4474
  %5240 = vmatpush.bf16.msra.mxu0 %v4470
  %5241 = vmatpush.bf16.msra.mxu0 %v4466
  %5242 = vmatpush.bf16.msra.mxu0 %v4462
  %5243 = vmatmul.bf16.gmra.mxu0 %v3293
  %v5244 = vpop.f32.mrf.mxu0
  %v5245 = vadd.f32 %v5231, %v5244
  %v5246 = vpop.f32.mrf.mxu0
  %v5247 = vadd.f32 %v5233, %v5246
  %5248 = vdwg.mxu0
  %5249 = vmatpush.bf16.msra.mxu0 %v4522
  %5250 = vmatpush.bf16.msra.mxu0 %v4518
  %5251 = vmatpush.bf16.msra.mxu0 %v4514
  %5252 = vmatpush.bf16.msra.mxu0 %v4510
  %5253 = vmatpush.bf16.msra.mxu0 %v4506
  %5254 = vmatpush.bf16.msra.mxu0 %v4502
  %5255 = vmatpush.bf16.msra.mxu0 %v4498
  %5256 = vmatpush.bf16.msra.mxu0 %v4494
  %5257 = vmatmul.bf16.gmra.mxu0 %v3294
  %v5258 = vpop.f32.mrf.mxu0
  %v5259 = vadd.f32 %v5245, %v5258
  %v5260 = vpop.f32.mrf.mxu0
  %v5261 = vadd.f32 %v5247, %v5260
  %5262 = vdwg.mxu0
  %5263 = vmatpush.bf16.msra.mxu0 %v4554
  %5264 = vmatpush.bf16.msra.mxu0 %v4550
  %5265 = vmatpush.bf16.msra.mxu0 %v4546
  %5266 = vmatpush.bf16.msra.mxu0 %v4542
  %5267 = vmatpush.bf16.msra.mxu0 %v4538
  %5268 = vmatpush.bf16.msra.mxu0 %v4534
  %5269 = vmatpush.bf16.msra.mxu0 %v4530
  %5270 = vmatpush.bf16.msra.mxu0 %v4526
  %5271 = vmatmul.bf16.gmra.mxu0 %v3295
  %v5272 = vpop.f32.mrf.mxu0
  %v5273 = vadd.f32 %v5259, %v5272
  %v5274 = vpop.f32.mrf.mxu0
  %v5275 = vadd.f32 %v5261, %v5274
  %5276 = vdwg.mxu0
  %5277 = vmatpush.bf16.msra.mxu0 %v4586
  %5278 = vmatpush.bf16.msra.mxu0 %v4582
  %5279 = vmatpush.bf16.msra.mxu0 %v4578
  %5280 = vmatpush.bf16.msra.mxu0 %v4574
  %5281 = vmatpush.bf16.msra.mxu0 %v4570
  %5282 = vmatpush.bf16.msra.mxu0 %v4566
  %5283 = vmatpush.bf16.msra.mxu0 %v4562
  %5284 = vmatpush.bf16.msra.mxu0 %v4558
  %5285 = vmatmul.bf16.gmra.mxu0 %v3296
  %v5286 = vpop.f32.mrf.mxu0
  %v5287 = vadd.f32 %v5273, %v5286
  %v5288 = vpop.f32.mrf.mxu0
  %v5289 = vadd.f32 %v5275, %v5288
  %5290 = vdwg.mxu0
  %vm5291 = vcmp.gt.f32.partialorder %v4951, 0.0
  %vm5292 = vcmp.gt.f32.partialorder %v5063, 0.0
  %vm5293 = vcmp.gt.f32.partialorder %v5175, 0.0
  %vm5294 = vcmp.gt.f32.partialorder %v5287, 0.0
  %vm5295 = vcmp.gt.f32.partialorder %v4953, 0.0
  %vm5296 = vcmp.gt.f32.partialorder %v5065, 0.0
  %vm5297 = vcmp.gt.f32.partialorder %v5177, 0.0
  %vm5298 = vcmp.gt.f32.partialorder %v5289, 0.0
  %v5299 = vmul.f32 %v4951, 0.2
  %v5300 = vmul.f32 %v5063, 0.2
  %v5301 = vmul.f32 %v5175, 0.2
  %v5302 = vmul.f32 %v5287, 0.2
  %v5303 = vmul.f32 %v4953, 0.2
  %v5304 = vmul.f32 %v5065, 0.2
  %v5305 = vmul.f32 %v5177, 0.2
  %v5306 = vmul.f32 %v5289, 0.2
  %v5307 = vsel %vm5291, %v4951, %v5299
  %v5308 = vsel %vm5292, %v5063, %v5300
  %v5309 = vsel %vm5293, %v5175, %v5301
  %v5310 = vsel %vm5294, %v5287, %v5302
  %v5311 = vsel %vm5295, %v4953, %v5303
  %v5312 = vsel %vm5296, %v5065, %v5304
  %v5313 = vsel %vm5297, %v5177, %v5305
  %v5314 = vsel %vm5298, %v5289, %v5306
  %v5315 = vpack.c.bf16 %v5311, %v5307
  %v5316 = vpack.c.bf16 %v5312, %v5308
  %v5317 = vpack.c.bf16 %v5313, %v5309
  %v5318 = vpack.c.bf16 %v5314, %v5310
  %v5319 = vld [vmem:[%s7] sm:$0xff]
  %v5320 = vld [vmem:[%s7 + $0x8] sm:$0xff]
  %v5321 = vld [vmem:[%s7 + $0x10] sm:$0xff]
  %v5322 = vld [vmem:[%s7 + $0x18] sm:$0xff]
  %v5323 = vld [vmem:[%s7 + $0x20] sm:$0xff]
  %v5324 = vld [vmem:[%s7 + $0x28] sm:$0xff]
  %v5325 = vld [vmem:[%s7 + $0x30] sm:$0xff]
  %v5326 = vld [vmem:[%s7 + $0x38] sm:$0xff]
  %v5327 = vld [vmem:[%s7 + $0x40] sm:$0xff]
  %v5328 = vld [vmem:[%s7 + $0x48] sm:$0xff]
  %v5329 = vld [vmem:[%s7 + $0x50] sm:$0xff]
  %v5330 = vld [vmem:[%s7 + $0x58] sm:$0xff]
  %v5331 = vld [vmem:[%s7 + $0x60] sm:$0xff]
  %v5332 = vld [vmem:[%s7 + $0x68] sm:$0xff]
  %v5333 = vld [vmem:[%s7 + $0x70] sm:$0xff]
  %v5334 = vld [vmem:[%s7 + $0x78] sm:$0xff]
  %v5335 = vld [vmem:[%s7 + $0x80] sm:$0xff]
  %v5336 = vld [vmem:[%s7 + $0x88] sm:$0xff]
  %v5337 = vld [vmem:[%s7 + $0x90] sm:$0xff]
  %v5338 = vld [vmem:[%s7 + $0x98] sm:$0xff]
  %v5339 = vld [vmem:[%s7 + $0xa0] sm:$0xff]
  %v5340 = vld [vmem:[%s7 + $0xa8] sm:$0xff]
  %v5341 = vld [vmem:[%s7 + $0xb0] sm:$0xff]
  %v5342 = vld [vmem:[%s7 + $0xb8] sm:$0xff]
  %v5343 = vld [vmem:[%s7 + $0xc0] sm:$0xff]
  %v5344 = vld [vmem:[%s7 + $0xc8] sm:$0xff]
  %v5345 = vld [vmem:[%s7 + $0xd0] sm:$0xff]
  %v5346 = vld [vmem:[%s7 + $0xd8] sm:$0xff]
  %v5347 = vld [vmem:[%s7 + $0xe0] sm:$0xff]
  %v5348 = vld [vmem:[%s7 + $0xe8] sm:$0xff]
  %v5349 = vld [vmem:[%s7 + $0xf0] sm:$0xff]
  %v5350 = vld [vmem:[%s7 + $0xf8] sm:$0xff]
  %v5351 = vld [vmem:[%s7 + $0x100] sm:$0xff]
  %v5352 = vld [vmem:[%s7 + $0x108] sm:$0xff]
  %v5353 = vld [vmem:[%s7 + $0x110] sm:$0xff]
  %v5354 = vld [vmem:[%s7 + $0x118] sm:$0xff]
  %v5355 = vld [vmem:[%s7 + $0x120] sm:$0xff]
  %v5356 = vld [vmem:[%s7 + $0x128] sm:$0xff]
  %v5357 = vld [vmem:[%s7 + $0x130] sm:$0xff]
  %v5358 = vld [vmem:[%s7 + $0x138] sm:$0xff]
  %v5359 = vld [vmem:[%s7 + $0x140] sm:$0xff]
  %v5360 = vld [vmem:[%s7 + $0x148] sm:$0xff]
  %v5361 = vld [vmem:[%s7 + $0x150] sm:$0xff]
  %v5362 = vld [vmem:[%s7 + $0x158] sm:$0xff]
  %v5363 = vld [vmem:[%s7 + $0x160] sm:$0xff]
  %v5364 = vld [vmem:[%s7 + $0x168] sm:$0xff]
  %v5365 = vld [vmem:[%s7 + $0x170] sm:$0xff]
  %v5366 = vld [vmem:[%s7 + $0x178] sm:$0xff]
  %v5367 = vld [vmem:[%s7 + $0x180] sm:$0xff]
  %v5368 = vld [vmem:[%s7 + $0x188] sm:$0xff]
  %v5369 = vld [vmem:[%s7 + $0x190] sm:$0xff]
  %v5370 = vld [vmem:[%s7 + $0x198] sm:$0xff]
  %v5371 = vld [vmem:[%s7 + $0x1a0] sm:$0xff]
  %v5372 = vld [vmem:[%s7 + $0x1a8] sm:$0xff]
  %v5373 = vld [vmem:[%s7 + $0x1b0] sm:$0xff]
  %v5374 = vld [vmem:[%s7 + $0x1b8] sm:$0xff]
  %v5375 = vld [vmem:[%s7 + $0x1c0] sm:$0xff]
  %v5376 = vld [vmem:[%s7 + $0x1c8] sm:$0xff]
  %v5377 = vld [vmem:[%s7 + $0x1d0] sm:$0xff]
  %v5378 = vld [vmem:[%s7 + $0x1d8] sm:$0xff]
  %v5379 = vld [vmem:[%s7 + $0x1e0] sm:$0xff]
  %v5380 = vld [vmem:[%s7 + $0x1e8] sm:$0xff]
  %v5381 = vld [vmem:[%s7 + $0x1f0] sm:$0xff]
  %v5382 = vld [vmem:[%s7 + $0x1f8] sm:$0xff]
  %v5383 = vld [vmem:[%s8] sm:$0x3]
  %v5385 = vperm.slane %v5383, 0
  %v5386 = vperm.slane %v5383, 1
  %v5453 = vunpack.c.l.b16 %v5319
  %v5454 = vunpack.c.h.b16 %v5319
  %v5455 = vunpack.c.l.b16 %v5320
  %v5456 = vunpack.c.h.b16 %v5320
  %v5457 = vunpack.c.l.b16 %v5321
  %v5458 = vunpack.c.h.b16 %v5321
  %v5459 = vunpack.c.l.b16 %v5322
  %v5460 = vunpack.c.h.b16 %v5322
  %v5461 = vunpack.c.l.b16 %v5323
  %v5462 = vunpack.c.h.b16 %v5323
  %v5463 = vunpack.c.l.b16 %v5324
  %v5464 = vunpack.c.h.b16 %v5324
  %v5465 = vunpack.c.l.b16 %v5325
  %v5466 = vunpack.c.h.b16 %v5325
  %v5467 = vunpack.c.l.b16 %v5326
  %v5468 = vunpack.c.h.b16 %v5326
  %v5469 = vunpack.c.l.b16 %v5327
  %v5470 = vunpack.c.h.b16 %v5327
  %v5471 = vunpack.c.l.b16 %v5328
  %v5472 = vunpack.c.h.b16 %v5328
  %v5473 = vunpack.c.l.b16 %v5329
  %v5474 = vunpack.c.h.b16 %v5329
  %v5475 = vunpack.c.l.b16 %v5330
  %v5476 = vunpack.c.h.b16 %v5330
  %v5477 = vunpack.c.l.b16 %v5331
  %v5478 = vunpack.c.h.b16 %v5331
  %v5479 = vunpack.c.l.b16 %v5332
  %v5480 = vunpack.c.h.b16 %v5332
  %v5481 = vunpack.c.l.b16 %v5333
  %v5482 = vunpack.c.h.b16 %v5333
  %v5483 = vunpack.c.l.b16 %v5334
  %v5484 = vunpack.c.h.b16 %v5334
  %v5485 = vunpack.c.l.b16 %v5335
  %v5486 = vunpack.c.h.b16 %v5335
  %v5487 = vunpack.c.l.b16 %v5336
  %v5488 = vunpack.c.h.b16 %v5336
  %v5489 = vunpack.c.l.b16 %v5337
  %v5490 = vunpack.c.h.b16 %v5337
  %v5491 = vunpack.c.l.b16 %v5338
  %v5492 = vunpack.c.h.b16 %v5338
  %v5493 = vunpack.c.l.b16 %v5339
  %v5494 = vunpack.c.h.b16 %v5339
  %v5495 = vunpack.c.l.b16 %v5340
  %v5496 = vunpack.c.h.b16 %v5340
  %v5497 = vunpack.c.l.b16 %v5341
  %v5498 = vunpack.c.h.b16 %v5341
  %v5499 = vunpack.c.l.b16 %v5342
  %v5500 = vunpack.c.h.b16 %v5342
  %v5501 = vunpack.c.l.b16 %v5343
  %v5502 = vunpack.c.h.b16 %v5343
  %v5503 = vunpack.c.l.b16 %v5344
  %v5504 = vunpack.c.h.b16 %v5344
  %v5505 = vunpack.c.l.b16 %v5345
  %v5506 = vunpack.c.h.b16 %v5345
  %v5507 = vunpack.c.l.b16 %v5346
  %v5508 = vunpack.c.h.b16 %v5346
  %v5509 = vunpack.c.l.b16 %v5347
  %v5510 = vunpack.c.h.b16 %v5347
  %v5511 = vunpack.c.l.b16 %v5348
  %v5512 = vunpack.c.h.b16 %v5348
  %v5513 = vunpack.c.l.b16 %v5349
  %v5514 = vunpack.c.h.b16 %v5349
  %v5515 = vunpack.c.l.b16 %v5350
  %v5516 = vunpack.c.h.b16 %v5350
  %v5517 = vunpack.c.l.b16 %v5351
  %v5518 = vunpack.c.h.b16 %v5351
  %v5519 = vunpack.c.l.b16 %v5352
  %v5520 = vunpack.c.h.b16 %v5352
  %v5521 = vunpack.c.l.b16 %v5353
  %v5522 = vunpack.c.h.b16 %v5353
  %v5523 = vunpack.c.l.b16 %v5354
  %v5524 = vunpack.c.h.b16 %v5354
  %v5525 = vunpack.c.l.b16 %v5355
  %v5526 = vunpack.c.h.b16 %v5355
  %v5527 = vunpack.c.l.b16 %v5356
  %v5528 = vunpack.c.h.b16 %v5356
  %v5529 = vunpack.c.l.b16 %v5357
  %v5530 = vunpack.c.h.b16 %v5357
  %v5531 = vunpack.c.l.b16 %v5358
  %v5532 = vunpack.c.h.b16 %v5358
  %v5533 = vunpack.c.l.b16 %v5359
  %v5534 = vunpack.c.h.b16 %v5359
  %v5535 = vunpack.c.l.b16 %v5360
  %v5536 = vunpack.c.h.b16 %v5360
  %v5537 = vunpack.c.l.b16 %v5361
  %v5538 = vunpack.c.h.b16 %v5361
  %v5539 = vunpack.c.l.b16 %v5362
  %v5540 = vunpack.c.h.b16 %v5362
  %v5541 = vunpack.c.l.b16 %v5363
  %v5542 = vunpack.c.h.b16 %v5363
  %v5543 = vunpack.c.l.b16 %v5364
  %v5544 = vunpack.c.h.b16 %v5364
  %v5545 = vunpack.c.l.b16 %v5365
  %v5546 = vunpack.c.h.b16 %v5365
  %v5547 = vunpack.c.l.b16 %v5366
  %v5548 = vunpack.c.h.b16 %v5366
  %v5549 = vunpack.c.l.b16 %v5367
  %v5550 = vunpack.c.h.b16 %v5367
  %v5551 = vunpack.c.l.b16 %v5368
  %v5552 = vunpack.c.h.b16 %v5368
  %v5553 = vunpack.c.l.b16 %v5369
  %v5554 = vunpack.c.h.b16 %v5369
  %v5555 = vunpack.c.l.b16 %v5370
  %v5556 = vunpack.c.h.b16 %v5370
  %v5557 = vunpack.c.l.b16 %v5371
  %v5558 = vunpack.c.h.b16 %v5371
  %v5559 = vunpack.c.l.b16 %v5372
  %v5560 = vunpack.c.h.b16 %v5372
  %v5561 = vunpack.c.l.b16 %v5373
  %v5562 = vunpack.c.h.b16 %v5373
  %v5563 = vunpack.c.l.b16 %v5374
  %v5564 = vunpack.c.h.b16 %v5374
  %v5565 = vunpack.c.l.b16 %v5375
  %v5566 = vunpack.c.h.b16 %v5375
  %v5567 = vunpack.c.l.b16 %v5376
  %v5568 = vunpack.c.h.b16 %v5376
  %v5569 = vunpack.c.l.b16 %v5377
  %v5570 = vunpack.c.h.b16 %v5377
  %v5571 = vunpack.c.l.b16 %v5378
  %v5572 = vunpack.c.h.b16 %v5378
  %v5573 = vunpack.c.l.b16 %v5379
  %v5574 = vunpack.c.h.b16 %v5379
  %v5575 = vunpack.c.l.b16 %v5380
  %v5576 = vunpack.c.h.b16 %v5380
  %v5577 = vunpack.c.l.b16 %v5381
  %v5578 = vunpack.c.h.b16 %v5381
  %v5579 = vunpack.c.l.b16 %v5382
  %v5580 = vunpack.c.h.b16 %v5382
  %v5581 = vpack.c.b16 %v5455, %v5453
  %v5582 = vpack.c.b16 %v5456, %v5454
  %v5583 = vpack.c.b16 %v5459, %v5457
  %v5584 = vpack.c.b16 %v5460, %v5458
  %v5585 = vpack.c.b16 %v5463, %v5461
  %v5586 = vpack.c.b16 %v5464, %v5462
  %v5587 = vpack.c.b16 %v5467, %v5465
  %v5588 = vpack.c.b16 %v5468, %v5466
  %v5589 = vpack.c.b16 %v5471, %v5469
  %v5590 = vpack.c.b16 %v5472, %v5470
  %v5591 = vpack.c.b16 %v5475, %v5473
  %v5592 = vpack.c.b16 %v5476, %v5474
  %v5593 = vpack.c.b16 %v5479, %v5477
  %v5594 = vpack.c.b16 %v5480, %v5478
  %v5595 = vpack.c.b16 %v5483, %v5481
  %v5596 = vpack.c.b16 %v5484, %v5482
  %v5597 = vpack.c.b16 %v5487, %v5485
  %v5598 = vpack.c.b16 %v5488, %v5486
  %v5599 = vpack.c.b16 %v5491, %v5489
  %v5600 = vpack.c.b16 %v5492, %v5490
  %v5601 = vpack.c.b16 %v5495, %v5493
  %v5602 = vpack.c.b16 %v5496, %v5494
  %v5603 = vpack.c.b16 %v5499, %v5497
  %v5604 = vpack.c.b16 %v5500, %v5498
  %v5605 = vpack.c.b16 %v5503, %v5501
  %v5606 = vpack.c.b16 %v5504, %v5502
  %v5607 = vpack.c.b16 %v5507, %v5505
  %v5608 = vpack.c.b16 %v5508, %v5506
  %v5609 = vpack.c.b16 %v5511, %v5509
  %v5610 = vpack.c.b16 %v5512, %v5510
  %v5611 = vpack.c.b16 %v5515, %v5513
  %v5612 = vpack.c.b16 %v5516, %v5514
  %v5613 = vpack.c.b16 %v5519, %v5517
  %v5614 = vpack.c.b16 %v5520, %v5518
  %v5615 = vpack.c.b16 %v5523, %v5521
  %v5616 = vpack.c.b16 %v5524, %v5522
  %v5617 = vpack.c.b16 %v5527, %v5525
  %v5618 = vpack.c.b16 %v5528, %v5526
  %v5619 = vpack.c.b16 %v5531, %v5529
  %v5620 = vpack.c.b16 %v5532, %v5530
  %v5621 = vpack.c.b16 %v5535, %v5533
  %v5622 = vpack.c.b16 %v5536, %v5534
  %v5623 = vpack.c.b16 %v5539, %v5537
  %v5624 = vpack.c.b16 %v5540, %v5538
  %v5625 = vpack.c.b16 %v5543, %v5541
  %v5626 = vpack.c.b16 %v5544, %v5542
  %v5627 = vpack.c.b16 %v5547, %v5545
  %v5628 = vpack.c.b16 %v5548, %v5546
  %v5629 = vpack.c.b16 %v5551, %v5549
  %v5630 = vpack.c.b16 %v5552, %v5550
  %v5631 = vpack.c.b16 %v5555, %v5553
  %v5632 = vpack.c.b16 %v5556, %v5554
  %v5633 = vpack.c.b16 %v5559, %v5557
  %v5634 = vpack.c.b16 %v5560, %v5558
  %v5635 = vpack.c.b16 %v5563, %v5561
  %v5636 = vpack.c.b16 %v5564, %v5562
  %v5637 = vpack.c.b16 %v5567, %v5565
  %v5638 = vpack.c.b16 %v5568, %v5566
  %v5639 = vpack.c.b16 %v5571, %v5569
  %v5640 = vpack.c.b16 %v5572, %v5570
  %v5641 = vpack.c.b16 %v5575, %v5573
  %v5642 = vpack.c.b16 %v5576, %v5574
  %v5643 = vpack.c.b16 %v5579, %v5577
  %v5644 = vpack.c.b16 %v5580, %v5578
  %5709 = vmatpush.bf16.msra.mxu0 %v5595
  %5710 = vmatpush.bf16.msra.mxu0 %v5593
  %5711 = vmatpush.bf16.msra.mxu0 %v5591
  %5712 = vmatpush.bf16.msra.mxu0 %v5589
  %5713 = vmatpush.bf16.msra.mxu0 %v5587
  %5714 = vmatpush.bf16.msra.mxu0 %v5585
  %5715 = vmatpush.bf16.msra.mxu0 %v5583
  %5716 = vmatpush.bf16.msra.mxu0 %v5581
  %5717 = vmatmul.bf16.gmra.mxu0 %v5315
  %v5718 = vpop.f32.mrf.mxu0
  %v5719 = vadd.f32 %v5385, %v5718
  %v5720 = vpop.f32.mrf.mxu0
  %v5721 = vadd.f32 %v5385, %v5720
  %5722 = vdwg.mxu0
  %5723 = vmatpush.bf16.msra.mxu0 %v5611
  %5724 = vmatpush.bf16.msra.mxu0 %v5609
  %5725 = vmatpush.bf16.msra.mxu0 %v5607
  %5726 = vmatpush.bf16.msra.mxu0 %v5605
  %5727 = vmatpush.bf16.msra.mxu0 %v5603
  %5728 = vmatpush.bf16.msra.mxu0 %v5601
  %5729 = vmatpush.bf16.msra.mxu0 %v5599
  %5730 = vmatpush.bf16.msra.mxu0 %v5597
  %5731 = vmatmul.bf16.gmra.mxu0 %v5316
  %v5732 = vpop.f32.mrf.mxu0
  %v5733 = vadd.f32 %v5719, %v5732
  %v5734 = vpop.f32.mrf.mxu0
  %v5735 = vadd.f32 %v5721, %v5734
  %5736 = vdwg.mxu0
  %5737 = vmatpush.bf16.msra.mxu0 %v5627
  %5738 = vmatpush.bf16.msra.mxu0 %v5625
  %5739 = vmatpush.bf16.msra.mxu0 %v5623
  %5740 = vmatpush.bf16.msra.mxu0 %v5621
  %5741 = vmatpush.bf16.msra.mxu0 %v5619
  %5742 = vmatpush.bf16.msra.mxu0 %v5617
  %5743 = vmatpush.bf16.msra.mxu0 %v5615
  %5744 = vmatpush.bf16.msra.mxu0 %v5613
  %5745 = vmatmul.bf16.gmra.mxu0 %v5317
  %v5746 = vpop.f32.mrf.mxu0
  %v5747 = vadd.f32 %v5733, %v5746
  %v5748 = vpop.f32.mrf.mxu0
  %v5749 = vadd.f32 %v5735, %v5748
  %5750 = vdwg.mxu0
  %5751 = vmatpush.bf16.msra.mxu0 %v5643
  %5752 = vmatpush.bf16.msra.mxu0 %v5641
  %5753 = vmatpush.bf16.msra.mxu0 %v5639
  %5754 = vmatpush.bf16.msra.mxu0 %v5637
  %5755 = vmatpush.bf16.msra.mxu0 %v5635
  %5756 = vmatpush.bf16.msra.mxu0 %v5633
  %5757 = vmatpush.bf16.msra.mxu0 %v5631
  %5758 = vmatpush.bf16.msra.mxu0 %v5629
  %5759 = vmatmul.bf16.gmra.mxu0 %v5318
  %v5760 = vpop.f32.mrf.mxu0
  %v5761 = vadd.f32 %v5747, %v5760
  %v5762 = vpop.f32.mrf.mxu0
  %v5763 = vadd.f32 %v5749, %v5762
  %5764 = vdwg.mxu0
  %5765 = vmatpush.bf16.msra.mxu0 %v5596
  %5766 = vmatpush.bf16.msra.mxu0 %v5594
  %5767 = vmatpush.bf16.msra.mxu0 %v5592
  %5768 = vmatpush.bf16.msra.mxu0 %v5590
  %5769 = vmatpush.bf16.msra.mxu0 %v5588
  %5770 = vmatpush.bf16.msra.mxu0 %v5586
  %5771 = vmatpush.bf16.msra.mxu0 %v5584
  %5772 = vmatpush.bf16.msra.mxu0 %v5582
  %5773 = vmatmul.bf16.gmra.mxu0 %v5315
  %v5774 = vpop.f32.mrf.mxu0
  %v5775 = vadd.f32 %v5386, %v5774
  %v5776 = vpop.f32.mrf.mxu0
  %v5777 = vadd.f32 %v5386, %v5776
  %5778 = vdwg.mxu0
  %5779 = vmatpush.bf16.msra.mxu0 %v5612
  %5780 = vmatpush.bf16.msra.mxu0 %v5610
  %5781 = vmatpush.bf16.msra.mxu0 %v5608
  %5782 = vmatpush.bf16.msra.mxu0 %v5606
  %5783 = vmatpush.bf16.msra.mxu0 %v5604
  %5784 = vmatpush.bf16.msra.mxu0 %v5602
  %5785 = vmatpush.bf16.msra.mxu0 %v5600
  %5786 = vmatpush.bf16.msra.mxu0 %v5598
  %5787 = vmatmul.bf16.gmra.mxu0 %v5316
  %v5788 = vpop.f32.mrf.mxu0
  %v5789 = vadd.f32 %v5775, %v5788
  %v5790 = vpop.f32.mrf.mxu0
  %v5791 = vadd.f32 %v5777, %v5790
  %5792 = vdwg.mxu0
  %5793 = vmatpush.bf16.msra.mxu0 %v5628
  %5794 = vmatpush.bf16.msra.mxu0 %v5626
  %5795 = vmatpush.bf16.msra.mxu0 %v5624
  %5796 = vmatpush.bf16.msra.mxu0 %v5622
  %5797 = vmatpush.bf16.msra.mxu0 %v5620
  %5798 = vmatpush.bf16.msra.mxu0 %v5618
  %5799 = vmatpush.bf16.msra.mxu0 %v5616
  %5800 = vmatpush.bf16.msra.mxu0 %v5614
  %5801 = vmatmul.bf16.gmra.mxu0 %v5317
  %v5802 = vpop.f32.mrf.mxu0
  %v5803 = vadd.f32 %v5789, %v5802
  %v5804 = vpop.f32.mrf.mxu0
  %v5805 = vadd.f32 %v5791, %v5804
  %5806 = vdwg.mxu0
  %5807 = vmatpush.bf16.msra.mxu0 %v5644
  %5808 = vmatpush.bf16.msra.mxu0 %v5642
  %5809 = vmatpush.bf16.msra.mxu0 %v5640
  %5810 = vmatpush.bf16.msra.mxu0 %v5638
  %5811 = vmatpush.bf16.msra.mxu0 %v5636
  %5812 = vmatpush.bf16.msra.mxu0 %v5634
  %5813 = vmatpush.bf16.msra.mxu0 %v5632
  %5814 = vmatpush.bf16.msra.mxu0 %v5630
  %5815 = vmatmul.bf16.gmra.mxu0 %v5318
  %v5816 = vpop.f32.mrf.mxu0
  %v5817 = vadd.f32 %v5803, %v5816
  %v5818 = vpop.f32.mrf.mxu0
  %v5819 = vadd.f32 %v5805, %v5818
  %5820 = vdwg.mxu0
  %vm5821 = vcmp.gt.f32.partialorder %v5761, 0.0
  %vm5822 = vcmp.gt.f32.partialorder %v5817, 0.0
  %vm5823 = vcmp.gt.f32.partialorder %v5763, 0.0
  %vm5824 = vcmp.gt.f32.partialorder %v5819, 0.0
  %v5825 = vmul.f32 %v5761, 0.2
  %v5826 = vmul.f32 %v5817, 0.2
  %v5827 = vmul.f32 %v5763, 0.2
  %v5828 = vmul.f32 %v5819, 0.2
  %v5829 = vsel %vm5821, %v5761, %v5825
  %v5830 = vsel %vm5822, %v5817, %v5826
  %v5831 = vsel %vm5823, %v5763, %v5827
  %v5832 = vsel %vm5824, %v5819, %v5828
  %v5833 = vld [vmem:[%s9] sm:$0x3]
  %v5834 = vld [vmem:[#allocation2] sm:$0x1]
  %5836 = vset.pattern.permute.xlu0 0
  %5837 = vperm.xlu0 %5836, %v5834
  %v5838 = vpop.permute.xlu0 %5837
  %v5840 = vperm.slane %v5838, 0
  %v5842 = vperm.slane %v5833, 0
  %v5843 = vperm.slane %v5833, 1
  %5846 = vmatpush.xpose.msra.mxu0 0.0
  %5847 = vmatpush.xpose.msra.mxu0 0.0
  %5848 = vmatpush.xpose.msra.mxu0 0.0
  %5849 = vmatpush.xpose.msra.mxu0 0.0
  %5850 = vmatpush.xpose.msra.mxu0 0.0
  %5851 = vmatpush.xpose.msra.mxu0 0.0
  %5852 = vmatpush.xpose.msra.mxu0 0.0
  %5853 = vmatpush.xpose.msra.mxu0 0.0
  %5854 = vmatpush.xpose.msra.mxu0 0.0
  %5855 = vmatpush.xpose.msra.mxu0 0.0
  %5856 = vmatpush.xpose.msra.mxu0 0.0
  %5857 = vmatpush.xpose.msra.mxu0 0.0
  %5858 = vmatpush.xpose.msra.mxu0 0.0
  %5859 = vmatpush.xpose.msra.mxu0 0.0
  %5860 = vmatpush.xpose.msra.mxu0 %v5831
  %5861 = vmatpush.xpose.msra.mxu0 %v5829
  %5862 = vmatmul.f32.gmra.mxu0 %v5842
  %v5863 = vpop.f32.mrf.mxu0
  %v5864 = vadd.f32 %v5840, %v5863
  %5865 = vdwg.mxu0
  %5866 = vmatpush.xpose.msra.mxu0 0.0
  %5867 = vmatpush.xpose.msra.mxu0 0.0
  %5868 = vmatpush.xpose.msra.mxu0 0.0
  %5869 = vmatpush.xpose.msra.mxu0 0.0
  %5870 = vmatpush.xpose.msra.mxu0 0.0
  %5871 = vmatpush.xpose.msra.mxu0 0.0
  %5872 = vmatpush.xpose.msra.mxu0 0.0
  %5873 = vmatpush.xpose.msra.mxu0 0.0
  %5874 = vmatpush.xpose.msra.mxu0 0.0
  %5875 = vmatpush.xpose.msra.mxu0 0.0
  %5876 = vmatpush.xpose.msra.mxu0 0.0
  %5877 = vmatpush.xpose.msra.mxu0 0.0
  %5878 = vmatpush.xpose.msra.mxu0 0.0
  %5879 = vmatpush.xpose.msra.mxu0 0.0
  %5880 = vmatpush.xpose.msra.mxu0 %v5832
  %5881 = vmatpush.xpose.msra.mxu0 %v5830
  %5882 = vmatmul.f32.gmra.mxu0 %v5843
  %v5883 = vpop.f32.mrf.mxu0
  %v5884 = vadd.f32 %v5864, %v5883
  %5885 = vdwg.mxu0
  %v5886 = vxor.u32 %v5884, 2147483648
  %v5887 = vmul.f32 %v5886, 1.442695
  %v5888 = vpow.pop %v5887
  %v5889 = vadd.f32 %v5888, 1.0
  %v5890 = vrcp.pop %v5889
  %v5891 = vmul.f32 %v5889, %v5890
  %v5892 = vsub.f32 1.0, %v5891
  %v5893 = vmul.f32 %v5890, %v5892
  %v5894 = vadd.f32 %v5890, %v5893
  %vm5895 = vweird.f32 %v5889
  %vm5896 = vweird.f32 %v5890
  %vm5897 = vmor %vm5895, %vm5896
  %v5898 = vsel %vm5897, %v5890, %v5894
  %v5899 = vand.u32 2147483647, %v5889
  %vm5900 = vcmp.eq.f32.partialorder %v5899, 8.507059e+37
  %v5901 = vand.u32 %v5889, 2147483648
  %v5902 = vor.u32 1.1754944e-38, %v5901
  %v5903 = vsel %vm5900, %v5902, %v5898
  %v5904 = vmul.f32 1.0, %v5903
  %vm5905 = vcmask 122880
  %5906 = vst.msk [vmem:[%s11] sm:$0x1] %vm5905, %v5904
  // Predicated region
  $region46: #{discriminator_forward.1} parent=0 // pred_check
    _
  $region47: #{discriminator_forward.1} parent=0 // pred_check_branch
    %5908 = sbr.rel (0) target = $region49
  $region48: #{discriminator_forward.1} parent=0 // pred_region
    _
  $region49: #{discriminator_forward.1} parent=0 // pred_fallthru
    _
  // Predicated region
  $region50: #{discriminator_forward.1} parent=0 // pred_check
    _
  $region51: #{discriminator_forward.1} parent=0 // pred_check_branch
    %5910 = sbr.rel (0) target = $region53
  $region52: #{discriminator_forward.1} parent=0 // pred_region
    _
  $region53: #{discriminator_forward.1} parent=0 // pred_fallthru
    _

</llo_original>
